<compile_context>
chip_gen: v6e
topology: v6e:2x2x1
jax: 0.10.0
libtpu: 0.0.40
codegen_flags: <defaults>
</compile_context>

<pallas_src>
import functools

import numpy as np

import jax
import jax.numpy as jnp
from jax.experimental import pallas as pl
from jax.experimental.pallas import tpu as pltpu


# ------------------------------- fused kernel -------------------------------


def _fused_kernel(xstk_ref, w1_ref, p1_ref, g1_ref, b1_ref,
                  g2_ref, b2_ref, g3_ref, b3_ref, fcwt_ref, fcb_ref,
                  w2_hbm, w3_hbm, p2_hbm, p3_hbm,
                  o_ref,
                  st2_ref, st3_ref, w2_ref, w3_ref, p2_ref, p3_ref, stt_ref, sem,
                  *, n, eps, slope):
    """Whole CNNDiscriminator forward for a (n, 3, 32, 32) batch.

    xstk_ref : (2, 18n, 128) bf16  layer-1 input parity stack (zero margins, K padded)
    w1_ref   : (3, 128, 256) bf16  structured conv-1 weights
    wX_hbm   : (5, 256, 256) bf16  structured conv-2/3 weights (raw HBM, manual DMA)
    pX       : (256, 256)    bf16  per-layer channel group-sum matrix (0/1 entries)
    gX/bX    : (1, 256)      f32   BN gamma/beta tiled to the (w, c) column order
    fcwt_ref : (256, 4)      f32   fc weight, columns indexed by ho
    fcb_ref  : (1, 1)        f32
    o_ref    : (n, 1)        f32   sigmoid output
    st2/st3  : VMEM parity stacks for layer-2 / layer-3 inputs (bf16)
    stt_ref  : (2, 256) f32  staging rows for [colsum; sqsum]
    """

    # --- kick off layer-2/3 parameter DMAs so they overlap layer-1 compute ----
    cp_w2 = pltpu.make_async_copy(w2_hbm, w2_ref, sem.at[0]); cp_w2.start()
    cp_p2 = pltpu.make_async_copy(p2_hbm, p2_ref, sem.at[1]); cp_p2.start()
    cp_w3 = pltpu.make_async_copy(w3_hbm, w3_ref, sem.at[2]); cp_w3.start()
    cp_p3 = pltpu.make_async_copy(p3_hbm, p3_ref, sem.at[3]); cp_p3.start()

    def conv(stack_ref, w_ref, k, pad, ho):
        # result rows are (ho, n); columns are (wo, cout), cout minor.
        acc = jnp.zeros((ho * n, w_ref.shape[2]), jnp.float32)
        for kh in range(k):
            q, r = divmod(kh - pad, 2)                    # input row = 2*(ho+q) + r
            start = (1 + q) * n                           # +1 for the zero margin rows
            slab = stack_ref[r, start:start + ho * n, :]  # (ho*n, K) bf16, ref-sliced
            acc = acc + jnp.dot(slab, w_ref[kh],
                                preferred_element_type=jnp.float32)
        return acc

    def bn_lrelu(acc, p_ref, g_ref, b_ref, count):
        # training-mode BatchNorm2d (batch stats, biased variance) + LeakyReLU(0.2).
        # One fused (2,256)x(256,256) group-sum matmul covers mean and E[x^2].
        stt_ref[0:1, :] = jnp.sum(acc, axis=0, keepdims=True)          # colsum
        stt_ref[1:2, :] = jnp.sum(acc * acc, axis=0, keepdims=True)    # sqsum
        pm = p_ref[...].astype(jnp.float32)                            # 0/1, exact
        gs = jnp.dot(stt_ref[...], pm,
                     preferred_element_type=jnp.float32) * (1.0 / count)
        mean = gs[0:1, :]
        var = jnp.maximum(gs[1:2, :] - mean * mean, 0.0)
        scale = jax.lax.rsqrt(var + eps) * g_ref[...]
        z = (acc - mean) * scale + b_ref[...]
        return jnp.where(z >= 0, z, slope * z)

    def scatter(act, st_ref, ho):
        # write this layer's activation (rows (ho, n)) as the next layer's parity
        # stack: st[r, (1+he)*n + m, :] = act[(2*he + r)*n + m, :]
        ab = act.astype(st_ref.dtype)
        for he in range(ho // 2):
            for r in range(2):
                st_ref[r, (1 + he) * n:(2 + he) * n, :] = \
                    ab[(2 * he + r) * n:(2 * he + r + 1) * n, :]

    # zero only the margin rows; every data row is overwritten by scatter().
    zrow = jnp.zeros((n, 256), st2_ref.dtype)
    for r in range(2):
        st2_ref[r, 0:n, :] = zrow
        st2_ref[r, 9 * n:10 * n, :] = zrow
        st3_ref[r, 0:n, :] = zrow
        st3_ref[r, 5 * n:6 * n, :] = zrow

    # layer 1: 32x32x3 -> 16x16x16   (K padded 96 -> 128)
    a1 = bn_lrelu(conv(xstk_ref, w1_ref, 3, 1, 16), p1_ref, g1_ref, b1_ref,
                  n * 16 * 16)
    scatter(a1, st2_ref, 16)

    # layer 2: 16x16x16 -> 8x8x32
    cp_w2.wait()
    cp_p2.wait()
    a2 = bn_lrelu(conv(st2_ref, w2_ref, 5, 2, 8), p2_ref, g2_ref, b2_ref, n * 8 * 8)
    scatter(a2, st3_ref, 8)

    # layer 3: 8x8x32 -> 4x4x64
    cp_w3.wait()
    cp_p3.wait()
    a3 = bn_lrelu(conv(st3_ref, w3_ref, 5, 2, 4), p3_ref, g3_ref, b3_ref, n * 4 * 4)

    # Linear(1024, 1) + Sigmoid: one MXU dot + tiny block-diagonal gather.
    t = jnp.dot(a3, fcwt_ref[...], preferred_element_type=jnp.float32)  # (4n, 4)
    logit = jnp.zeros((n, 1), jnp.float32)
    for ho in range(4):
        logit = logit + t[ho * n:(ho + 1) * n, ho:ho + 1]
    o_ref[...] = jax.nn.sigmoid(logit + fcb_ref[...])


def _full_spec(shape):
    nd = len(shape)
    return pl.BlockSpec(tuple(shape), lambda *_: (0,) * nd)


def fused_discriminator(x_stack, pp, n):
    kern = functools.partial(_fused_kernel, n=n, eps=1e-5, slope=0.2)
    blocked = (x_stack, pp["w1"], pp["p1"], pp["g1"], pp["b1"],
               pp["g2"], pp["b2"], pp["g3"], pp["b3"], pp["fcwT"], pp["fcb"])
    hbm = (pp["w2"], pp["w3"], pp["p2"], pp["p3"])
    args = blocked + hbm
    in_specs = ([_full_spec(a.shape) for a in blocked] +
                [pl.BlockSpec(memory_space=pl.ANY) for _ in hbm])
    flops = int(2 * n * (3 * 16 * 128 * 256 + 5 * 8 * 256 * 256 + 5 * 4 * 256 * 256)
                + 3 * 2 * 2 * 256 * 256 + 2 * 4 * n * 256 * 4)
    bytes_accessed = int(sum(int(np.prod(a.shape)) * a.dtype.itemsize for a in args)
                         + 4 * n)
    return pl.pallas_call(
        kern,
        out_shape=jax.ShapeDtypeStruct((n, 1), jnp.float32),
        grid=(1,),
        in_specs=in_specs,
        out_specs=pl.BlockSpec((n, 1), lambda *_: (0, 0)),
        scratch_shapes=[
            pltpu.VMEM((2, 10 * n, 256), jnp.bfloat16),   # layer-2 input parity stack
            pltpu.VMEM((2, 6 * n, 256), jnp.bfloat16),    # layer-3 input parity stack
            pltpu.VMEM((5, 256, 256), jnp.bfloat16),      # w2 landing buffer
            pltpu.VMEM((5, 256, 256), jnp.bfloat16),      # w3 landing buffer
            pltpu.VMEM((256, 256), jnp.bfloat16),         # p2 landing buffer
            pltpu.VMEM((256, 256), jnp.bfloat16),         # p3 landing buffer
            pltpu.VMEM((2, 256), jnp.float32),            # [colsum; sqsum] staging
            pltpu.SemaphoreType.DMA((4,)),
        ],
        compiler_params=pltpu.CompilerParams(
            dimension_semantics=("arbitrary",),
            vmem_limit_bytes=32 * 1024 * 1024,
        ),
        cost_estimate=pl.CostEstimate(
            flops=flops,
            transcendentals=3 * 256 + 2 * n,
            bytes_accessed=bytes_accessed,
        ),
    )(*args)


# ------------------------------ host-side prep ------------------------------


def make_input_stack(x):
    """(N,3,32,32) NCHW -> (2, 18N, 128) bf16 parity row-stack, zero margins, K->128."""
    n = x.shape[0]
    xh = jnp.transpose(x, (2, 0, 3, 1)).reshape(32, n, 32 * 3)  # rows (h,n), cols (w,c)
    z = jnp.zeros((n, 96), x.dtype)
    ev = jnp.concatenate([z, xh[0::2].reshape(16 * n, 96), z], axis=0)
    od = jnp.concatenate([z, xh[1::2].reshape(16 * n, 96), z], axis=0)
    stk = jnp.stack([ev, od], axis=0)                           # (2, 18n, 96)
    stk = jnp.pad(stk, ((0, 0), (0, 0), (0, 32)))               # lane-pad K to 128
    return stk.astype(jnp.bfloat16)


def prepare_params(params):
    """Pack PyTorch-layout params into the structured-weight form the kernel uses."""
    def wbig(w, k, stride, pad, win, pad_rows=None):
        w = np.asarray(w, np.float32)                  # (Cout, Cin, k, k)
        cout, cin = w.shape[0], w.shape[1]
        wo = win // stride
        rows = win * cin if pad_rows is None else pad_rows
        out = np.zeros((k, rows, wo * cout), np.float32)
        for kh in range(k):
            for woi in range(wo):
                for kw in range(k):
                    wi = stride * woi - pad + kw
                    if 0 <= wi < win:                  # out-of-range == zero padding
                        out[kh, wi * cin:(wi + 1) * cin,
                            woi * cout:(woi + 1) * cout] = w[:, :, kh, kw].T
        return jnp.asarray(out, jnp.bfloat16)

    def pmat(cout, wo):                                # channel group-sum matrix (0/1)
        return jnp.asarray(np.tile(np.eye(cout, dtype=np.float32), (wo, wo)),
                           jnp.bfloat16)

    def rowvec(v, wo):                                 # tile per-channel vec to (w,c)
        return jnp.asarray(np.tile(np.asarray(v, np.float32), wo).reshape(1, -1))

    fcw = np.asarray(params["fc_w"], np.float32).reshape(64, 4, 4)   # (c, h, w)
    fcw = fcw.transpose(1, 2, 0).reshape(4, 4 * 64)                  # (ho, wo*64 + c)
    fcwT = jnp.asarray(np.ascontiguousarray(fcw.T))                  # (256, 4)

    return {
        "w1": wbig(params["w1"], 3, 2, 1, 32, pad_rows=128),
        "w2": wbig(params["w2"], 5, 2, 2, 16),
        "w3": wbig(params["w3"], 5, 2, 2, 8),
        "p1": pmat(16, 16), "p2": pmat(32, 8), "p3": pmat(64, 4),
        "g1": rowvec(params["g1"], 16), "b1": rowvec(params["b1"], 16),
        "g2": rowvec(params["g2"], 8), "b2": rowvec(params["b2"], 8),
        "g3": rowvec(params["g3"], 4), "b3": rowvec(params["b3"], 4),
        "fcwT": fcwT,
        "fcb": jnp.asarray(np.asarray(params["fc_b"], np.float32).reshape(1, 1)),
    }


def cnn_discriminator_forward(x, packed):
    assert x.shape[1:] == (3, 32, 32), "CNNDiscriminator expects (N, 3, 32, 32)"
    return fused_discriminator(make_input_stack(x), packed, x.shape[0])


# ------------------------------ params & reference --------------------------


def init_params(key):
    ks = jax.random.split(key, 5)
    return {
        "w1": jax.random.normal(ks[0], (16, 3, 3, 3), jnp.float32) * 0.1,
        "w2": jax.random.normal(ks[1], (32, 16, 5, 5), jnp.float32) * 0.05,
        "w3": jax.random.normal(ks[2], (64, 32, 5, 5), jnp.float32) * 0.05,
        "g1": jnp.ones((16,), jnp.float32), "b1": jnp.zeros((16,), jnp.float32),
        "g2": jnp.ones((32,), jnp.float32), "b2": jnp.zeros((32,), jnp.float32),
        "g3": jnp.ones((64,), jnp.float32), "b3": jnp.zeros((64,), jnp.float32),
        "fc_w": jax.random.normal(ks[3], (1, 64 * 4 * 4), jnp.float32) * 0.02,
        "fc_b": jax.random.normal(ks[4], (1,), jnp.float32) * 0.01,
    }


def reference_forward(x, params):
    """Pure-JAX reference (same bf16 rounding points as the kernel)."""
    def conv(h, w, stride, pad):
        return jax.lax.conv_general_dilated(
            h, w, window_strides=(stride, stride),
            padding=[(pad, pad), (pad, pad)],
            dimension_numbers=("NCHW", "OIHW", "NCHW"))

    def bn_lrelu(y, g, b):
        mean = jnp.mean(y, axis=(0, 2, 3), keepdims=True)
        var = jnp.mean((y - mean) ** 2, axis=(0, 2, 3), keepdims=True)
        z = (y - mean) * jax.lax.rsqrt(var + 1e-5) * g.reshape(1, -1, 1, 1) \
            + b.reshape(1, -1, 1, 1)
        return jnp.where(z >= 0, z, 0.2 * z)

    bf = lambda a: a.astype(jnp.bfloat16).astype(jnp.float32)
    h = bf(x)
    h = bn_lrelu(conv(h, bf(params["w1"]), 2, 1), params["g1"], params["b1"])
    h = bn_lrelu(conv(bf(h), bf(params["w2"]), 2, 2), params["g2"], params["b2"])
    h = bn_lrelu(conv(bf(h), bf(params["w3"]), 2, 2), params["g3"], params["b3"])
    flat = h.reshape(x.shape[0], -1)
    return jax.nn.sigmoid(flat @ params["fc_w"].T + params["fc_b"])


# ---------------------------------- main -------------------------------------


if __name__ == "__main__":
    key = jax.random.PRNGKey(0)
    k_x, k_p = jax.random.split(key)
    # 32x32 input is what the module requires (3 stride-2 convs -> 4x4 -> Linear(1024,1)).
    x = jax.random.normal(k_x, (2, 3, 32, 32), jnp.float32)
    params = init_params(k_p)
    packed = prepare_params(params)

    fwd = jax.jit(cnn_discriminator_forward)
    out = jax.block_until_ready(fwd(x, packed))

    assert out.shape == (2, 1)
    assert bool(jnp.all((out >= 0.0) & (out <= 1.0)))

    ref = reference_forward(x, params)
    assert bool(jnp.max(jnp.abs(out - ref)) < 2e-2), (out, ref)

    print("KERNEL_OK")
</pallas_src>

<mosaic_0001>
module attributes {stable_mosaic.version = 11 : i64} {
  func.func @_fused_kernel(%arg0: i32, %arg1: memref<2x36x128xbf16, #tpu.memory_space<vmem>>, %arg2: memref<3x128x256xbf16, #tpu.memory_space<vmem>>, %arg3: memref<256x256xbf16, #tpu.memory_space<vmem>>, %arg4: memref<1x256xf32, #tpu.memory_space<vmem>>, %arg5: memref<1x256xf32, #tpu.memory_space<vmem>>, %arg6: memref<1x256xf32, #tpu.memory_space<vmem>>, %arg7: memref<1x256xf32, #tpu.memory_space<vmem>>, %arg8: memref<1x256xf32, #tpu.memory_space<vmem>>, %arg9: memref<1x256xf32, #tpu.memory_space<vmem>>, %arg10: memref<256x4xf32, #tpu.memory_space<vmem>>, %arg11: memref<1x1xf32, #tpu.memory_space<vmem>>, %arg12: memref<5x256x256xbf16, #tpu.memory_space<any>>, %arg13: memref<5x256x256xbf16, #tpu.memory_space<any>>, %arg14: memref<256x256xbf16, #tpu.memory_space<any>>, %arg15: memref<256x256xbf16, #tpu.memory_space<any>>, %arg16: memref<2x1xf32, #tpu.memory_space<vmem>>, %arg17: memref<2x20x256xbf16, #tpu.memory_space<vmem>>, %arg18: memref<2x12x256xbf16, #tpu.memory_space<vmem>>, %arg19: memref<5x256x256xbf16, #tpu.memory_space<vmem>>, %arg20: memref<5x256x256xbf16, #tpu.memory_space<vmem>>, %arg21: memref<256x256xbf16, #tpu.memory_space<vmem>>, %arg22: memref<256x256xbf16, #tpu.memory_space<vmem>>, %arg23: memref<2x256xf32, #tpu.memory_space<vmem>>, %arg24: memref<4x!tpu.dma_semaphore, #tpu.memory_space<semaphore_mem>>) attributes {dimension_semantics = [#tpu.dimension_semantics<arbitrary>], iteration_bounds = array<i64: 1>, scalar_prefetch = 0 : i64, scratch_operands = 8 : i64, tpu.core_type = #tpu.core_type<tc>, window_params = [{pipeline_mode = #tpu.pipeline_mode<synchronous>, transform_indices = @transform_0, window_bounds = array<i64: 2, 36, 128>}, {pipeline_mode = #tpu.pipeline_mode<synchronous>, transform_indices = @transform_1, window_bounds = array<i64: 3, 128, 256>}, {pipeline_mode = #tpu.pipeline_mode<synchronous>, transform_indices = @transform_2, window_bounds = array<i64: 256, 256>}, {pipeline_mode = #tpu.pipeline_mode<synchronous>, transform_indices = @transform_3, window_bounds = array<i64: 1, 256>}, {pipeline_mode = #tpu.pipeline_mode<synchronous>, transform_indices = @transform_4, window_bounds = array<i64: 1, 256>}, {pipeline_mode = #tpu.pipeline_mode<synchronous>, transform_indices = @transform_5, window_bounds = array<i64: 1, 256>}, {pipeline_mode = #tpu.pipeline_mode<synchronous>, transform_indices = @transform_6, window_bounds = array<i64: 1, 256>}, {pipeline_mode = #tpu.pipeline_mode<synchronous>, transform_indices = @transform_7, window_bounds = array<i64: 1, 256>}, {pipeline_mode = #tpu.pipeline_mode<synchronous>, transform_indices = @transform_8, window_bounds = array<i64: 1, 256>}, {pipeline_mode = #tpu.pipeline_mode<synchronous>, transform_indices = @transform_9, window_bounds = array<i64: 256, 4>}, {pipeline_mode = #tpu.pipeline_mode<synchronous>, transform_indices = @transform_10, window_bounds = array<i64: 1, 1>}, {}, {}, {}, {}, {pipeline_mode = #tpu.pipeline_mode<synchronous>, transform_indices = @transform_15, window_bounds = array<i64: 2, 1>}]} {
    %c0_i32 = arith.constant 0 : i32
    %0 = tpu.memref_slice %arg24[%c0_i32] : memref<4x!tpu.dma_semaphore, #tpu.memory_space<semaphore_mem>> -> memref<1x!tpu.dma_semaphore, #tpu.memory_space<semaphore_mem>>
    %1 = tpu.memref_squeeze %0 : memref<1x!tpu.dma_semaphore, #tpu.memory_space<semaphore_mem>> -> memref<!tpu.dma_semaphore, #tpu.memory_space<semaphore_mem>>
    tpu.enqueue_dma source(%arg12 : memref<5x256x256xbf16, #tpu.memory_space<any>>) target(%arg19 : memref<5x256x256xbf16, #tpu.memory_space<vmem>>) target_semaphore(%1 : memref<!tpu.dma_semaphore, #tpu.memory_space<semaphore_mem>>)
    %c1_i32 = arith.constant 1 : i32
    %2 = tpu.memref_slice %arg24[%c1_i32] : memref<4x!tpu.dma_semaphore, #tpu.memory_space<semaphore_mem>> -> memref<1x!tpu.dma_semaphore, #tpu.memory_space<semaphore_mem>>
    %3 = tpu.memref_squeeze %2 : memref<1x!tpu.dma_semaphore, #tpu.memory_space<semaphore_mem>> -> memref<!tpu.dma_semaphore, #tpu.memory_space<semaphore_mem>>
    tpu.enqueue_dma source(%arg14 : memref<256x256xbf16, #tpu.memory_space<any>>) target(%arg21 : memref<256x256xbf16, #tpu.memory_space<vmem>>) target_semaphore(%3 : memref<!tpu.dma_semaphore, #tpu.memory_space<semaphore_mem>>)
    %c2_i32 = arith.constant 2 : i32
    %4 = tpu.memref_slice %arg24[%c2_i32] : memref<4x!tpu.dma_semaphore, #tpu.memory_space<semaphore_mem>> -> memref<1x!tpu.dma_semaphore, #tpu.memory_space<semaphore_mem>>
    %5 = tpu.memref_squeeze %4 : memref<1x!tpu.dma_semaphore, #tpu.memory_space<semaphore_mem>> -> memref<!tpu.dma_semaphore, #tpu.memory_space<semaphore_mem>>
    tpu.enqueue_dma source(%arg13 : memref<5x256x256xbf16, #tpu.memory_space<any>>) target(%arg20 : memref<5x256x256xbf16, #tpu.memory_space<vmem>>) target_semaphore(%5 : memref<!tpu.dma_semaphore, #tpu.memory_space<semaphore_mem>>)
    %c3_i32 = arith.constant 3 : i32
    %6 = tpu.memref_slice %arg24[%c3_i32] : memref<4x!tpu.dma_semaphore, #tpu.memory_space<semaphore_mem>> -> memref<1x!tpu.dma_semaphore, #tpu.memory_space<semaphore_mem>>
    %7 = tpu.memref_squeeze %6 : memref<1x!tpu.dma_semaphore, #tpu.memory_space<semaphore_mem>> -> memref<!tpu.dma_semaphore, #tpu.memory_space<semaphore_mem>>
    tpu.enqueue_dma source(%arg15 : memref<256x256xbf16, #tpu.memory_space<any>>) target(%arg22 : memref<256x256xbf16, #tpu.memory_space<vmem>>) target_semaphore(%7 : memref<!tpu.dma_semaphore, #tpu.memory_space<semaphore_mem>>)
    %cst = arith.constant 0.000000e+00 : bf16
    %8 = vector.broadcast %cst : bf16 to vector<2x256xbf16>
    %c0 = arith.constant 0 : index
    %c0_0 = arith.constant 0 : index
    %c0_1 = arith.constant 0 : index
    %9 = vector.load %arg17[%c0, %c0_0, %c0_1] : memref<2x20x256xbf16, #tpu.memory_space<vmem>>, vector<1x2x256xbf16>
    %10 = vector.shape_cast %9 : vector<1x2x256xbf16> to vector<2x256xbf16>
    %11 = vector.shape_cast %8 : vector<2x256xbf16> to vector<1x2x256xbf16>
    tpu.vector_store %arg17[%c0, %c0_0, %c0_1], %11 {strides = array<i32>} : memref<2x20x256xbf16, #tpu.memory_space<vmem>>, vector<1x2x256xbf16>,
    %c0_2 = arith.constant 0 : index
    %c18 = arith.constant 18 : index
    %c0_3 = arith.constant 0 : index
    %12 = vector.load %arg17[%c0_2, %c18, %c0_3] : memref<2x20x256xbf16, #tpu.memory_space<vmem>>, vector<1x2x256xbf16>
    %13 = vector.shape_cast %12 : vector<1x2x256xbf16> to vector<2x256xbf16>
    %14 = vector.shape_cast %8 : vector<2x256xbf16> to vector<1x2x256xbf16>
    tpu.vector_store %arg17[%c0_2, %c18, %c0_3], %14 {strides = array<i32>} : memref<2x20x256xbf16, #tpu.memory_space<vmem>>, vector<1x2x256xbf16>,
    %c0_4 = arith.constant 0 : index
    %c0_5 = arith.constant 0 : index
    %c0_6 = arith.constant 0 : index
    %15 = vector.load %arg18[%c0_4, %c0_5, %c0_6] : memref<2x12x256xbf16, #tpu.memory_space<vmem>>, vector<1x2x256xbf16>
    %16 = vector.shape_cast %15 : vector<1x2x256xbf16> to vector<2x256xbf16>
    %17 = vector.shape_cast %8 : vector<2x256xbf16> to vector<1x2x256xbf16>
    tpu.vector_store %arg18[%c0_4, %c0_5, %c0_6], %17 {strides = array<i32>} : memref<2x12x256xbf16, #tpu.memory_space<vmem>>, vector<1x2x256xbf16>,
    %c0_7 = arith.constant 0 : index
    %c10 = arith.constant 10 : index
    %c0_8 = arith.constant 0 : index
    %18 = vector.load %arg18[%c0_7, %c10, %c0_8] : memref<2x12x256xbf16, #tpu.memory_space<vmem>>, vector<1x2x256xbf16>
    %19 = vector.shape_cast %18 : vector<1x2x256xbf16> to vector<2x256xbf16>
    %20 = vector.shape_cast %8 : vector<2x256xbf16> to vector<1x2x256xbf16>
    tpu.vector_store %arg18[%c0_7, %c10, %c0_8], %20 {strides = array<i32>} : memref<2x12x256xbf16, #tpu.memory_space<vmem>>, vector<1x2x256xbf16>,
    %c1 = arith.constant 1 : index
    %c0_9 = arith.constant 0 : index
    %c0_10 = arith.constant 0 : index
    %21 = vector.load %arg17[%c1, %c0_9, %c0_10] : memref<2x20x256xbf16, #tpu.memory_space<vmem>>, vector<1x2x256xbf16>
    %22 = vector.shape_cast %21 : vector<1x2x256xbf16> to vector<2x256xbf16>
    %23 = vector.shape_cast %8 : vector<2x256xbf16> to vector<1x2x256xbf16>
    tpu.vector_store %arg17[%c1, %c0_9, %c0_10], %23 {strides = array<i32>} : memref<2x20x256xbf16, #tpu.memory_space<vmem>>, vector<1x2x256xbf16>,
    %c1_11 = arith.constant 1 : index
    %c18_12 = arith.constant 18 : index
    %c0_13 = arith.constant 0 : index
    %24 = vector.load %arg17[%c1_11, %c18_12, %c0_13] : memref<2x20x256xbf16, #tpu.memory_space<vmem>>, vector<1x2x256xbf16>
    %25 = vector.shape_cast %24 : vector<1x2x256xbf16> to vector<2x256xbf16>
    %26 = vector.shape_cast %8 : vector<2x256xbf16> to vector<1x2x256xbf16>
    tpu.vector_store %arg17[%c1_11, %c18_12, %c0_13], %26 {strides = array<i32>} : memref<2x20x256xbf16, #tpu.memory_space<vmem>>, vector<1x2x256xbf16>,
    %c1_14 = arith.constant 1 : index
    %c0_15 = arith.constant 0 : index
    %c0_16 = arith.constant 0 : index
    %27 = vector.load %arg18[%c1_14, %c0_15, %c0_16] : memref<2x12x256xbf16, #tpu.memory_space<vmem>>, vector<1x2x256xbf16>
    %28 = vector.shape_cast %27 : vector<1x2x256xbf16> to vector<2x256xbf16>
    %29 = vector.shape_cast %8 : vector<2x256xbf16> to vector<1x2x256xbf16>
    tpu.vector_store %arg18[%c1_14, %c0_15, %c0_16], %29 {strides = array<i32>} : memref<2x12x256xbf16, #tpu.memory_space<vmem>>, vector<1x2x256xbf16>,
    %c1_17 = arith.constant 1 : index
    %c10_18 = arith.constant 10 : index
    %c0_19 = arith.constant 0 : index
    %30 = vector.load %arg18[%c1_17, %c10_18, %c0_19] : memref<2x12x256xbf16, #tpu.memory_space<vmem>>, vector<1x2x256xbf16>
    %31 = vector.shape_cast %30 : vector<1x2x256xbf16> to vector<2x256xbf16>
    %32 = vector.shape_cast %8 : vector<2x256xbf16> to vector<1x2x256xbf16>
    tpu.vector_store %arg18[%c1_17, %c10_18, %c0_19], %32 {strides = array<i32>} : memref<2x12x256xbf16, #tpu.memory_space<vmem>>, vector<1x2x256xbf16>,
    %cst_20 = arith.constant 0.000000e+00 : f32
    %33 = vector.broadcast %cst_20 : f32 to vector<32x256xf32>
    %c1_21 = arith.constant 1 : index
    %c0_22 = arith.constant 0 : index
    %c0_23 = arith.constant 0 : index
    %34 = vector.load %arg1[%c1_21, %c0_22, %c0_23] : memref<2x36x128xbf16, #tpu.memory_space<vmem>>, vector<1x32x128xbf16>
    %35 = vector.shape_cast %34 : vector<1x32x128xbf16> to vector<32x128xbf16>
    %c0_24 = arith.constant 0 : index
    %c0_25 = arith.constant 0 : index
    %c0_26 = arith.constant 0 : index
    %36 = vector.load %arg2[%c0_24, %c0_25, %c0_26] : memref<3x128x256xbf16, #tpu.memory_space<vmem>>, vector<1x128x256xbf16>
    %37 = vector.shape_cast %36 : vector<1x128x256xbf16> to vector<128x256xbf16>
    %cst_27 = arith.constant dense<0.000000e+00> : vector<32x256xf32>
    %38 = tpu.matmul %35, %37, %cst_27 {dimension_numbers = #tpu.dot_dimension_numbers<[1], [0], [0], [1], [0, 0, 1, 1], [], []>} : vector<32x128xbf16>, vector<128x256xbf16>, vector<32x256xf32> -> vector<32x256xf32>
    %39 = arith.addf %33, %38 : vector<32x256xf32>
    %c0_28 = arith.constant 0 : index
    %c2 = arith.constant 2 : index
    %c0_29 = arith.constant 0 : index
    %40 = vector.load %arg1[%c0_28, %c2, %c0_29] : memref<2x36x128xbf16, #tpu.memory_space<vmem>>, vector<1x32x128xbf16>
    %41 = vector.shape_cast %40 : vector<1x32x128xbf16> to vector<32x128xbf16>
    %c1_30 = arith.constant 1 : index
    %c0_31 = arith.constant 0 : index
    %c0_32 = arith.constant 0 : index
    %42 = vector.load %arg2[%c1_30, %c0_31, %c0_32] : memref<3x128x256xbf16, #tpu.memory_space<vmem>>, vector<1x128x256xbf16>
    %43 = vector.shape_cast %42 : vector<1x128x256xbf16> to vector<128x256xbf16>
    %cst_33 = arith.constant dense<0.000000e+00> : vector<32x256xf32>
    %44 = tpu.matmul %41, %43, %cst_33 {dimension_numbers = #tpu.dot_dimension_numbers<[1], [0], [0], [1], [0, 0, 1, 1], [], []>} : vector<32x128xbf16>, vector<128x256xbf16>, vector<32x256xf32> -> vector<32x256xf32>
    %45 = arith.addf %39, %44 : vector<32x256xf32>
    %c1_34 = arith.constant 1 : index
    %c2_35 = arith.constant 2 : index
    %c0_36 = arith.constant 0 : index
    %46 = vector.load %arg1[%c1_34, %c2_35, %c0_36] : memref<2x36x128xbf16, #tpu.memory_space<vmem>>, vector<1x32x128xbf16>
    %47 = vector.shape_cast %46 : vector<1x32x128xbf16> to vector<32x128xbf16>
    %c2_37 = arith.constant 2 : index
    %c0_38 = arith.constant 0 : index
    %c0_39 = arith.constant 0 : index
    %48 = vector.load %arg2[%c2_37, %c0_38, %c0_39] : memref<3x128x256xbf16, #tpu.memory_space<vmem>>, vector<1x128x256xbf16>
    %49 = vector.shape_cast %48 : vector<1x128x256xbf16> to vector<128x256xbf16>
    %cst_40 = arith.constant dense<0.000000e+00> : vector<32x256xf32>
    %50 = tpu.matmul %47, %49, %cst_40 {dimension_numbers = #tpu.dot_dimension_numbers<[1], [0], [0], [1], [0, 0, 1, 1], [], []>} : vector<32x128xbf16>, vector<128x256xbf16>, vector<32x256xf32> -> vector<32x256xf32>
    %51 = arith.addf %45, %50 : vector<32x256xf32>
    %cst_41 = arith.constant dense<0.000000e+00> : vector<256xf32>
    %52 = vector.multi_reduction <add>, %51, %cst_41 [0] : vector<32x256xf32> to vector<256xf32>
    %53 = vector.shape_cast %52 : vector<256xf32> to vector<1x256xf32>
    %c0_42 = arith.constant 0 : index
    %c0_43 = arith.constant 0 : index
    %54 = vector.load %arg23[%c0_42, %c0_43] : memref<2x256xf32, #tpu.memory_space<vmem>>, vector<1x256xf32>
    tpu.vector_store %arg23[%c0_42, %c0_43], %53 {strides = array<i32>} : memref<2x256xf32, #tpu.memory_space<vmem>>, vector<1x256xf32>,
    %55 = arith.mulf %51, %51 : vector<32x256xf32>
    %cst_44 = arith.constant dense<0.000000e+00> : vector<256xf32>
    %56 = vector.multi_reduction <add>, %55, %cst_44 [0] : vector<32x256xf32> to vector<256xf32>
    %57 = vector.shape_cast %56 : vector<256xf32> to vector<1x256xf32>
    %c1_45 = arith.constant 1 : index
    %c0_46 = arith.constant 0 : index
    %58 = vector.load %arg23[%c1_45, %c0_46] : memref<2x256xf32, #tpu.memory_space<vmem>>, vector<1x256xf32>
    tpu.vector_store %arg23[%c1_45, %c0_46], %57 {strides = array<i32>} : memref<2x256xf32, #tpu.memory_space<vmem>>, vector<1x256xf32>,
    %c0_47 = arith.constant 0 : index
    %c0_48 = arith.constant 0 : index
    %59 = vector.load %arg3[%c0_47, %c0_48] : memref<256x256xbf16, #tpu.memory_space<vmem>>, vector<256x256xbf16>
    %60 = arith.extf %59 : vector<256x256xbf16> to vector<256x256xf32>
    %c0_49 = arith.constant 0 : index
    %c0_50 = arith.constant 0 : index
    %61 = vector.load %arg23[%c0_49, %c0_50] : memref<2x256xf32, #tpu.memory_space<vmem>>, vector<2x256xf32>
    %cst_51 = arith.constant dense<0.000000e+00> : vector<2x256xf32>
    %62 = tpu.matmul %61, %60, %cst_51 {dimension_numbers = #tpu.dot_dimension_numbers<[1], [0], [0], [1], [0, 0, 1, 1], [], []>} : vector<2x256xf32>, vector<256x256xf32>, vector<2x256xf32> -> vector<2x256xf32>
    %cst_52 = arith.constant 0.001953125 : f32
    %63 = vector.broadcast %cst_52 : f32 to vector<2x256xf32>
    %64 = arith.mulf %62, %63 : vector<2x256xf32>
    %65 = vector.extract_strided_slice %64 {offsets = [0, 0], sizes = [1, 256], strides = [1, 1]} : vector<2x256xf32> to vector<1x256xf32>
    %66 = vector.extract_strided_slice %64 {offsets = [1, 0], sizes = [1, 256], strides = [1, 1]} : vector<2x256xf32> to vector<1x256xf32>
    %67 = arith.mulf %65, %65 : vector<1x256xf32>
    %68 = arith.subf %66, %67 : vector<1x256xf32>
    %cst_53 = arith.constant 0.000000e+00 : f32
    %69 = vector.broadcast %cst_53 : f32 to vector<1x256xf32>
    %70 = arith.maximumf %68, %69 : vector<1x256xf32>
    %cst_54 = arith.constant 9.99999974E-6 : f32
    %71 = vector.broadcast %cst_54 : f32 to vector<1x256xf32>
    %72 = arith.addf %70, %71 : vector<1x256xf32>
    %73 = math.rsqrt %72 : vector<1x256xf32>
    %c0_55 = arith.constant 0 : index
    %c0_56 = arith.constant 0 : index
    %74 = vector.load %arg4[%c0_55, %c0_56] : memref<1x256xf32, #tpu.memory_space<vmem>>, vector<1x256xf32>
    %75 = arith.mulf %73, %74 : vector<1x256xf32>
    %76 = vector.broadcast %65 : vector<1x256xf32> to vector<32x256xf32>
    %77 = arith.subf %51, %76 : vector<32x256xf32>
    %78 = vector.broadcast %75 : vector<1x256xf32> to vector<32x256xf32>
    %79 = arith.mulf %77, %78 : vector<32x256xf32>
    %c0_57 = arith.constant 0 : index
    %c0_58 = arith.constant 0 : index
    %80 = vector.load %arg5[%c0_57, %c0_58] : memref<1x256xf32, #tpu.memory_space<vmem>>, vector<1x256xf32>
    %81 = vector.broadcast %80 : vector<1x256xf32> to vector<32x256xf32>
    %82 = arith.addf %79, %81 : vector<32x256xf32>
    %cst_59 = arith.constant 0.000000e+00 : f32
    %83 = vector.broadcast %cst_59 : f32 to vector<32x256xf32>
    %84 = arith.cmpf oge, %82, %83 : vector<32x256xf32>
    %cst_60 = arith.constant 2.000000e-01 : f32
    %85 = vector.broadcast %cst_60 : f32 to vector<32x256xf32>
    %86 = arith.mulf %85, %82 : vector<32x256xf32>
    %87 = arith.select %84, %82, %86 : vector<32x256xi1>, vector<32x256xf32>
    %88 = arith.truncf %87 : vector<32x256xf32> to vector<32x256xbf16>
    %89 = vector.extract_strided_slice %88 {offsets = [0, 0], sizes = [2, 256], strides = [1, 1]} : vector<32x256xbf16> to vector<2x256xbf16>
    %c0_61 = arith.constant 0 : index
    %c2_62 = arith.constant 2 : index
    %c0_63 = arith.constant 0 : index
    %90 = vector.load %arg17[%c0_61, %c2_62, %c0_63] : memref<2x20x256xbf16, #tpu.memory_space<vmem>>, vector<1x2x256xbf16>
    %91 = vector.shape_cast %90 : vector<1x2x256xbf16> to vector<2x256xbf16>
    %92 = vector.shape_cast %89 : vector<2x256xbf16> to vector<1x2x256xbf16>
    tpu.vector_store %arg17[%c0_61, %c2_62, %c0_63], %92 {strides = array<i32>} : memref<2x20x256xbf16, #tpu.memory_space<vmem>>, vector<1x2x256xbf16>,
    %93 = vector.extract_strided_slice %88 {offsets = [2, 0], sizes = [2, 256], strides = [1, 1]} : vector<32x256xbf16> to vector<2x256xbf16>
    %c1_64 = arith.constant 1 : index
    %c2_65 = arith.constant 2 : index
    %c0_66 = arith.constant 0 : index
    %94 = vector.load %arg17[%c1_64, %c2_65, %c0_66] : memref<2x20x256xbf16, #tpu.memory_space<vmem>>, vector<1x2x256xbf16>
    %95 = vector.shape_cast %94 : vector<1x2x256xbf16> to vector<2x256xbf16>
    %96 = vector.shape_cast %93 : vector<2x256xbf16> to vector<1x2x256xbf16>
    tpu.vector_store %arg17[%c1_64, %c2_65, %c0_66], %96 {strides = array<i32>} : memref<2x20x256xbf16, #tpu.memory_space<vmem>>, vector<1x2x256xbf16>,
    %97 = vector.extract_strided_slice %88 {offsets = [4, 0], sizes = [2, 256], strides = [1, 1]} : vector<32x256xbf16> to vector<2x256xbf16>
    %c0_67 = arith.constant 0 : index
    %c4 = arith.constant 4 : index
    %c0_68 = arith.constant 0 : index
    %98 = vector.load %arg17[%c0_67, %c4, %c0_68] : memref<2x20x256xbf16, #tpu.memory_space<vmem>>, vector<1x2x256xbf16>
    %99 = vector.shape_cast %98 : vector<1x2x256xbf16> to vector<2x256xbf16>
    %100 = vector.shape_cast %97 : vector<2x256xbf16> to vector<1x2x256xbf16>
    tpu.vector_store %arg17[%c0_67, %c4, %c0_68], %100 {strides = array<i32>} : memref<2x20x256xbf16, #tpu.memory_space<vmem>>, vector<1x2x256xbf16>,
    %101 = vector.extract_strided_slice %88 {offsets = [6, 0], sizes = [2, 256], strides = [1, 1]} : vector<32x256xbf16> to vector<2x256xbf16>
    %c1_69 = arith.constant 1 : index
    %c4_70 = arith.constant 4 : index
    %c0_71 = arith.constant 0 : index
    %102 = vector.load %arg17[%c1_69, %c4_70, %c0_71] : memref<2x20x256xbf16, #tpu.memory_space<vmem>>, vector<1x2x256xbf16>
    %103 = vector.shape_cast %102 : vector<1x2x256xbf16> to vector<2x256xbf16>
    %104 = vector.shape_cast %101 : vector<2x256xbf16> to vector<1x2x256xbf16>
    tpu.vector_store %arg17[%c1_69, %c4_70, %c0_71], %104 {strides = array<i32>} : memref<2x20x256xbf16, #tpu.memory_space<vmem>>, vector<1x2x256xbf16>,
    %105 = vector.extract_strided_slice %88 {offsets = [8, 0], sizes = [2, 256], strides = [1, 1]} : vector<32x256xbf16> to vector<2x256xbf16>
    %c0_72 = arith.constant 0 : index
    %c6 = arith.constant 6 : index
    %c0_73 = arith.constant 0 : index
    %106 = vector.load %arg17[%c0_72, %c6, %c0_73] : memref<2x20x256xbf16, #tpu.memory_space<vmem>>, vector<1x2x256xbf16>
    %107 = vector.shape_cast %106 : vector<1x2x256xbf16> to vector<2x256xbf16>
    %108 = vector.shape_cast %105 : vector<2x256xbf16> to vector<1x2x256xbf16>
    tpu.vector_store %arg17[%c0_72, %c6, %c0_73], %108 {strides = array<i32>} : memref<2x20x256xbf16, #tpu.memory_space<vmem>>, vector<1x2x256xbf16>,
    %109 = vector.extract_strided_slice %88 {offsets = [10, 0], sizes = [2, 256], strides = [1, 1]} : vector<32x256xbf16> to vector<2x256xbf16>
    %c1_74 = arith.constant 1 : index
    %c6_75 = arith.constant 6 : index
    %c0_76 = arith.constant 0 : index
    %110 = vector.load %arg17[%c1_74, %c6_75, %c0_76] : memref<2x20x256xbf16, #tpu.memory_space<vmem>>, vector<1x2x256xbf16>
    %111 = vector.shape_cast %110 : vector<1x2x256xbf16> to vector<2x256xbf16>
    %112 = vector.shape_cast %109 : vector<2x256xbf16> to vector<1x2x256xbf16>
    tpu.vector_store %arg17[%c1_74, %c6_75, %c0_76], %112 {strides = array<i32>} : memref<2x20x256xbf16, #tpu.memory_space<vmem>>, vector<1x2x256xbf16>,
    %113 = vector.extract_strided_slice %88 {offsets = [12, 0], sizes = [2, 256], strides = [1, 1]} : vector<32x256xbf16> to vector<2x256xbf16>
    %c0_77 = arith.constant 0 : index
    %c8 = arith.constant 8 : index
    %c0_78 = arith.constant 0 : index
    %114 = vector.load %arg17[%c0_77, %c8, %c0_78] : memref<2x20x256xbf16, #tpu.memory_space<vmem>>, vector<1x2x256xbf16>
    %115 = vector.shape_cast %114 : vector<1x2x256xbf16> to vector<2x256xbf16>
    %116 = vector.shape_cast %113 : vector<2x256xbf16> to vector<1x2x256xbf16>
    tpu.vector_store %arg17[%c0_77, %c8, %c0_78], %116 {strides = array<i32>} : memref<2x20x256xbf16, #tpu.memory_space<vmem>>, vector<1x2x256xbf16>,
    %117 = vector.extract_strided_slice %88 {offsets = [14, 0], sizes = [2, 256], strides = [1, 1]} : vector<32x256xbf16> to vector<2x256xbf16>
    %c1_79 = arith.constant 1 : index
    %c8_80 = arith.constant 8 : index
    %c0_81 = arith.constant 0 : index
    %118 = vector.load %arg17[%c1_79, %c8_80, %c0_81] : memref<2x20x256xbf16, #tpu.memory_space<vmem>>, vector<1x2x256xbf16>
    %119 = vector.shape_cast %118 : vector<1x2x256xbf16> to vector<2x256xbf16>
    %120 = vector.shape_cast %117 : vector<2x256xbf16> to vector<1x2x256xbf16>
    tpu.vector_store %arg17[%c1_79, %c8_80, %c0_81], %120 {strides = array<i32>} : memref<2x20x256xbf16, #tpu.memory_space<vmem>>, vector<1x2x256xbf16>,
    %121 = vector.extract_strided_slice %88 {offsets = [16, 0], sizes = [2, 256], strides = [1, 1]} : vector<32x256xbf16> to vector<2x256xbf16>
    %c0_82 = arith.constant 0 : index
    %c10_83 = arith.constant 10 : index
    %c0_84 = arith.constant 0 : index
    %122 = vector.load %arg17[%c0_82, %c10_83, %c0_84] : memref<2x20x256xbf16, #tpu.memory_space<vmem>>, vector<1x2x256xbf16>
    %123 = vector.shape_cast %122 : vector<1x2x256xbf16> to vector<2x256xbf16>
    %124 = vector.shape_cast %121 : vector<2x256xbf16> to vector<1x2x256xbf16>
    tpu.vector_store %arg17[%c0_82, %c10_83, %c0_84], %124 {strides = array<i32>} : memref<2x20x256xbf16, #tpu.memory_space<vmem>>, vector<1x2x256xbf16>,
    %125 = vector.extract_strided_slice %88 {offsets = [18, 0], sizes = [2, 256], strides = [1, 1]} : vector<32x256xbf16> to vector<2x256xbf16>
    %c1_85 = arith.constant 1 : index
    %c10_86 = arith.constant 10 : index
    %c0_87 = arith.constant 0 : index
    %126 = vector.load %arg17[%c1_85, %c10_86, %c0_87] : memref<2x20x256xbf16, #tpu.memory_space<vmem>>, vector<1x2x256xbf16>
    %127 = vector.shape_cast %126 : vector<1x2x256xbf16> to vector<2x256xbf16>
    %128 = vector.shape_cast %125 : vector<2x256xbf16> to vector<1x2x256xbf16>
    tpu.vector_store %arg17[%c1_85, %c10_86, %c0_87], %128 {strides = array<i32>} : memref<2x20x256xbf16, #tpu.memory_space<vmem>>, vector<1x2x256xbf16>,
    %129 = vector.extract_strided_slice %88 {offsets = [20, 0], sizes = [2, 256], strides = [1, 1]} : vector<32x256xbf16> to vector<2x256xbf16>
    %c0_88 = arith.constant 0 : index
    %c12 = arith.constant 12 : index
    %c0_89 = arith.constant 0 : index
    %130 = vector.load %arg17[%c0_88, %c12, %c0_89] : memref<2x20x256xbf16, #tpu.memory_space<vmem>>, vector<1x2x256xbf16>
    %131 = vector.shape_cast %130 : vector<1x2x256xbf16> to vector<2x256xbf16>
    %132 = vector.shape_cast %129 : vector<2x256xbf16> to vector<1x2x256xbf16>
    tpu.vector_store %arg17[%c0_88, %c12, %c0_89], %132 {strides = array<i32>} : memref<2x20x256xbf16, #tpu.memory_space<vmem>>, vector<1x2x256xbf16>,
    %133 = vector.extract_strided_slice %88 {offsets = [22, 0], sizes = [2, 256], strides = [1, 1]} : vector<32x256xbf16> to vector<2x256xbf16>
    %c1_90 = arith.constant 1 : index
    %c12_91 = arith.constant 12 : index
    %c0_92 = arith.constant 0 : index
    %134 = vector.load %arg17[%c1_90, %c12_91, %c0_92] : memref<2x20x256xbf16, #tpu.memory_space<vmem>>, vector<1x2x256xbf16>
    %135 = vector.shape_cast %134 : vector<1x2x256xbf16> to vector<2x256xbf16>
    %136 = vector.shape_cast %133 : vector<2x256xbf16> to vector<1x2x256xbf16>
    tpu.vector_store %arg17[%c1_90, %c12_91, %c0_92], %136 {strides = array<i32>} : memref<2x20x256xbf16, #tpu.memory_space<vmem>>, vector<1x2x256xbf16>,
    %137 = vector.extract_strided_slice %88 {offsets = [24, 0], sizes = [2, 256], strides = [1, 1]} : vector<32x256xbf16> to vector<2x256xbf16>
    %c0_93 = arith.constant 0 : index
    %c14 = arith.constant 14 : index
    %c0_94 = arith.constant 0 : index
    %138 = vector.load %arg17[%c0_93, %c14, %c0_94] : memref<2x20x256xbf16, #tpu.memory_space<vmem>>, vector<1x2x256xbf16>
    %139 = vector.shape_cast %138 : vector<1x2x256xbf16> to vector<2x256xbf16>
    %140 = vector.shape_cast %137 : vector<2x256xbf16> to vector<1x2x256xbf16>
    tpu.vector_store %arg17[%c0_93, %c14, %c0_94], %140 {strides = array<i32>} : memref<2x20x256xbf16, #tpu.memory_space<vmem>>, vector<1x2x256xbf16>,
    %141 = vector.extract_strided_slice %88 {offsets = [26, 0], sizes = [2, 256], strides = [1, 1]} : vector<32x256xbf16> to vector<2x256xbf16>
    %c1_95 = arith.constant 1 : index
    %c14_96 = arith.constant 14 : index
    %c0_97 = arith.constant 0 : index
    %142 = vector.load %arg17[%c1_95, %c14_96, %c0_97] : memref<2x20x256xbf16, #tpu.memory_space<vmem>>, vector<1x2x256xbf16>
    %143 = vector.shape_cast %142 : vector<1x2x256xbf16> to vector<2x256xbf16>
    %144 = vector.shape_cast %141 : vector<2x256xbf16> to vector<1x2x256xbf16>
    tpu.vector_store %arg17[%c1_95, %c14_96, %c0_97], %144 {strides = array<i32>} : memref<2x20x256xbf16, #tpu.memory_space<vmem>>, vector<1x2x256xbf16>,
    %145 = vector.extract_strided_slice %88 {offsets = [28, 0], sizes = [2, 256], strides = [1, 1]} : vector<32x256xbf16> to vector<2x256xbf16>
    %c0_98 = arith.constant 0 : index
    %c16 = arith.constant 16 : index
    %c0_99 = arith.constant 0 : index
    %146 = vector.load %arg17[%c0_98, %c16, %c0_99] : memref<2x20x256xbf16, #tpu.memory_space<vmem>>, vector<1x2x256xbf16>
    %147 = vector.shape_cast %146 : vector<1x2x256xbf16> to vector<2x256xbf16>
    %148 = vector.shape_cast %145 : vector<2x256xbf16> to vector<1x2x256xbf16>
    tpu.vector_store %arg17[%c0_98, %c16, %c0_99], %148 {strides = array<i32>} : memref<2x20x256xbf16, #tpu.memory_space<vmem>>, vector<1x2x256xbf16>,
    %149 = vector.extract_strided_slice %88 {offsets = [30, 0], sizes = [2, 256], strides = [1, 1]} : vector<32x256xbf16> to vector<2x256xbf16>
    %c1_100 = arith.constant 1 : index
    %c16_101 = arith.constant 16 : index
    %c0_102 = arith.constant 0 : index
    %150 = vector.load %arg17[%c1_100, %c16_101, %c0_102] : memref<2x20x256xbf16, #tpu.memory_space<vmem>>, vector<1x2x256xbf16>
    %151 = vector.shape_cast %150 : vector<1x2x256xbf16> to vector<2x256xbf16>
    %152 = vector.shape_cast %149 : vector<2x256xbf16> to vector<1x2x256xbf16>
    tpu.vector_store %arg17[%c1_100, %c16_101, %c0_102], %152 {strides = array<i32>} : memref<2x20x256xbf16, #tpu.memory_space<vmem>>, vector<1x2x256xbf16>,
    %c0_i32_103 = arith.constant 0 : i32
    %153 = tpu.memref_slice %arg24[%c0_i32_103] : memref<4x!tpu.dma_semaphore, #tpu.memory_space<semaphore_mem>> -> memref<1x!tpu.dma_semaphore, #tpu.memory_space<semaphore_mem>>
    %154 = tpu.memref_squeeze %153 : memref<1x!tpu.dma_semaphore, #tpu.memory_space<semaphore_mem>> -> memref<!tpu.dma_semaphore, #tpu.memory_space<semaphore_mem>>
    tpu.wait_dma2 semaphore(%154 : memref<!tpu.dma_semaphore, #tpu.memory_space<semaphore_mem>>) src(%arg12 : memref<5x256x256xbf16, #tpu.memory_space<any>>) dst(%arg19 : memref<5x256x256xbf16, #tpu.memory_space<vmem>>)
    %c1_i32_104 = arith.constant 1 : i32
    %155 = tpu.memref_slice %arg24[%c1_i32_104] : memref<4x!tpu.dma_semaphore, #tpu.memory_space<semaphore_mem>> -> memref<1x!tpu.dma_semaphore, #tpu.memory_space<semaphore_mem>>
    %156 = tpu.memref_squeeze %155 : memref<1x!tpu.dma_semaphore, #tpu.memory_space<semaphore_mem>> -> memref<!tpu.dma_semaphore, #tpu.memory_space<semaphore_mem>>
    tpu.wait_dma2 semaphore(%156 : memref<!tpu.dma_semaphore, #tpu.memory_space<semaphore_mem>>) src(%arg14 : memref<256x256xbf16, #tpu.memory_space<any>>) dst(%arg21 : memref<256x256xbf16, #tpu.memory_space<vmem>>)
    %cst_105 = arith.constant 0.000000e+00 : f32
    %157 = vector.broadcast %cst_105 : f32 to vector<16x256xf32>
    %c0_106 = arith.constant 0 : index
    %c0_107 = arith.constant 0 : index
    %c0_108 = arith.constant 0 : index
    %158 = vector.load %arg17[%c0_106, %c0_107, %c0_108] : memref<2x20x256xbf16, #tpu.memory_space<vmem>>, vector<1x16x256xbf16>
    %159 = vector.shape_cast %158 : vector<1x16x256xbf16> to vector<16x256xbf16>
    %c0_109 = arith.constant 0 : index
    %c0_110 = arith.constant 0 : index
    %c0_111 = arith.constant 0 : index
    %160 = vector.load %arg19[%c0_109, %c0_110, %c0_111] : memref<5x256x256xbf16, #tpu.memory_space<vmem>>, vector<1x256x256xbf16>
    %161 = vector.shape_cast %160 : vector<1x256x256xbf16> to vector<256x256xbf16>
    %cst_112 = arith.constant dense<0.000000e+00> : vector<16x256xf32>
    %162 = tpu.matmul %159, %161, %cst_112 {dimension_numbers = #tpu.dot_dimension_numbers<[1], [0], [0], [1], [0, 0, 1, 1], [], []>} : vector<16x256xbf16>, vector<256x256xbf16>, vector<16x256xf32> -> vector<16x256xf32>
    %163 = arith.addf %157, %162 : vector<16x256xf32>
    %c1_113 = arith.constant 1 : index
    %c0_114 = arith.constant 0 : index
    %c0_115 = arith.constant 0 : index
    %164 = vector.load %arg17[%c1_113, %c0_114, %c0_115] : memref<2x20x256xbf16, #tpu.memory_space<vmem>>, vector<1x16x256xbf16>
    %165 = vector.shape_cast %164 : vector<1x16x256xbf16> to vector<16x256xbf16>
    %c1_116 = arith.constant 1 : index
    %c0_117 = arith.constant 0 : index
    %c0_118 = arith.constant 0 : index
    %166 = vector.load %arg19[%c1_116, %c0_117, %c0_118] : memref<5x256x256xbf16, #tpu.memory_space<vmem>>, vector<1x256x256xbf16>
    %167 = vector.shape_cast %166 : vector<1x256x256xbf16> to vector<256x256xbf16>
    %cst_119 = arith.constant dense<0.000000e+00> : vector<16x256xf32>
    %168 = tpu.matmul %165, %167, %cst_119 {dimension_numbers = #tpu.dot_dimension_numbers<[1], [0], [0], [1], [0, 0, 1, 1], [], []>} : vector<16x256xbf16>, vector<256x256xbf16>, vector<16x256xf32> -> vector<16x256xf32>
    %169 = arith.addf %163, %168 : vector<16x256xf32>
    %c0_120 = arith.constant 0 : index
    %c2_121 = arith.constant 2 : index
    %c0_122 = arith.constant 0 : index
    %170 = vector.load %arg17[%c0_120, %c2_121, %c0_122] : memref<2x20x256xbf16, #tpu.memory_space<vmem>>, vector<1x16x256xbf16>
    %171 = vector.shape_cast %170 : vector<1x16x256xbf16> to vector<16x256xbf16>
    %c2_123 = arith.constant 2 : index
    %c0_124 = arith.constant 0 : index
    %c0_125 = arith.constant 0 : index
    %172 = vector.load %arg19[%c2_123, %c0_124, %c0_125] : memref<5x256x256xbf16, #tpu.memory_space<vmem>>, vector<1x256x256xbf16>
    %173 = vector.shape_cast %172 : vector<1x256x256xbf16> to vector<256x256xbf16>
    %cst_126 = arith.constant dense<0.000000e+00> : vector<16x256xf32>
    %174 = tpu.matmul %171, %173, %cst_126 {dimension_numbers = #tpu.dot_dimension_numbers<[1], [0], [0], [1], [0, 0, 1, 1], [], []>} : vector<16x256xbf16>, vector<256x256xbf16>, vector<16x256xf32> -> vector<16x256xf32>
    %175 = arith.addf %169, %174 : vector<16x256xf32>
    %c1_127 = arith.constant 1 : index
    %c2_128 = arith.constant 2 : index
    %c0_129 = arith.constant 0 : index
    %176 = vector.load %arg17[%c1_127, %c2_128, %c0_129] : memref<2x20x256xbf16, #tpu.memory_space<vmem>>, vector<1x16x256xbf16>
    %177 = vector.shape_cast %176 : vector<1x16x256xbf16> to vector<16x256xbf16>
    %c3 = arith.constant 3 : index
    %c0_130 = arith.constant 0 : index
    %c0_131 = arith.constant 0 : index
    %178 = vector.load %arg19[%c3, %c0_130, %c0_131] : memref<5x256x256xbf16, #tpu.memory_space<vmem>>, vector<1x256x256xbf16>
    %179 = vector.shape_cast %178 : vector<1x256x256xbf16> to vector<256x256xbf16>
    %cst_132 = arith.constant dense<0.000000e+00> : vector<16x256xf32>
    %180 = tpu.matmul %177, %179, %cst_132 {dimension_numbers = #tpu.dot_dimension_numbers<[1], [0], [0], [1], [0, 0, 1, 1], [], []>} : vector<16x256xbf16>, vector<256x256xbf16>, vector<16x256xf32> -> vector<16x256xf32>
    %181 = arith.addf %175, %180 : vector<16x256xf32>
    %c0_133 = arith.constant 0 : index
    %c4_134 = arith.constant 4 : index
    %c0_135 = arith.constant 0 : index
    %182 = vector.load %arg17[%c0_133, %c4_134, %c0_135] : memref<2x20x256xbf16, #tpu.memory_space<vmem>>, vector<1x16x256xbf16>
    %183 = vector.shape_cast %182 : vector<1x16x256xbf16> to vector<16x256xbf16>
    %c4_136 = arith.constant 4 : index
    %c0_137 = arith.constant 0 : index
    %c0_138 = arith.constant 0 : index
    %184 = vector.load %arg19[%c4_136, %c0_137, %c0_138] : memref<5x256x256xbf16, #tpu.memory_space<vmem>>, vector<1x256x256xbf16>
    %185 = vector.shape_cast %184 : vector<1x256x256xbf16> to vector<256x256xbf16>
    %cst_139 = arith.constant dense<0.000000e+00> : vector<16x256xf32>
    %186 = tpu.matmul %183, %185, %cst_139 {dimension_numbers = #tpu.dot_dimension_numbers<[1], [0], [0], [1], [0, 0, 1, 1], [], []>} : vector<16x256xbf16>, vector<256x256xbf16>, vector<16x256xf32> -> vector<16x256xf32>
    %187 = arith.addf %181, %186 : vector<16x256xf32>
    %cst_140 = arith.constant dense<0.000000e+00> : vector<256xf32>
    %188 = vector.multi_reduction <add>, %187, %cst_140 [0] : vector<16x256xf32> to vector<256xf32>
    %189 = vector.shape_cast %188 : vector<256xf32> to vector<1x256xf32>
    %c0_141 = arith.constant 0 : index
    %c0_142 = arith.constant 0 : index
    %190 = vector.load %arg23[%c0_141, %c0_142] : memref<2x256xf32, #tpu.memory_space<vmem>>, vector<1x256xf32>
    tpu.vector_store %arg23[%c0_141, %c0_142], %189 {strides = array<i32>} : memref<2x256xf32, #tpu.memory_space<vmem>>, vector<1x256xf32>,
    %191 = arith.mulf %187, %187 : vector<16x256xf32>
    %cst_143 = arith.constant dense<0.000000e+00> : vector<256xf32>
    %192 = vector.multi_reduction <add>, %191, %cst_143 [0] : vector<16x256xf32> to vector<256xf32>
    %193 = vector.shape_cast %192 : vector<256xf32> to vector<1x256xf32>
    %c1_144 = arith.constant 1 : index
    %c0_145 = arith.constant 0 : index
    %194 = vector.load %arg23[%c1_144, %c0_145] : memref<2x256xf32, #tpu.memory_space<vmem>>, vector<1x256xf32>
    tpu.vector_store %arg23[%c1_144, %c0_145], %193 {strides = array<i32>} : memref<2x256xf32, #tpu.memory_space<vmem>>, vector<1x256xf32>,
    %c0_146 = arith.constant 0 : index
    %c0_147 = arith.constant 0 : index
    %195 = vector.load %arg21[%c0_146, %c0_147] : memref<256x256xbf16, #tpu.memory_space<vmem>>, vector<256x256xbf16>
    %196 = arith.extf %195 : vector<256x256xbf16> to vector<256x256xf32>
    %c0_148 = arith.constant 0 : index
    %c0_149 = arith.constant 0 : index
    %197 = vector.load %arg23[%c0_148, %c0_149] : memref<2x256xf32, #tpu.memory_space<vmem>>, vector<2x256xf32>
    %cst_150 = arith.constant dense<0.000000e+00> : vector<2x256xf32>
    %198 = tpu.matmul %197, %196, %cst_150 {dimension_numbers = #tpu.dot_dimension_numbers<[1], [0], [0], [1], [0, 0, 1, 1], [], []>} : vector<2x256xf32>, vector<256x256xf32>, vector<2x256xf32> -> vector<2x256xf32>
    %cst_151 = arith.constant 7.812500e-03 : f32
    %199 = vector.broadcast %cst_151 : f32 to vector<2x256xf32>
    %200 = arith.mulf %198, %199 : vector<2x256xf32>
    %201 = vector.extract_strided_slice %200 {offsets = [0, 0], sizes = [1, 256], strides = [1, 1]} : vector<2x256xf32> to vector<1x256xf32>
    %202 = vector.extract_strided_slice %200 {offsets = [1, 0], sizes = [1, 256], strides = [1, 1]} : vector<2x256xf32> to vector<1x256xf32>
    %203 = arith.mulf %201, %201 : vector<1x256xf32>
    %204 = arith.subf %202, %203 : vector<1x256xf32>
    %cst_152 = arith.constant 0.000000e+00 : f32
    %205 = vector.broadcast %cst_152 : f32 to vector<1x256xf32>
    %206 = arith.maximumf %204, %205 : vector<1x256xf32>
    %cst_153 = arith.constant 9.99999974E-6 : f32
    %207 = vector.broadcast %cst_153 : f32 to vector<1x256xf32>
    %208 = arith.addf %206, %207 : vector<1x256xf32>
    %209 = math.rsqrt %208 : vector<1x256xf32>
    %c0_154 = arith.constant 0 : index
    %c0_155 = arith.constant 0 : index
    %210 = vector.load %arg6[%c0_154, %c0_155] : memref<1x256xf32, #tpu.memory_space<vmem>>, vector<1x256xf32>
    %211 = arith.mulf %209, %210 : vector<1x256xf32>
    %212 = vector.broadcast %201 : vector<1x256xf32> to vector<16x256xf32>
    %213 = arith.subf %187, %212 : vector<16x256xf32>
    %214 = vector.broadcast %211 : vector<1x256xf32> to vector<16x256xf32>
    %215 = arith.mulf %213, %214 : vector<16x256xf32>
    %c0_156 = arith.constant 0 : index
    %c0_157 = arith.constant 0 : index
    %216 = vector.load %arg7[%c0_156, %c0_157] : memref<1x256xf32, #tpu.memory_space<vmem>>, vector<1x256xf32>
    %217 = vector.broadcast %216 : vector<1x256xf32> to vector<16x256xf32>
    %218 = arith.addf %215, %217 : vector<16x256xf32>
    %cst_158 = arith.constant 0.000000e+00 : f32
    %219 = vector.broadcast %cst_158 : f32 to vector<16x256xf32>
    %220 = arith.cmpf oge, %218, %219 : vector<16x256xf32>
    %cst_159 = arith.constant 2.000000e-01 : f32
    %221 = vector.broadcast %cst_159 : f32 to vector<16x256xf32>
    %222 = arith.mulf %221, %218 : vector<16x256xf32>
    %223 = arith.select %220, %218, %222 : vector<16x256xi1>, vector<16x256xf32>
    %224 = arith.truncf %223 : vector<16x256xf32> to vector<16x256xbf16>
    %225 = vector.extract_strided_slice %224 {offsets = [0, 0], sizes = [2, 256], strides = [1, 1]} : vector<16x256xbf16> to vector<2x256xbf16>
    %c0_160 = arith.constant 0 : index
    %c2_161 = arith.constant 2 : index
    %c0_162 = arith.constant 0 : index
    %226 = vector.load %arg18[%c0_160, %c2_161, %c0_162] : memref<2x12x256xbf16, #tpu.memory_space<vmem>>, vector<1x2x256xbf16>
    %227 = vector.shape_cast %226 : vector<1x2x256xbf16> to vector<2x256xbf16>
    %228 = vector.shape_cast %225 : vector<2x256xbf16> to vector<1x2x256xbf16>
    tpu.vector_store %arg18[%c0_160, %c2_161, %c0_162], %228 {strides = array<i32>} : memref<2x12x256xbf16, #tpu.memory_space<vmem>>, vector<1x2x256xbf16>,
    %229 = vector.extract_strided_slice %224 {offsets = [2, 0], sizes = [2, 256], strides = [1, 1]} : vector<16x256xbf16> to vector<2x256xbf16>
    %c1_163 = arith.constant 1 : index
    %c2_164 = arith.constant 2 : index
    %c0_165 = arith.constant 0 : index
    %230 = vector.load %arg18[%c1_163, %c2_164, %c0_165] : memref<2x12x256xbf16, #tpu.memory_space<vmem>>, vector<1x2x256xbf16>
    %231 = vector.shape_cast %230 : vector<1x2x256xbf16> to vector<2x256xbf16>
    %232 = vector.shape_cast %229 : vector<2x256xbf16> to vector<1x2x256xbf16>
    tpu.vector_store %arg18[%c1_163, %c2_164, %c0_165], %232 {strides = array<i32>} : memref<2x12x256xbf16, #tpu.memory_space<vmem>>, vector<1x2x256xbf16>,
    %233 = vector.extract_strided_slice %224 {offsets = [4, 0], sizes = [2, 256], strides = [1, 1]} : vector<16x256xbf16> to vector<2x256xbf16>
    %c0_166 = arith.constant 0 : index
    %c4_167 = arith.constant 4 : index
    %c0_168 = arith.constant 0 : index
    %234 = vector.load %arg18[%c0_166, %c4_167, %c0_168] : memref<2x12x256xbf16, #tpu.memory_space<vmem>>, vector<1x2x256xbf16>
    %235 = vector.shape_cast %234 : vector<1x2x256xbf16> to vector<2x256xbf16>
    %236 = vector.shape_cast %233 : vector<2x256xbf16> to vector<1x2x256xbf16>
    tpu.vector_store %arg18[%c0_166, %c4_167, %c0_168], %236 {strides = array<i32>} : memref<2x12x256xbf16, #tpu.memory_space<vmem>>, vector<1x2x256xbf16>,
    %237 = vector.extract_strided_slice %224 {offsets = [6, 0], sizes = [2, 256], strides = [1, 1]} : vector<16x256xbf16> to vector<2x256xbf16>
    %c1_169 = arith.constant 1 : index
    %c4_170 = arith.constant 4 : index
    %c0_171 = arith.constant 0 : index
    %238 = vector.load %arg18[%c1_169, %c4_170, %c0_171] : memref<2x12x256xbf16, #tpu.memory_space<vmem>>, vector<1x2x256xbf16>
    %239 = vector.shape_cast %238 : vector<1x2x256xbf16> to vector<2x256xbf16>
    %240 = vector.shape_cast %237 : vector<2x256xbf16> to vector<1x2x256xbf16>
    tpu.vector_store %arg18[%c1_169, %c4_170, %c0_171], %240 {strides = array<i32>} : memref<2x12x256xbf16, #tpu.memory_space<vmem>>, vector<1x2x256xbf16>,
    %241 = vector.extract_strided_slice %224 {offsets = [8, 0], sizes = [2, 256], strides = [1, 1]} : vector<16x256xbf16> to vector<2x256xbf16>
    %c0_172 = arith.constant 0 : index
    %c6_173 = arith.constant 6 : index
    %c0_174 = arith.constant 0 : index
    %242 = vector.load %arg18[%c0_172, %c6_173, %c0_174] : memref<2x12x256xbf16, #tpu.memory_space<vmem>>, vector<1x2x256xbf16>
    %243 = vector.shape_cast %242 : vector<1x2x256xbf16> to vector<2x256xbf16>
    %244 = vector.shape_cast %241 : vector<2x256xbf16> to vector<1x2x256xbf16>
    tpu.vector_store %arg18[%c0_172, %c6_173, %c0_174], %244 {strides = array<i32>} : memref<2x12x256xbf16, #tpu.memory_space<vmem>>, vector<1x2x256xbf16>,
    %245 = vector.extract_strided_slice %224 {offsets = [10, 0], sizes = [2, 256], strides = [1, 1]} : vector<16x256xbf16> to vector<2x256xbf16>
    %c1_175 = arith.constant 1 : index
    %c6_176 = arith.constant 6 : index
    %c0_177 = arith.constant 0 : index
    %246 = vector.load %arg18[%c1_175, %c6_176, %c0_177] : memref<2x12x256xbf16, #tpu.memory_space<vmem>>, vector<1x2x256xbf16>
    %247 = vector.shape_cast %246 : vector<1x2x256xbf16> to vector<2x256xbf16>
    %248 = vector.shape_cast %245 : vector<2x256xbf16> to vector<1x2x256xbf16>
    tpu.vector_store %arg18[%c1_175, %c6_176, %c0_177], %248 {strides = array<i32>} : memref<2x12x256xbf16, #tpu.memory_space<vmem>>, vector<1x2x256xbf16>,
    %249 = vector.extract_strided_slice %224 {offsets = [12, 0], sizes = [2, 256], strides = [1, 1]} : vector<16x256xbf16> to vector<2x256xbf16>
    %c0_178 = arith.constant 0 : index
    %c8_179 = arith.constant 8 : index
    %c0_180 = arith.constant 0 : index
    %250 = vector.load %arg18[%c0_178, %c8_179, %c0_180] : memref<2x12x256xbf16, #tpu.memory_space<vmem>>, vector<1x2x256xbf16>
    %251 = vector.shape_cast %250 : vector<1x2x256xbf16> to vector<2x256xbf16>
    %252 = vector.shape_cast %249 : vector<2x256xbf16> to vector<1x2x256xbf16>
    tpu.vector_store %arg18[%c0_178, %c8_179, %c0_180], %252 {strides = array<i32>} : memref<2x12x256xbf16, #tpu.memory_space<vmem>>, vector<1x2x256xbf16>,
    %253 = vector.extract_strided_slice %224 {offsets = [14, 0], sizes = [2, 256], strides = [1, 1]} : vector<16x256xbf16> to vector<2x256xbf16>
    %c1_181 = arith.constant 1 : index
    %c8_182 = arith.constant 8 : index
    %c0_183 = arith.constant 0 : index
    %254 = vector.load %arg18[%c1_181, %c8_182, %c0_183] : memref<2x12x256xbf16, #tpu.memory_space<vmem>>, vector<1x2x256xbf16>
    %255 = vector.shape_cast %254 : vector<1x2x256xbf16> to vector<2x256xbf16>
    %256 = vector.shape_cast %253 : vector<2x256xbf16> to vector<1x2x256xbf16>
    tpu.vector_store %arg18[%c1_181, %c8_182, %c0_183], %256 {strides = array<i32>} : memref<2x12x256xbf16, #tpu.memory_space<vmem>>, vector<1x2x256xbf16>,
    %c2_i32_184 = arith.constant 2 : i32
    %257 = tpu.memref_slice %arg24[%c2_i32_184] : memref<4x!tpu.dma_semaphore, #tpu.memory_space<semaphore_mem>> -> memref<1x!tpu.dma_semaphore, #tpu.memory_space<semaphore_mem>>
    %258 = tpu.memref_squeeze %257 : memref<1x!tpu.dma_semaphore, #tpu.memory_space<semaphore_mem>> -> memref<!tpu.dma_semaphore, #tpu.memory_space<semaphore_mem>>
    tpu.wait_dma2 semaphore(%258 : memref<!tpu.dma_semaphore, #tpu.memory_space<semaphore_mem>>) src(%arg13 : memref<5x256x256xbf16, #tpu.memory_space<any>>) dst(%arg20 : memref<5x256x256xbf16, #tpu.memory_space<vmem>>)
    %c3_i32_185 = arith.constant 3 : i32
    %259 = tpu.memref_slice %arg24[%c3_i32_185] : memref<4x!tpu.dma_semaphore, #tpu.memory_space<semaphore_mem>> -> memref<1x!tpu.dma_semaphore, #tpu.memory_space<semaphore_mem>>
    %260 = tpu.memref_squeeze %259 : memref<1x!tpu.dma_semaphore, #tpu.memory_space<semaphore_mem>> -> memref<!tpu.dma_semaphore, #tpu.memory_space<semaphore_mem>>
    tpu.wait_dma2 semaphore(%260 : memref<!tpu.dma_semaphore, #tpu.memory_space<semaphore_mem>>) src(%arg15 : memref<256x256xbf16, #tpu.memory_space<any>>) dst(%arg22 : memref<256x256xbf16, #tpu.memory_space<vmem>>)
    %cst_186 = arith.constant 0.000000e+00 : f32
    %261 = vector.broadcast %cst_186 : f32 to vector<8x256xf32>
    %c0_187 = arith.constant 0 : index
    %c0_188 = arith.constant 0 : index
    %c0_189 = arith.constant 0 : index
    %262 = vector.load %arg18[%c0_187, %c0_188, %c0_189] : memref<2x12x256xbf16, #tpu.memory_space<vmem>>, vector<1x8x256xbf16>
    %263 = vector.shape_cast %262 : vector<1x8x256xbf16> to vector<8x256xbf16>
    %c0_190 = arith.constant 0 : index
    %c0_191 = arith.constant 0 : index
    %c0_192 = arith.constant 0 : index
    %264 = vector.load %arg20[%c0_190, %c0_191, %c0_192] : memref<5x256x256xbf16, #tpu.memory_space<vmem>>, vector<1x256x256xbf16>
    %265 = vector.shape_cast %264 : vector<1x256x256xbf16> to vector<256x256xbf16>
    %cst_193 = arith.constant dense<0.000000e+00> : vector<8x256xf32>
    %266 = tpu.matmul %263, %265, %cst_193 {dimension_numbers = #tpu.dot_dimension_numbers<[1], [0], [0], [1], [0, 0, 1, 1], [], []>} : vector<8x256xbf16>, vector<256x256xbf16>, vector<8x256xf32> -> vector<8x256xf32>
    %267 = arith.addf %261, %266 : vector<8x256xf32>
    %c1_194 = arith.constant 1 : index
    %c0_195 = arith.constant 0 : index
    %c0_196 = arith.constant 0 : index
    %268 = vector.load %arg18[%c1_194, %c0_195, %c0_196] : memref<2x12x256xbf16, #tpu.memory_space<vmem>>, vector<1x8x256xbf16>
    %269 = vector.shape_cast %268 : vector<1x8x256xbf16> to vector<8x256xbf16>
    %c1_197 = arith.constant 1 : index
    %c0_198 = arith.constant 0 : index
    %c0_199 = arith.constant 0 : index
    %270 = vector.load %arg20[%c1_197, %c0_198, %c0_199] : memref<5x256x256xbf16, #tpu.memory_space<vmem>>, vector<1x256x256xbf16>
    %271 = vector.shape_cast %270 : vector<1x256x256xbf16> to vector<256x256xbf16>
    %cst_200 = arith.constant dense<0.000000e+00> : vector<8x256xf32>
    %272 = tpu.matmul %269, %271, %cst_200 {dimension_numbers = #tpu.dot_dimension_numbers<[1], [0], [0], [1], [0, 0, 1, 1], [], []>} : vector<8x256xbf16>, vector<256x256xbf16>, vector<8x256xf32> -> vector<8x256xf32>
    %273 = arith.addf %267, %272 : vector<8x256xf32>
    %c0_201 = arith.constant 0 : index
    %c2_202 = arith.constant 2 : index
    %c0_203 = arith.constant 0 : index
    %274 = vector.load %arg18[%c0_201, %c2_202, %c0_203] : memref<2x12x256xbf16, #tpu.memory_space<vmem>>, vector<1x8x256xbf16>
    %275 = vector.shape_cast %274 : vector<1x8x256xbf16> to vector<8x256xbf16>
    %c2_204 = arith.constant 2 : index
    %c0_205 = arith.constant 0 : index
    %c0_206 = arith.constant 0 : index
    %276 = vector.load %arg20[%c2_204, %c0_205, %c0_206] : memref<5x256x256xbf16, #tpu.memory_space<vmem>>, vector<1x256x256xbf16>
    %277 = vector.shape_cast %276 : vector<1x256x256xbf16> to vector<256x256xbf16>
    %cst_207 = arith.constant dense<0.000000e+00> : vector<8x256xf32>
    %278 = tpu.matmul %275, %277, %cst_207 {dimension_numbers = #tpu.dot_dimension_numbers<[1], [0], [0], [1], [0, 0, 1, 1], [], []>} : vector<8x256xbf16>, vector<256x256xbf16>, vector<8x256xf32> -> vector<8x256xf32>
    %279 = arith.addf %273, %278 : vector<8x256xf32>
    %c1_208 = arith.constant 1 : index
    %c2_209 = arith.constant 2 : index
    %c0_210 = arith.constant 0 : index
    %280 = vector.load %arg18[%c1_208, %c2_209, %c0_210] : memref<2x12x256xbf16, #tpu.memory_space<vmem>>, vector<1x8x256xbf16>
    %281 = vector.shape_cast %280 : vector<1x8x256xbf16> to vector<8x256xbf16>
    %c3_211 = arith.constant 3 : index
    %c0_212 = arith.constant 0 : index
    %c0_213 = arith.constant 0 : index
    %282 = vector.load %arg20[%c3_211, %c0_212, %c0_213] : memref<5x256x256xbf16, #tpu.memory_space<vmem>>, vector<1x256x256xbf16>
    %283 = vector.shape_cast %282 : vector<1x256x256xbf16> to vector<256x256xbf16>
    %cst_214 = arith.constant dense<0.000000e+00> : vector<8x256xf32>
    %284 = tpu.matmul %281, %283, %cst_214 {dimension_numbers = #tpu.dot_dimension_numbers<[1], [0], [0], [1], [0, 0, 1, 1], [], []>} : vector<8x256xbf16>, vector<256x256xbf16>, vector<8x256xf32> -> vector<8x256xf32>
    %285 = arith.addf %279, %284 : vector<8x256xf32>
    %c0_215 = arith.constant 0 : index
    %c4_216 = arith.constant 4 : index
    %c0_217 = arith.constant 0 : index
    %286 = vector.load %arg18[%c0_215, %c4_216, %c0_217] : memref<2x12x256xbf16, #tpu.memory_space<vmem>>, vector<1x8x256xbf16>
    %287 = vector.shape_cast %286 : vector<1x8x256xbf16> to vector<8x256xbf16>
    %c4_218 = arith.constant 4 : index
    %c0_219 = arith.constant 0 : index
    %c0_220 = arith.constant 0 : index
    %288 = vector.load %arg20[%c4_218, %c0_219, %c0_220] : memref<5x256x256xbf16, #tpu.memory_space<vmem>>, vector<1x256x256xbf16>
    %289 = vector.shape_cast %288 : vector<1x256x256xbf16> to vector<256x256xbf16>
    %cst_221 = arith.constant dense<0.000000e+00> : vector<8x256xf32>
    %290 = tpu.matmul %287, %289, %cst_221 {dimension_numbers = #tpu.dot_dimension_numbers<[1], [0], [0], [1], [0, 0, 1, 1], [], []>} : vector<8x256xbf16>, vector<256x256xbf16>, vector<8x256xf32> -> vector<8x256xf32>
    %291 = arith.addf %285, %290 : vector<8x256xf32>
    %cst_222 = arith.constant dense<0.000000e+00> : vector<256xf32>
    %292 = vector.multi_reduction <add>, %291, %cst_222 [0] : vector<8x256xf32> to vector<256xf32>
    %293 = vector.shape_cast %292 : vector<256xf32> to vector<1x256xf32>
    %c0_223 = arith.constant 0 : index
    %c0_224 = arith.constant 0 : index
    %294 = vector.load %arg23[%c0_223, %c0_224] : memref<2x256xf32, #tpu.memory_space<vmem>>, vector<1x256xf32>
    tpu.vector_store %arg23[%c0_223, %c0_224], %293 {strides = array<i32>} : memref<2x256xf32, #tpu.memory_space<vmem>>, vector<1x256xf32>,
    %295 = arith.mulf %291, %291 : vector<8x256xf32>
    %cst_225 = arith.constant dense<0.000000e+00> : vector<256xf32>
    %296 = vector.multi_reduction <add>, %295, %cst_225 [0] : vector<8x256xf32> to vector<256xf32>
    %297 = vector.shape_cast %296 : vector<256xf32> to vector<1x256xf32>
    %c1_226 = arith.constant 1 : index
    %c0_227 = arith.constant 0 : index
    %298 = vector.load %arg23[%c1_226, %c0_227] : memref<2x256xf32, #tpu.memory_space<vmem>>, vector<1x256xf32>
    tpu.vector_store %arg23[%c1_226, %c0_227], %297 {strides = array<i32>} : memref<2x256xf32, #tpu.memory_space<vmem>>, vector<1x256xf32>,
    %c0_228 = arith.constant 0 : index
    %c0_229 = arith.constant 0 : index
    %299 = vector.load %arg22[%c0_228, %c0_229] : memref<256x256xbf16, #tpu.memory_space<vmem>>, vector<256x256xbf16>
    %300 = arith.extf %299 : vector<256x256xbf16> to vector<256x256xf32>
    %c0_230 = arith.constant 0 : index
    %c0_231 = arith.constant 0 : index
    %301 = vector.load %arg23[%c0_230, %c0_231] : memref<2x256xf32, #tpu.memory_space<vmem>>, vector<2x256xf32>
    %cst_232 = arith.constant dense<0.000000e+00> : vector<2x256xf32>
    %302 = tpu.matmul %301, %300, %cst_232 {dimension_numbers = #tpu.dot_dimension_numbers<[1], [0], [0], [1], [0, 0, 1, 1], [], []>} : vector<2x256xf32>, vector<256x256xf32>, vector<2x256xf32> -> vector<2x256xf32>
    %cst_233 = arith.constant 3.125000e-02 : f32
    %303 = vector.broadcast %cst_233 : f32 to vector<2x256xf32>
    %304 = arith.mulf %302, %303 : vector<2x256xf32>
    %305 = vector.extract_strided_slice %304 {offsets = [0, 0], sizes = [1, 256], strides = [1, 1]} : vector<2x256xf32> to vector<1x256xf32>
    %306 = vector.extract_strided_slice %304 {offsets = [1, 0], sizes = [1, 256], strides = [1, 1]} : vector<2x256xf32> to vector<1x256xf32>
    %307 = arith.mulf %305, %305 : vector<1x256xf32>
    %308 = arith.subf %306, %307 : vector<1x256xf32>
    %cst_234 = arith.constant 0.000000e+00 : f32
    %309 = vector.broadcast %cst_234 : f32 to vector<1x256xf32>
    %310 = arith.maximumf %308, %309 : vector<1x256xf32>
    %cst_235 = arith.constant 9.99999974E-6 : f32
    %311 = vector.broadcast %cst_235 : f32 to vector<1x256xf32>
    %312 = arith.addf %310, %311 : vector<1x256xf32>
    %313 = math.rsqrt %312 : vector<1x256xf32>
    %c0_236 = arith.constant 0 : index
    %c0_237 = arith.constant 0 : index
    %314 = vector.load %arg8[%c0_236, %c0_237] : memref<1x256xf32, #tpu.memory_space<vmem>>, vector<1x256xf32>
    %315 = arith.mulf %313, %314 : vector<1x256xf32>
    %316 = vector.broadcast %305 : vector<1x256xf32> to vector<8x256xf32>
    %317 = arith.subf %291, %316 : vector<8x256xf32>
    %318 = vector.broadcast %315 : vector<1x256xf32> to vector<8x256xf32>
    %319 = arith.mulf %317, %318 : vector<8x256xf32>
    %c0_238 = arith.constant 0 : index
    %c0_239 = arith.constant 0 : index
    %320 = vector.load %arg9[%c0_238, %c0_239] : memref<1x256xf32, #tpu.memory_space<vmem>>, vector<1x256xf32>
    %321 = vector.broadcast %320 : vector<1x256xf32> to vector<8x256xf32>
    %322 = arith.addf %319, %321 : vector<8x256xf32>
    %cst_240 = arith.constant 0.000000e+00 : f32
    %323 = vector.broadcast %cst_240 : f32 to vector<8x256xf32>
    %324 = arith.cmpf oge, %322, %323 : vector<8x256xf32>
    %cst_241 = arith.constant 2.000000e-01 : f32
    %325 = vector.broadcast %cst_241 : f32 to vector<8x256xf32>
    %326 = arith.mulf %325, %322 : vector<8x256xf32>
    %327 = arith.select %324, %322, %326 : vector<8x256xi1>, vector<8x256xf32>
    %c0_242 = arith.constant 0 : index
    %c0_243 = arith.constant 0 : index
    %328 = vector.load %arg10[%c0_242, %c0_243] : memref<256x4xf32, #tpu.memory_space<vmem>>, vector<256x4xf32>
    %cst_244 = arith.constant dense<0.000000e+00> : vector<8x4xf32>
    %329 = tpu.matmul %327, %328, %cst_244 {dimension_numbers = #tpu.dot_dimension_numbers<[1], [0], [0], [1], [0, 0, 1, 1], [], []>} : vector<8x256xf32>, vector<256x4xf32>, vector<8x4xf32> -> vector<8x4xf32>
    %cst_245 = arith.constant 0.000000e+00 : f32
    %330 = vector.broadcast %cst_245 : f32 to vector<2x1xf32>
    %331 = vector.extract_strided_slice %329 {offsets = [0, 0], sizes = [2, 1], strides = [1, 1]} : vector<8x4xf32> to vector<2x1xf32>
    %332 = arith.addf %330, %331 : vector<2x1xf32>
    %333 = vector.extract_strided_slice %329 {offsets = [2, 1], sizes = [2, 1], strides = [1, 1]} : vector<8x4xf32> to vector<2x1xf32>
    %334 = arith.addf %332, %333 : vector<2x1xf32>
    %335 = vector.extract_strided_slice %329 {offsets = [4, 2], sizes = [2, 1], strides = [1, 1]} : vector<8x4xf32> to vector<2x1xf32>
    %336 = arith.addf %334, %335 : vector<2x1xf32>
    %337 = vector.extract_strided_slice %329 {offsets = [6, 3], sizes = [2, 1], strides = [1, 1]} : vector<8x4xf32> to vector<2x1xf32>
    %338 = arith.addf %336, %337 : vector<2x1xf32>
    %c0_246 = arith.constant 0 : index
    %c0_247 = arith.constant 0 : index
    %339 = vector.load %arg11[%c0_246, %c0_247] : memref<1x1xf32, #tpu.memory_space<vmem>>, vector<1x1xf32>
    %340 = vector.broadcast %339 : vector<1x1xf32> to vector<2x1xf32>
    %341 = arith.addf %338, %340 : vector<2x1xf32>
    %342 = arith.negf %341 : vector<2x1xf32>
    %343 = math.exp %342 : vector<2x1xf32>
    %cst_248 = arith.constant 1.000000e+00 : f32
    %344 = vector.broadcast %cst_248 : f32 to vector<2x1xf32>
    %345 = arith.addf %344, %343 : vector<2x1xf32>
    %346 = arith.divf %344, %345 : vector<2x1xf32>
    %c0_249 = arith.constant 0 : index
    %c0_250 = arith.constant 0 : index
    %347 = vector.load %arg16[%c0_249, %c0_250] : memref<2x1xf32, #tpu.memory_space<vmem>>, vector<2x1xf32>
    tpu.vector_store %arg16[%c0_249, %c0_250], %346 {strides = array<i32>} : memref<2x1xf32, #tpu.memory_space<vmem>>, vector<2x1xf32>,
    return
  }
  func.func @transform_0(%arg0: i32) -> (i32, i32, i32) {
    %c0_i32 = arith.constant 0 : i32
    %c0_i32_0 = arith.constant 0 : i32
    %c0_i32_1 = arith.constant 0 : i32
    %c0_i32_2 = arith.constant 0 : i32
    return %c0_i32, %c0_i32_0, %c0_i32_1 : i32, i32, i32
  }
  func.func @transform_1(%arg0: i32) -> (i32, i32, i32) {
    %c0_i32 = arith.constant 0 : i32
    %c0_i32_0 = arith.constant 0 : i32
    %c0_i32_1 = arith.constant 0 : i32
    %c0_i32_2 = arith.constant 0 : i32
    return %c0_i32, %c0_i32_0, %c0_i32_1 : i32, i32, i32
  }
  func.func @transform_2(%arg0: i32) -> (i32, i32) {
    %c0_i32 = arith.constant 0 : i32
    %c0_i32_0 = arith.constant 0 : i32
    %c0_i32_1 = arith.constant 0 : i32
    return %c0_i32, %c0_i32_0 : i32, i32
  }
  func.func @transform_3(%arg0: i32) -> (i32, i32) {
    %c0_i32 = arith.constant 0 : i32
    %c0_i32_0 = arith.constant 0 : i32
    %c0_i32_1 = arith.constant 0 : i32
    return %c0_i32, %c0_i32_0 : i32, i32
  }
  func.func @transform_4(%arg0: i32) -> (i32, i32) {
    %c0_i32 = arith.constant 0 : i32
    %c0_i32_0 = arith.constant 0 : i32
    %c0_i32_1 = arith.constant 0 : i32
    return %c0_i32, %c0_i32_0 : i32, i32
  }
  func.func @transform_5(%arg0: i32) -> (i32, i32) {
    %c0_i32 = arith.constant 0 : i32
    %c0_i32_0 = arith.constant 0 : i32
    %c0_i32_1 = arith.constant 0 : i32
    return %c0_i32, %c0_i32_0 : i32, i32
  }
  func.func @transform_6(%arg0: i32) -> (i32, i32) {
    %c0_i32 = arith.constant 0 : i32
    %c0_i32_0 = arith.constant 0 : i32
    %c0_i32_1 = arith.constant 0 : i32
    return %c0_i32, %c0_i32_0 : i32, i32
  }
  func.func @transform_7(%arg0: i32) -> (i32, i32) {
    %c0_i32 = arith.constant 0 : i32
    %c0_i32_0 = arith.constant 0 : i32
    %c0_i32_1 = arith.constant 0 : i32
    return %c0_i32, %c0_i32_0 : i32, i32
  }
  func.func @transform_8(%arg0: i32) -> (i32, i32) {
    %c0_i32 = arith.constant 0 : i32
    %c0_i32_0 = arith.constant 0 : i32
    %c0_i32_1 = arith.constant 0 : i32
    return %c0_i32, %c0_i32_0 : i32, i32
  }
  func.func @transform_9(%arg0: i32) -> (i32, i32) {
    %c0_i32 = arith.constant 0 : i32
    %c0_i32_0 = arith.constant 0 : i32
    %c0_i32_1 = arith.constant 0 : i32
    return %c0_i32, %c0_i32_0 : i32, i32
  }
  func.func @transform_10(%arg0: i32) -> (i32, i32) {
    %c0_i32 = arith.constant 0 : i32
    %c0_i32_0 = arith.constant 0 : i32
    %c0_i32_1 = arith.constant 0 : i32
    return %c0_i32, %c0_i32_0 : i32, i32
  }
  func.func @transform_15(%arg0: i32) -> (i32, i32) {
    %c0_i32 = arith.constant 0 : i32
    %c0_i32_0 = arith.constant 0 : i32
    %c0_i32_1 = arith.constant 0 : i32
    return %c0_i32, %c0_i32_0 : i32, i32
  }
}

</mosaic_0001>

<llo_original>
// kernel: cnn_discriminator_forward.1
$region0: #{cnn_discriminator_forward.1}
  #allocation0 [shape = 'u32[]', space=smem, size = 0x4, offset = 0x4, fixed_abs, tag = 'smem constant byte address 0x4 - core index']
  #allocation1 [shape = 'u32[144,128]{1,0:T(1,128)}', space=vmem, size = 0x12000, scoped, tag = 'internal scratch']
  #allocation2 [shape = 'bf16[2,20,256]{2,1,0:T(8,128)(2,1)}', space=vmem, size = 0x6000, scoped, tag = 'scratch operand']
  #allocation3 [shape = 'bf16[2,12,256]{2,1,0:T(8,128)(2,1)}', space=vmem, size = 0x4000, scoped, tag = 'scratch operand']
  #allocation4 [shape = 'bf16[5,256,256]{2,1,0:T(8,128)(2,1)}', space=vmem, size = 0xa0000, scoped, tag = 'scratch operand']
  #allocation5 [shape = 'bf16[5,256,256]{2,1,0:T(8,128)(2,1)}', space=vmem, size = 0xa0000, scoped, tag = 'scratch operand']
  #allocation6 [shape = 'bf16[256,256]{1,0:T(8,128)(2,1)}', space=vmem, size = 0x20000, scoped, tag = 'scratch operand']
  #allocation7 [shape = 'bf16[256,256]{1,0:T(8,128)(2,1)}', space=vmem, size = 0x20000, scoped, tag = 'scratch operand']
  #allocation8 [shape = 'f32[2,256]{1,0:T(2,128)}', space=vmem, size = 0x800, scoped, tag = 'scratch operand']
  #allocation9 [shape = 's32[4]{0}', space=sflag, size = 0x10, scoped, tag = 'scratch operand']
  #allocation10 [shape = 'f32[1,1]{1,0:T(1,128)S(1)}', space=vmem, size = 0x200, scoped, tag = 'scoped memory for cnn_discriminator_forward.1']
  #allocation19 [shape = 's32[]', space=sflag, size = 0x4, offset = 0, fixed_abs, tag = 'sflag constant byte address 0x0 - dummy sync flag']
  #allocation20 [shape = 's32[]', space=sflag, size = 0x4, offset = 0, fixed_abs, tag = 'sflag constant byte address 0x0 - dummy sync flag']
  #allocation21 [shape = 's32[]', space=sflag, size = 0x4, offset = 0, fixed_abs, tag = 'sflag constant byte address 0x0 - dummy sync flag']
  #allocation22 [shape = 'u32[]', space=smem, size = 0x4, offset = 0x44, fixed_abs, tag = 'smem constant byte address 0x44 - assertion arg 0']
  #allocation23 [shape = 'u32[]', space=smem, size = 0x4, offset = 0x48, fixed_abs, tag = 'smem constant byte address 0x48 - assertion arg 1']
  #allocation24 [shape = 's32[]', space=sflag, size = 0x4, offset = 0, fixed_abs, tag = 'sflag constant byte address 0x0 - dummy sync flag']
  #allocation25 [shape = 's32[]', space=sflag, size = 0x4, offset = 0, fixed_abs, tag = 'sflag constant byte address 0x0 - dummy sync flag']
  #allocation26 [shape = 's32[]', space=sflag, size = 0x4, offset = 0, fixed_abs, tag = 'sflag constant byte address 0x0 - dummy sync flag']
  #allocation27 [shape = 's32[]', space=sflag, size = 0x4, offset = 0, fixed_abs, tag = 'sflag constant byte address 0x0 - dummy sync flag']
  %s0 = inlined_call_operand.vmem [shape: bf16[2,36,128], index: 0, kind: input, shape index: {}]
  %s1 = inlined_call_operand.hbm [shape: bf16[3,128,256], index: 1, kind: input, shape index: {}]
  %s2 = inlined_call_operand.vmem [shape: bf16[256,256], index: 2, kind: input, shape index: {}]
  %s3 = inlined_call_operand.vmem [shape: f32[1,256], index: 3, kind: input, shape index: {}]
  %s4 = inlined_call_operand.vmem [shape: f32[1,256], index: 4, kind: input, shape index: {}]
  %s5 = inlined_call_operand.hbm [shape: f32[1,256], index: 5, kind: input, shape index: {}]
  %s6 = inlined_call_operand.hbm [shape: f32[1,256], index: 6, kind: input, shape index: {}]
  %s7 = inlined_call_operand.hbm [shape: f32[1,256], index: 7, kind: input, shape index: {}]
  %s8 = inlined_call_operand.hbm [shape: f32[1,256], index: 8, kind: input, shape index: {}]
  %s9 = inlined_call_operand.vmem [shape: f32[256,4], index: 9, kind: input, shape index: {}]
  %s10 = inlined_call_operand.<no memory space> [shape: f32[1,1], index: 10, kind: input, shape index: {}]
  %s11 = inlined_call_operand.vmem [shape: bf16[5,256,256], index: 11, kind: input, shape index: {}]
  %s12 = inlined_call_operand.hbm [shape: bf16[5,256,256], index: 12, kind: input, shape index: {}]
  %s13 = inlined_call_operand.hbm [shape: bf16[256,256], index: 13, kind: input, shape index: {}]
  %s14 = inlined_call_operand.hbm [shape: bf16[256,256], index: 14, kind: input, shape index: {}]
  %s15 = inlined_call_operand.vmem [shape: f32[2,1], index: 15, kind: output, shape index: {}]
  %s16 = sld [smem:[#allocation0]]
  $region120: #{cnn_discriminator_forward.1} parent=0
    _
  %s18 = ssub.s32 1, %s16
  %s19 = scalar_select 0, %s18, %s16
  %v20 = vstv %s10
  %21 = vst [vmem:[#allocation10] sm:$0x1] %v20
  $region1: #{cnn_discriminator_forward.1} parent=0
    #allocation11 [shape = 'u8[196608]{0}', space=vmem, size = 0x30000, scoped, tag = 'input window, operand 1, single buffered']
    #allocation12 [shape = 's32[1]{0}', space=sflag, size = 0x4, scoped, tag = 'scoped memory for cnn_discriminator_forward.1']
    #allocation13 [shape = 'u8[1024]{0}', space=vmem, size = 0x400, scoped, tag = 'input window, operand 5, single buffered']
    #allocation14 [shape = 's32[1]{0}', space=sflag, size = 0x4, scoped, tag = 'scoped memory for cnn_discriminator_forward.1']
    #allocation15 [shape = 'u8[1024]{0}', space=vmem, size = 0x400, scoped, tag = 'input window, operand 6, single buffered']
    #allocation16 [shape = 'u8[1024]{0}', space=vmem, size = 0x400, scoped, tag = 'input window, operand 7, single buffered']
    #allocation17 [shape = 's32[1]{0}', space=sflag, size = 0x4, scoped, tag = 'scoped memory for cnn_discriminator_forward.1']
    #allocation18 [shape = 'u8[1024]{0}', space=vmem, size = 0x400, scoped, tag = 'input window, operand 8, single buffered']
    %22 = vsyncpa [#allocation12], 0
    %23 = vsyncpa [#allocation14], 0
    %24 = vsyncpa [#allocation17], 0
    // Predicated region
    $region2: #{cnn_discriminator_forward.1} parent=1 // pred_check
      _
    $region3: #{cnn_discriminator_forward.1} parent=1 // pred_check_branch
      %26 = sbr.rel (0) target = $region5
    $region4: #{cnn_discriminator_forward.1} parent=1 // pred_region
      _
    $region5: #{cnn_discriminator_forward.1} parent=1 // pred_fallthru
      _
    // Predicated region
    $region6: #{cnn_discriminator_forward.1} parent=1 // pred_check
      _
    $region7: #{cnn_discriminator_forward.1} parent=1 // pred_check_branch
      %28 = sbr.rel (0) target = $region9
    $region8: #{cnn_discriminator_forward.1} parent=1 // pred_region
      %s30 = ssub.s32 6144, 6144
      %31 = vsyncadd [#allocation12], %s30
      %s32 = sshll.u32 [#allocation11], 4
      %s33 = int_to_ptr.vmem [resolvable:$true] %s32
      %38 = dma.hbm_to_vmem [thread:$0]  %s1, 6144, %s33, [#allocation12], 128, 128, 8
    $region9: #{cnn_discriminator_forward.1} parent=1 // pred_fallthru
      _
    // Predicated region
    $region10: #{cnn_discriminator_forward.1} parent=1 // pred_check
      _
    $region11: #{cnn_discriminator_forward.1} parent=1 // pred_check_branch
      %40 = sbr.rel (0) target = $region13
    $region12: #{cnn_discriminator_forward.1} parent=1 // pred_region
      _
    $region13: #{cnn_discriminator_forward.1} parent=1 // pred_fallthru
      _
    // Predicated region
    $region14: #{cnn_discriminator_forward.1} parent=1 // pred_check
      _
    $region15: #{cnn_discriminator_forward.1} parent=1 // pred_check_branch
      %42 = sbr.rel (0) target = $region17
    $region16: #{cnn_discriminator_forward.1} parent=1 // pred_region
      _
    $region17: #{cnn_discriminator_forward.1} parent=1 // pred_fallthru
      _
    // Predicated region
    $region18: #{cnn_discriminator_forward.1} parent=1 // pred_check
      _
    $region19: #{cnn_discriminator_forward.1} parent=1 // pred_check_branch
      %44 = sbr.rel (0) target = $region21
    $region20: #{cnn_discriminator_forward.1} parent=1 // pred_region
      _
    $region21: #{cnn_discriminator_forward.1} parent=1 // pred_fallthru
      _
    // Predicated region
    $region22: #{cnn_discriminator_forward.1} parent=1 // pred_check
      _
    $region23: #{cnn_discriminator_forward.1} parent=1 // pred_check_branch
      %46 = sbr.rel (0) target = $region25
    $region24: #{cnn_discriminator_forward.1} parent=1 // pred_region
      %s48 = ssub.s32 32, 32
      %49 = vsyncadd [#allocation14], %s48
      %s51 = sshll.u32 [#allocation13], 4
      %s52 = int_to_ptr.vmem [resolvable:$true] %s51
      %54 = dma.hbm_to_vmem [thread:$0]  %s5, 32, %s52, [#allocation14]
    $region25: #{cnn_discriminator_forward.1} parent=1 // pred_fallthru
      _
    // Predicated region
    $region26: #{cnn_discriminator_forward.1} parent=1 // pred_check
      _
    $region27: #{cnn_discriminator_forward.1} parent=1 // pred_check_branch
      %56 = sbr.rel (0) target = $region29
    $region28: #{cnn_discriminator_forward.1} parent=1 // pred_region
      %s58 = ssub.s32 32, 32
      %59 = vsyncadd [#allocation14], %s58
      %s61 = sshll.u32 [#allocation15], 4
      %s62 = int_to_ptr.vmem [resolvable:$true] %s61
      %64 = dma.hbm_to_vmem [thread:$0]  %s6, 32, %s62, [#allocation14]
    $region29: #{cnn_discriminator_forward.1} parent=1 // pred_fallthru
      _
    // Predicated region
    $region30: #{cnn_discriminator_forward.1} parent=1 // pred_check
      _
    $region31: #{cnn_discriminator_forward.1} parent=1 // pred_check_branch
      %66 = sbr.rel (0) target = $region33
    $region32: #{cnn_discriminator_forward.1} parent=1 // pred_region
      %s68 = ssub.s32 32, 32
      %69 = vsyncadd [#allocation17], %s68
      %s71 = sshll.u32 [#allocation16], 4
      %s72 = int_to_ptr.vmem [resolvable:$true] %s71
      %74 = dma.hbm_to_vmem [thread:$0]  %s7, 32, %s72, [#allocation17]
    $region33: #{cnn_discriminator_forward.1} parent=1 // pred_fallthru
      _
    // Predicated region
    $region34: #{cnn_discriminator_forward.1} parent=1 // pred_check
      _
    $region35: #{cnn_discriminator_forward.1} parent=1 // pred_check_branch
      %76 = sbr.rel (0) target = $region37
    $region36: #{cnn_discriminator_forward.1} parent=1 // pred_region
      %s78 = ssub.s32 32, 32
      %79 = vsyncadd [#allocation17], %s78
      %s81 = sshll.u32 [#allocation18], 4
      %s82 = int_to_ptr.vmem [resolvable:$true] %s81
      %84 = dma.hbm_to_vmem [thread:$0]  %s8, 32, %s82, [#allocation17]
    $region37: #{cnn_discriminator_forward.1} parent=1 // pred_fallthru
      _
    // Predicated region
    $region38: #{cnn_discriminator_forward.1} parent=1 // pred_check
      _
    $region39: #{cnn_discriminator_forward.1} parent=1 // pred_check_branch
      %86 = sbr.rel (0) target = $region41
    $region40: #{cnn_discriminator_forward.1} parent=1 // pred_region
      _
    $region41: #{cnn_discriminator_forward.1} parent=1 // pred_fallthru
      _
    // Predicated region
    $region42: #{cnn_discriminator_forward.1} parent=1 // pred_check
      _
    $region43: #{cnn_discriminator_forward.1} parent=1 // pred_check_branch
      %88 = sbr.rel (0) target = $region45
    $region44: #{cnn_discriminator_forward.1} parent=1 // pred_region
      _
    $region45: #{cnn_discriminator_forward.1} parent=1 // pred_fallthru
      _
    // Predicated region
    $region46: #{cnn_discriminator_forward.1} parent=1 // pred_check
      _
    $region47: #{cnn_discriminator_forward.1} parent=1 // pred_check_branch
      %90 = sbr.rel (0) target = $region49
    $region48: #{cnn_discriminator_forward.1} parent=1 // pred_region
      %91 = dma.done [#allocation12], 6144
    $region49: #{cnn_discriminator_forward.1} parent=1 // pred_fallthru
      _
    // Predicated region
    $region50: #{cnn_discriminator_forward.1} parent=1 // pred_check
      _
    $region51: #{cnn_discriminator_forward.1} parent=1 // pred_check_branch
      %93 = sbr.rel (0) target = $region53
    $region52: #{cnn_discriminator_forward.1} parent=1 // pred_region
      %94 = dma.done [#allocation14], 32
    $region53: #{cnn_discriminator_forward.1} parent=1 // pred_fallthru
      _
    // Predicated region
    $region54: #{cnn_discriminator_forward.1} parent=1 // pred_check
      _
    $region55: #{cnn_discriminator_forward.1} parent=1 // pred_check_branch
      %96 = sbr.rel (0) target = $region57
    $region56: #{cnn_discriminator_forward.1} parent=1 // pred_region
      %97 = dma.done [#allocation14], 32
    $region57: #{cnn_discriminator_forward.1} parent=1 // pred_fallthru
      _
    // Predicated region
    $region58: #{cnn_discriminator_forward.1} parent=1 // pred_check
      _
    $region59: #{cnn_discriminator_forward.1} parent=1 // pred_check_branch
      %99 = sbr.rel (0) target = $region61
    $region60: #{cnn_discriminator_forward.1} parent=1 // pred_region
      %100 = dma.done [#allocation17], 32
    $region61: #{cnn_discriminator_forward.1} parent=1 // pred_fallthru
      _
    // Predicated region
    $region62: #{cnn_discriminator_forward.1} parent=1 // pred_check
      _
    $region63: #{cnn_discriminator_forward.1} parent=1 // pred_check_branch
      %102 = sbr.rel (0) target = $region65
    $region64: #{cnn_discriminator_forward.1} parent=1 // pred_region
      %103 = dma.done [#allocation17], 32
    $region65: #{cnn_discriminator_forward.1} parent=1 // pred_fallthru
      _
    %p106 = scmp.lt.u32.totalorder 1280, 8
    %p107 = pneg %p106
    // Predicated region
    $region66: #{cnn_discriminator_forward.1} parent=1 // pred_check
      _
    $region67: #{cnn_discriminator_forward.1} parent=1 // pred_check_branch
      %109 = sbr.rel (%p106) target = $region69
    $region68: #{cnn_discriminator_forward.1} parent=1 // pred_region
      %s125 = sand.u32 1280, 7
      %p126 = scmp.eq.s32.totalorder %s125, 0
      // Predicated region
      $region81: #{cnn_discriminator_forward.1} parent=68 // pred_check
        %p127 = pneg %p126
      $region82: #{cnn_discriminator_forward.1} parent=68 // pred_check_branch
        %129 = sbr.rel (%p127) target = $region84
      $region83: #{cnn_discriminator_forward.1} parent=68 // pred_region
        loop: start=0, step=1, limit=1
        $region85: #{cnn_discriminator_forward.1} parent=83 // loop_pre_header
          _
        $region86: #{cnn_discriminator_forward.1} parent=83 // loop_header
          %s131 = sphi 0, %s135
          %p132 = scmp.ge.s32.totalorder %s131, 1
          %s136 = sphi %s11, %s11
          %s137 = sphi [#allocation4], [#allocation4]
        $region87: #{cnn_discriminator_forward.1} parent=83 // loop_header_branch
          %134 = sbr.rel (%p132) target = $region91
        $region88: #{cnn_discriminator_forward.1} parent=83 // loop_body
          %v138 = vld [vmem:[%s136] sm:$0xff]
          %139 = vst [vmem:[%s137] sm:$0xff] %v138
          %v140 = vld [vmem:[%s136 + $0x8] sm:$0xff]
          %141 = vst [vmem:[%s137 + $0x8] sm:$0xff] %v140
          %v142 = vld [vmem:[%s136 + $0x10] sm:$0xff]
          %143 = vst [vmem:[%s137 + $0x10] sm:$0xff] %v142
          %v144 = vld [vmem:[%s136 + $0x18] sm:$0xff]
          %145 = vst [vmem:[%s137 + $0x18] sm:$0xff] %v144
          %v146 = vld [vmem:[%s136 + $0x20] sm:$0xff]
          %147 = vst [vmem:[%s137 + $0x20] sm:$0xff] %v146
          %v148 = vld [vmem:[%s136 + $0x28] sm:$0xff]
          %149 = vst [vmem:[%s137 + $0x28] sm:$0xff] %v148
          %v150 = vld [vmem:[%s136 + $0x30] sm:$0xff]
          %151 = vst [vmem:[%s137 + $0x30] sm:$0xff] %v150
          %v152 = vld [vmem:[%s136 + $0x38] sm:$0xff]
          %153 = vst [vmem:[%s137 + $0x38] sm:$0xff] %v152
          %v154 = vld [vmem:[%s136 + $0x40] sm:$0xff]
          %155 = vst [vmem:[%s137 + $0x40] sm:$0xff] %v154
          %v156 = vld [vmem:[%s136 + $0x48] sm:$0xff]
          %157 = vst [vmem:[%s137 + $0x48] sm:$0xff] %v156
          %v158 = vld [vmem:[%s136 + $0x50] sm:$0xff]
          %159 = vst [vmem:[%s137 + $0x50] sm:$0xff] %v158
          %v160 = vld [vmem:[%s136 + $0x58] sm:$0xff]
          %161 = vst [vmem:[%s137 + $0x58] sm:$0xff] %v160
          %v162 = vld [vmem:[%s136 + $0x60] sm:$0xff]
          %163 = vst [vmem:[%s137 + $0x60] sm:$0xff] %v162
          %v164 = vld [vmem:[%s136 + $0x68] sm:$0xff]
          %165 = vst [vmem:[%s137 + $0x68] sm:$0xff] %v164
          %v166 = vld [vmem:[%s136 + $0x70] sm:$0xff]
          %167 = vst [vmem:[%s137 + $0x70] sm:$0xff] %v166
          %v168 = vld [vmem:[%s136 + $0x78] sm:$0xff]
          %169 = vst [vmem:[%s137 + $0x78] sm:$0xff] %v168
          %v170 = vld [vmem:[%s136 + $0x80] sm:$0xff]
          %171 = vst [vmem:[%s137 + $0x80] sm:$0xff] %v170
          %v172 = vld [vmem:[%s136 + $0x88] sm:$0xff]
          %173 = vst [vmem:[%s137 + $0x88] sm:$0xff] %v172
          %v174 = vld [vmem:[%s136 + $0x90] sm:$0xff]
          %175 = vst [vmem:[%s137 + $0x90] sm:$0xff] %v174
          %v176 = vld [vmem:[%s136 + $0x98] sm:$0xff]
          %177 = vst [vmem:[%s137 + $0x98] sm:$0xff] %v176
          %v178 = vld [vmem:[%s136 + $0xa0] sm:$0xff]
          %179 = vst [vmem:[%s137 + $0xa0] sm:$0xff] %v178
          %v180 = vld [vmem:[%s136 + $0xa8] sm:$0xff]
          %181 = vst [vmem:[%s137 + $0xa8] sm:$0xff] %v180
          %v182 = vld [vmem:[%s136 + $0xb0] sm:$0xff]
          %183 = vst [vmem:[%s137 + $0xb0] sm:$0xff] %v182
          %v184 = vld [vmem:[%s136 + $0xb8] sm:$0xff]
          %185 = vst [vmem:[%s137 + $0xb8] sm:$0xff] %v184
          %v186 = vld [vmem:[%s136 + $0xc0] sm:$0xff]
          %187 = vst [vmem:[%s137 + $0xc0] sm:$0xff] %v186
          %v188 = vld [vmem:[%s136 + $0xc8] sm:$0xff]
          %189 = vst [vmem:[%s137 + $0xc8] sm:$0xff] %v188
          %v190 = vld [vmem:[%s136 + $0xd0] sm:$0xff]
          %191 = vst [vmem:[%s137 + $0xd0] sm:$0xff] %v190
          %v192 = vld [vmem:[%s136 + $0xd8] sm:$0xff]
          %193 = vst [vmem:[%s137 + $0xd8] sm:$0xff] %v192
          %v194 = vld [vmem:[%s136 + $0xe0] sm:$0xff]
          %195 = vst [vmem:[%s137 + $0xe0] sm:$0xff] %v194
          %v196 = vld [vmem:[%s136 + $0xe8] sm:$0xff]
          %197 = vst [vmem:[%s137 + $0xe8] sm:$0xff] %v196
          %v198 = vld [vmem:[%s136 + $0xf0] sm:$0xff]
          %199 = vst [vmem:[%s137 + $0xf0] sm:$0xff] %v198
          %v200 = vld [vmem:[%s136 + $0xf8] sm:$0xff]
          %201 = vst [vmem:[%s137 + $0xf8] sm:$0xff] %v200
          %v202 = vld [vmem:[%s136 + $0x100] sm:$0xff]
          %203 = vst [vmem:[%s137 + $0x100] sm:$0xff] %v202
          %v204 = vld [vmem:[%s136 + $0x108] sm:$0xff]
          %205 = vst [vmem:[%s137 + $0x108] sm:$0xff] %v204
          %v206 = vld [vmem:[%s136 + $0x110] sm:$0xff]
          %207 = vst [vmem:[%s137 + $0x110] sm:$0xff] %v206
          %v208 = vld [vmem:[%s136 + $0x118] sm:$0xff]
          %209 = vst [vmem:[%s137 + $0x118] sm:$0xff] %v208
          %v210 = vld [vmem:[%s136 + $0x120] sm:$0xff]
          %211 = vst [vmem:[%s137 + $0x120] sm:$0xff] %v210
          %v212 = vld [vmem:[%s136 + $0x128] sm:$0xff]
          %213 = vst [vmem:[%s137 + $0x128] sm:$0xff] %v212
          %v214 = vld [vmem:[%s136 + $0x130] sm:$0xff]
          %215 = vst [vmem:[%s137 + $0x130] sm:$0xff] %v214
          %v216 = vld [vmem:[%s136 + $0x138] sm:$0xff]
          %217 = vst [vmem:[%s137 + $0x138] sm:$0xff] %v216
          %v218 = vld [vmem:[%s136 + $0x140] sm:$0xff]
          %219 = vst [vmem:[%s137 + $0x140] sm:$0xff] %v218
          %v220 = vld [vmem:[%s136 + $0x148] sm:$0xff]
          %221 = vst [vmem:[%s137 + $0x148] sm:$0xff] %v220
          %v222 = vld [vmem:[%s136 + $0x150] sm:$0xff]
          %223 = vst [vmem:[%s137 + $0x150] sm:$0xff] %v222
          %v224 = vld [vmem:[%s136 + $0x158] sm:$0xff]
          %225 = vst [vmem:[%s137 + $0x158] sm:$0xff] %v224
          %v226 = vld [vmem:[%s136 + $0x160] sm:$0xff]
          %227 = vst [vmem:[%s137 + $0x160] sm:$0xff] %v226
          %v228 = vld [vmem:[%s136 + $0x168] sm:$0xff]
          %229 = vst [vmem:[%s137 + $0x168] sm:$0xff] %v228
          %v230 = vld [vmem:[%s136 + $0x170] sm:$0xff]
          %231 = vst [vmem:[%s137 + $0x170] sm:$0xff] %v230
          %v232 = vld [vmem:[%s136 + $0x178] sm:$0xff]
          %233 = vst [vmem:[%s137 + $0x178] sm:$0xff] %v232
          %v234 = vld [vmem:[%s136 + $0x180] sm:$0xff]
          %235 = vst [vmem:[%s137 + $0x180] sm:$0xff] %v234
          %v236 = vld [vmem:[%s136 + $0x188] sm:$0xff]
          %237 = vst [vmem:[%s137 + $0x188] sm:$0xff] %v236
          %v238 = vld [vmem:[%s136 + $0x190] sm:$0xff]
          %239 = vst [vmem:[%s137 + $0x190] sm:$0xff] %v238
          %v240 = vld [vmem:[%s136 + $0x198] sm:$0xff]
          %241 = vst [vmem:[%s137 + $0x198] sm:$0xff] %v240
          %v242 = vld [vmem:[%s136 + $0x1a0] sm:$0xff]
          %243 = vst [vmem:[%s137 + $0x1a0] sm:$0xff] %v242
          %v244 = vld [vmem:[%s136 + $0x1a8] sm:$0xff]
          %245 = vst [vmem:[%s137 + $0x1a8] sm:$0xff] %v244
          %v246 = vld [vmem:[%s136 + $0x1b0] sm:$0xff]
          %247 = vst [vmem:[%s137 + $0x1b0] sm:$0xff] %v246
          %v248 = vld [vmem:[%s136 + $0x1b8] sm:$0xff]
          %249 = vst [vmem:[%s137 + $0x1b8] sm:$0xff] %v248
          %v250 = vld [vmem:[%s136 + $0x1c0] sm:$0xff]
          %251 = vst [vmem:[%s137 + $0x1c0] sm:$0xff] %v250
          %v252 = vld [vmem:[%s136 + $0x1c8] sm:$0xff]
          %253 = vst [vmem:[%s137 + $0x1c8] sm:$0xff] %v252
          %v254 = vld [vmem:[%s136 + $0x1d0] sm:$0xff]
          %255 = vst [vmem:[%s137 + $0x1d0] sm:$0xff] %v254
          %v256 = vld [vmem:[%s136 + $0x1d8] sm:$0xff]
          %257 = vst [vmem:[%s137 + $0x1d8] sm:$0xff] %v256
          %v258 = vld [vmem:[%s136 + $0x1e0] sm:$0xff]
          %259 = vst [vmem:[%s137 + $0x1e0] sm:$0xff] %v258
          %v260 = vld [vmem:[%s136 + $0x1e8] sm:$0xff]
          %261 = vst [vmem:[%s137 + $0x1e8] sm:$0xff] %v260
          %v262 = vld [vmem:[%s136 + $0x1f0] sm:$0xff]
          %263 = vst [vmem:[%s137 + $0x1f0] sm:$0xff] %v262
          %v264 = vld [vmem:[%s136 + $0x1f8] sm:$0xff]
          %265 = vst [vmem:[%s137 + $0x1f8] sm:$0xff] %v264
          %v266 = vld [vmem:[%s136 + $0x200] sm:$0xff]
          %267 = vst [vmem:[%s137 + $0x200] sm:$0xff] %v266
          %v268 = vld [vmem:[%s136 + $0x208] sm:$0xff]
          %269 = vst [vmem:[%s137 + $0x208] sm:$0xff] %v268
          %v270 = vld [vmem:[%s136 + $0x210] sm:$0xff]
          %271 = vst [vmem:[%s137 + $0x210] sm:$0xff] %v270
          %v272 = vld [vmem:[%s136 + $0x218] sm:$0xff]
          %273 = vst [vmem:[%s137 + $0x218] sm:$0xff] %v272
          %v274 = vld [vmem:[%s136 + $0x220] sm:$0xff]
          %275 = vst [vmem:[%s137 + $0x220] sm:$0xff] %v274
          %v276 = vld [vmem:[%s136 + $0x228] sm:$0xff]
          %277 = vst [vmem:[%s137 + $0x228] sm:$0xff] %v276
          %v278 = vld [vmem:[%s136 + $0x230] sm:$0xff]
          %279 = vst [vmem:[%s137 + $0x230] sm:$0xff] %v278
          %v280 = vld [vmem:[%s136 + $0x238] sm:$0xff]
          %281 = vst [vmem:[%s137 + $0x238] sm:$0xff] %v280
          %v282 = vld [vmem:[%s136 + $0x240] sm:$0xff]
          %283 = vst [vmem:[%s137 + $0x240] sm:$0xff] %v282
          %v284 = vld [vmem:[%s136 + $0x248] sm:$0xff]
          %285 = vst [vmem:[%s137 + $0x248] sm:$0xff] %v284
          %v286 = vld [vmem:[%s136 + $0x250] sm:$0xff]
          %287 = vst [vmem:[%s137 + $0x250] sm:$0xff] %v286
          %v288 = vld [vmem:[%s136 + $0x258] sm:$0xff]
          %289 = vst [vmem:[%s137 + $0x258] sm:$0xff] %v288
          %v290 = vld [vmem:[%s136 + $0x260] sm:$0xff]
          %291 = vst [vmem:[%s137 + $0x260] sm:$0xff] %v290
          %v292 = vld [vmem:[%s136 + $0x268] sm:$0xff]
          %293 = vst [vmem:[%s137 + $0x268] sm:$0xff] %v292
          %v294 = vld [vmem:[%s136 + $0x270] sm:$0xff]
          %295 = vst [vmem:[%s137 + $0x270] sm:$0xff] %v294
          %v296 = vld [vmem:[%s136 + $0x278] sm:$0xff]
          %297 = vst [vmem:[%s137 + $0x278] sm:$0xff] %v296
          %v298 = vld [vmem:[%s136 + $0x280] sm:$0xff]
          %299 = vst [vmem:[%s137 + $0x280] sm:$0xff] %v298
          %v300 = vld [vmem:[%s136 + $0x288] sm:$0xff]
          %301 = vst [vmem:[%s137 + $0x288] sm:$0xff] %v300
          %v302 = vld [vmem:[%s136 + $0x290] sm:$0xff]
          %303 = vst [vmem:[%s137 + $0x290] sm:$0xff] %v302
          %v304 = vld [vmem:[%s136 + $0x298] sm:$0xff]
          %305 = vst [vmem:[%s137 + $0x298] sm:$0xff] %v304
          %v306 = vld [vmem:[%s136 + $0x2a0] sm:$0xff]
          %307 = vst [vmem:[%s137 + $0x2a0] sm:$0xff] %v306
          %v308 = vld [vmem:[%s136 + $0x2a8] sm:$0xff]
          %309 = vst [vmem:[%s137 + $0x2a8] sm:$0xff] %v308
          %v310 = vld [vmem:[%s136 + $0x2b0] sm:$0xff]
          %311 = vst [vmem:[%s137 + $0x2b0] sm:$0xff] %v310
          %v312 = vld [vmem:[%s136 + $0x2b8] sm:$0xff]
          %313 = vst [vmem:[%s137 + $0x2b8] sm:$0xff] %v312
          %v314 = vld [vmem:[%s136 + $0x2c0] sm:$0xff]
          %315 = vst [vmem:[%s137 + $0x2c0] sm:$0xff] %v314
          %v316 = vld [vmem:[%s136 + $0x2c8] sm:$0xff]
          %317 = vst [vmem:[%s137 + $0x2c8] sm:$0xff] %v316
          %v318 = vld [vmem:[%s136 + $0x2d0] sm:$0xff]
          %319 = vst [vmem:[%s137 + $0x2d0] sm:$0xff] %v318
          %v320 = vld [vmem:[%s136 + $0x2d8] sm:$0xff]
          %321 = vst [vmem:[%s137 + $0x2d8] sm:$0xff] %v320
          %v322 = vld [vmem:[%s136 + $0x2e0] sm:$0xff]
          %323 = vst [vmem:[%s137 + $0x2e0] sm:$0xff] %v322
          %v324 = vld [vmem:[%s136 + $0x2e8] sm:$0xff]
          %325 = vst [vmem:[%s137 + $0x2e8] sm:$0xff] %v324
          %v326 = vld [vmem:[%s136 + $0x2f0] sm:$0xff]
          %327 = vst [vmem:[%s137 + $0x2f0] sm:$0xff] %v326
          %v328 = vld [vmem:[%s136 + $0x2f8] sm:$0xff]
          %329 = vst [vmem:[%s137 + $0x2f8] sm:$0xff] %v328
          %v330 = vld [vmem:[%s136 + $0x300] sm:$0xff]
          %331 = vst [vmem:[%s137 + $0x300] sm:$0xff] %v330
          %v332 = vld [vmem:[%s136 + $0x308] sm:$0xff]
          %333 = vst [vmem:[%s137 + $0x308] sm:$0xff] %v332
          %v334 = vld [vmem:[%s136 + $0x310] sm:$0xff]
          %335 = vst [vmem:[%s137 + $0x310] sm:$0xff] %v334
          %v336 = vld [vmem:[%s136 + $0x318] sm:$0xff]
          %337 = vst [vmem:[%s137 + $0x318] sm:$0xff] %v336
          %v338 = vld [vmem:[%s136 + $0x320] sm:$0xff]
          %339 = vst [vmem:[%s137 + $0x320] sm:$0xff] %v338
          %v340 = vld [vmem:[%s136 + $0x328] sm:$0xff]
          %341 = vst [vmem:[%s137 + $0x328] sm:$0xff] %v340
          %v342 = vld [vmem:[%s136 + $0x330] sm:$0xff]
          %343 = vst [vmem:[%s137 + $0x330] sm:$0xff] %v342
          %v344 = vld [vmem:[%s136 + $0x338] sm:$0xff]
          %345 = vst [vmem:[%s137 + $0x338] sm:$0xff] %v344
          %v346 = vld [vmem:[%s136 + $0x340] sm:$0xff]
          %347 = vst [vmem:[%s137 + $0x340] sm:$0xff] %v346
          %v348 = vld [vmem:[%s136 + $0x348] sm:$0xff]
          %349 = vst [vmem:[%s137 + $0x348] sm:$0xff] %v348
          %v350 = vld [vmem:[%s136 + $0x350] sm:$0xff]
          %351 = vst [vmem:[%s137 + $0x350] sm:$0xff] %v350
          %v352 = vld [vmem:[%s136 + $0x358] sm:$0xff]
          %353 = vst [vmem:[%s137 + $0x358] sm:$0xff] %v352
          %v354 = vld [vmem:[%s136 + $0x360] sm:$0xff]
          %355 = vst [vmem:[%s137 + $0x360] sm:$0xff] %v354
          %v356 = vld [vmem:[%s136 + $0x368] sm:$0xff]
          %357 = vst [vmem:[%s137 + $0x368] sm:$0xff] %v356
          %v358 = vld [vmem:[%s136 + $0x370] sm:$0xff]
          %359 = vst [vmem:[%s137 + $0x370] sm:$0xff] %v358
          %v360 = vld [vmem:[%s136 + $0x378] sm:$0xff]
          %361 = vst [vmem:[%s137 + $0x378] sm:$0xff] %v360
          %v362 = vld [vmem:[%s136 + $0x380] sm:$0xff]
          %363 = vst [vmem:[%s137 + $0x380] sm:$0xff] %v362
          %v364 = vld [vmem:[%s136 + $0x388] sm:$0xff]
          %365 = vst [vmem:[%s137 + $0x388] sm:$0xff] %v364
          %v366 = vld [vmem:[%s136 + $0x390] sm:$0xff]
          %367 = vst [vmem:[%s137 + $0x390] sm:$0xff] %v366
          %v368 = vld [vmem:[%s136 + $0x398] sm:$0xff]
          %369 = vst [vmem:[%s137 + $0x398] sm:$0xff] %v368
          %v370 = vld [vmem:[%s136 + $0x3a0] sm:$0xff]
          %371 = vst [vmem:[%s137 + $0x3a0] sm:$0xff] %v370
          %v372 = vld [vmem:[%s136 + $0x3a8] sm:$0xff]
          %373 = vst [vmem:[%s137 + $0x3a8] sm:$0xff] %v372
          %v374 = vld [vmem:[%s136 + $0x3b0] sm:$0xff]
          %375 = vst [vmem:[%s137 + $0x3b0] sm:$0xff] %v374
          %v376 = vld [vmem:[%s136 + $0x3b8] sm:$0xff]
          %377 = vst [vmem:[%s137 + $0x3b8] sm:$0xff] %v376
          %v378 = vld [vmem:[%s136 + $0x3c0] sm:$0xff]
          %379 = vst [vmem:[%s137 + $0x3c0] sm:$0xff] %v378
          %v380 = vld [vmem:[%s136 + $0x3c8] sm:$0xff]
          %381 = vst [vmem:[%s137 + $0x3c8] sm:$0xff] %v380
          %v382 = vld [vmem:[%s136 + $0x3d0] sm:$0xff]
          %383 = vst [vmem:[%s137 + $0x3d0] sm:$0xff] %v382
          %v384 = vld [vmem:[%s136 + $0x3d8] sm:$0xff]
          %385 = vst [vmem:[%s137 + $0x3d8] sm:$0xff] %v384
          %v386 = vld [vmem:[%s136 + $0x3e0] sm:$0xff]
          %387 = vst [vmem:[%s137 + $0x3e0] sm:$0xff] %v386
          %v388 = vld [vmem:[%s136 + $0x3e8] sm:$0xff]
          %389 = vst [vmem:[%s137 + $0x3e8] sm:$0xff] %v388
          %v390 = vld [vmem:[%s136 + $0x3f0] sm:$0xff]
          %391 = vst [vmem:[%s137 + $0x3f0] sm:$0xff] %v390
          %v392 = vld [vmem:[%s136 + $0x3f8] sm:$0xff]
          %393 = vst [vmem:[%s137 + $0x3f8] sm:$0xff] %v392
          %v394 = vld [vmem:[%s136 + $0x400] sm:$0xff]
          %395 = vst [vmem:[%s137 + $0x400] sm:$0xff] %v394
          %v396 = vld [vmem:[%s136 + $0x408] sm:$0xff]
          %397 = vst [vmem:[%s137 + $0x408] sm:$0xff] %v396
          %v398 = vld [vmem:[%s136 + $0x410] sm:$0xff]
          %399 = vst [vmem:[%s137 + $0x410] sm:$0xff] %v398
          %v400 = vld [vmem:[%s136 + $0x418] sm:$0xff]
          %401 = vst [vmem:[%s137 + $0x418] sm:$0xff] %v400
          %v402 = vld [vmem:[%s136 + $0x420] sm:$0xff]
          %403 = vst [vmem:[%s137 + $0x420] sm:$0xff] %v402
          %v404 = vld [vmem:[%s136 + $0x428] sm:$0xff]
          %405 = vst [vmem:[%s137 + $0x428] sm:$0xff] %v404
          %v406 = vld [vmem:[%s136 + $0x430] sm:$0xff]
          %407 = vst [vmem:[%s137 + $0x430] sm:$0xff] %v406
          %v408 = vld [vmem:[%s136 + $0x438] sm:$0xff]
          %409 = vst [vmem:[%s137 + $0x438] sm:$0xff] %v408
          %v410 = vld [vmem:[%s136 + $0x440] sm:$0xff]
          %411 = vst [vmem:[%s137 + $0x440] sm:$0xff] %v410
          %v412 = vld [vmem:[%s136 + $0x448] sm:$0xff]
          %413 = vst [vmem:[%s137 + $0x448] sm:$0xff] %v412
          %v414 = vld [vmem:[%s136 + $0x450] sm:$0xff]
          %415 = vst [vmem:[%s137 + $0x450] sm:$0xff] %v414
          %v416 = vld [vmem:[%s136 + $0x458] sm:$0xff]
          %417 = vst [vmem:[%s137 + $0x458] sm:$0xff] %v416
          %v418 = vld [vmem:[%s136 + $0x460] sm:$0xff]
          %419 = vst [vmem:[%s137 + $0x460] sm:$0xff] %v418
          %v420 = vld [vmem:[%s136 + $0x468] sm:$0xff]
          %421 = vst [vmem:[%s137 + $0x468] sm:$0xff] %v420
          %v422 = vld [vmem:[%s136 + $0x470] sm:$0xff]
          %423 = vst [vmem:[%s137 + $0x470] sm:$0xff] %v422
          %v424 = vld [vmem:[%s136 + $0x478] sm:$0xff]
          %425 = vst [vmem:[%s137 + $0x478] sm:$0xff] %v424
          %v426 = vld [vmem:[%s136 + $0x480] sm:$0xff]
          %427 = vst [vmem:[%s137 + $0x480] sm:$0xff] %v426
          %v428 = vld [vmem:[%s136 + $0x488] sm:$0xff]
          %429 = vst [vmem:[%s137 + $0x488] sm:$0xff] %v428
          %v430 = vld [vmem:[%s136 + $0x490] sm:$0xff]
          %431 = vst [vmem:[%s137 + $0x490] sm:$0xff] %v430
          %v432 = vld [vmem:[%s136 + $0x498] sm:$0xff]
          %433 = vst [vmem:[%s137 + $0x498] sm:$0xff] %v432
          %v434 = vld [vmem:[%s136 + $0x4a0] sm:$0xff]
          %435 = vst [vmem:[%s137 + $0x4a0] sm:$0xff] %v434
          %v436 = vld [vmem:[%s136 + $0x4a8] sm:$0xff]
          %437 = vst [vmem:[%s137 + $0x4a8] sm:$0xff] %v436
          %v438 = vld [vmem:[%s136 + $0x4b0] sm:$0xff]
          %439 = vst [vmem:[%s137 + $0x4b0] sm:$0xff] %v438
          %v440 = vld [vmem:[%s136 + $0x4b8] sm:$0xff]
          %441 = vst [vmem:[%s137 + $0x4b8] sm:$0xff] %v440
          %v442 = vld [vmem:[%s136 + $0x4c0] sm:$0xff]
          %443 = vst [vmem:[%s137 + $0x4c0] sm:$0xff] %v442
          %v444 = vld [vmem:[%s136 + $0x4c8] sm:$0xff]
          %445 = vst [vmem:[%s137 + $0x4c8] sm:$0xff] %v444
          %v446 = vld [vmem:[%s136 + $0x4d0] sm:$0xff]
          %447 = vst [vmem:[%s137 + $0x4d0] sm:$0xff] %v446
          %v448 = vld [vmem:[%s136 + $0x4d8] sm:$0xff]
          %449 = vst [vmem:[%s137 + $0x4d8] sm:$0xff] %v448
          %v450 = vld [vmem:[%s136 + $0x4e0] sm:$0xff]
          %451 = vst [vmem:[%s137 + $0x4e0] sm:$0xff] %v450
          %v452 = vld [vmem:[%s136 + $0x4e8] sm:$0xff]
          %453 = vst [vmem:[%s137 + $0x4e8] sm:$0xff] %v452
          %v454 = vld [vmem:[%s136 + $0x4f0] sm:$0xff]
          %455 = vst [vmem:[%s137 + $0x4f0] sm:$0xff] %v454
          %v456 = vld [vmem:[%s136 + $0x4f8] sm:$0xff]
          %457 = vst [vmem:[%s137 + $0x4f8] sm:$0xff] %v456
        $region89: #{cnn_discriminator_forward.1} parent=83 // loop_footer
          %s135 = sadd.s32 1, %s131
        $region90: #{cnn_discriminator_forward.1} parent=83 // loop_footer_branch
          %130 = sbr.rel target = $region86
        $region91: #{cnn_discriminator_forward.1} parent=83 // loop_exit
          _
      $region84: #{cnn_discriminator_forward.1} parent=68 // pred_fallthru
        _
      %p458 = pneg %p126
      // Predicated region
      $region92: #{cnn_discriminator_forward.1} parent=68 // pred_check
        _
      $region93: #{cnn_discriminator_forward.1} parent=68 // pred_check_branch
        %460 = sbr.rel (%p126) target = $region95
      $region94: #{cnn_discriminator_forward.1} parent=68 // pred_region
        %s461 = sand.u32 1280, 7
      $region95: #{cnn_discriminator_forward.1} parent=68 // pred_fallthru
        _
    $region69: #{cnn_discriminator_forward.1} parent=1 // pred_fallthru
      _
    // Predicated region
    $region70: #{cnn_discriminator_forward.1} parent=1 // pred_check
      %p110 = pneg %p106
    $region71: #{cnn_discriminator_forward.1} parent=1 // pred_check_branch
      %112 = sbr.rel (%p110) target = $region73
    $region72: #{cnn_discriminator_forward.1} parent=1 // pred_region
      %s113 = sshll.u32 1, 1280
      %s114 = ssub.s32 %s113, 1
      loop: start=0, step=1, limit=1
      $region74: #{cnn_discriminator_forward.1} parent=72 // loop_pre_header
        _
      $region75: #{cnn_discriminator_forward.1} parent=72 // loop_header
        %s116 = sphi 0, %s120
        %p117 = scmp.ge.s32.totalorder %s116, 1
        %s121 = sphi %s11, %s11
        %s122 = sphi [#allocation4], [#allocation4]
      $region76: #{cnn_discriminator_forward.1} parent=72 // loop_header_branch
        %119 = sbr.rel (%p117) target = $region80
      $region77: #{cnn_discriminator_forward.1} parent=72 // loop_body
        %v123 = vld [vmem:[%s121] sm:%s114]
        %124 = vst [vmem:[%s122] sm:%s114] %v123
      $region78: #{cnn_discriminator_forward.1} parent=72 // loop_footer
        %s120 = sadd.s32 1, %s116
      $region79: #{cnn_discriminator_forward.1} parent=72 // loop_footer_branch
        %115 = sbr.rel target = $region75
      $region80: #{cnn_discriminator_forward.1} parent=72 // loop_exit
        _
    $region73: #{cnn_discriminator_forward.1} parent=1 // pred_fallthru
      _
    // Predicated region
    $region96: #{cnn_discriminator_forward.1} parent=1 // pred_check
      _
    $region97: #{cnn_discriminator_forward.1} parent=1 // pred_check_branch
      %464 = sbr.rel (0) target = $region99
    $region98: #{cnn_discriminator_forward.1} parent=1 // pred_region
      %465 = vsyncadd [#allocation9], 20480
    $region99: #{cnn_discriminator_forward.1} parent=1 // pred_fallthru
      _
    %s466 = scalar_lea.sflag [#allocation9], 1
    // Predicated region
    $region100: #{cnn_discriminator_forward.1} parent=1 // pred_check
      _
    $region101: #{cnn_discriminator_forward.1} parent=1 // pred_check_branch
      %468 = sbr.rel target = $region103
    $region102: #{cnn_discriminator_forward.1} parent=1 // pred_region
      %469 = sst [smem:[#allocation22]] [#allocation21]
      %470 = sst [smem:[#allocation23]] [#allocation20]
    $region103: #{cnn_discriminator_forward.1} parent=1 // pred_fallthru
      _
    %472 = shalt.err (0)
    %s474 = sshll.u32 [#allocation6], 4
    %s475 = int_to_ptr.vmem [resolvable:$true] %s474
    %477 = dma.hbm_to_vmem [thread:$0]  %s13, 4096, %s475, %s466
    %s478 = scalar_lea.sflag [#allocation9], 2
    // Predicated region
    $region104: #{cnn_discriminator_forward.1} parent=1 // pred_check
      _
    $region105: #{cnn_discriminator_forward.1} parent=1 // pred_check_branch
      %480 = sbr.rel target = $region107
    $region106: #{cnn_discriminator_forward.1} parent=1 // pred_region
      %481 = sst [smem:[#allocation22]] [#allocation25]
      %482 = sst [smem:[#allocation23]] [#allocation24]
    $region107: #{cnn_discriminator_forward.1} parent=1 // pred_fallthru
      _
    %484 = shalt.err (0)
    %s486 = sshll.u32 [#allocation5], 4
    %s487 = int_to_ptr.vmem [resolvable:$true] %s486
    %489 = dma.hbm_to_vmem [thread:$0]  %s12, 20480, %s487, %s478
    %s490 = scalar_lea.sflag [#allocation9], 3
    // Predicated region
    $region108: #{cnn_discriminator_forward.1} parent=1 // pred_check
      _
    $region109: #{cnn_discriminator_forward.1} parent=1 // pred_check_branch
      %492 = sbr.rel target = $region111
    $region110: #{cnn_discriminator_forward.1} parent=1 // pred_region
      %493 = sst [smem:[#allocation22]] [#allocation27]
      %494 = sst [smem:[#allocation23]] [#allocation26]
    $region111: #{cnn_discriminator_forward.1} parent=1 // pred_fallthru
      _
    %496 = shalt.err (0)
    %s498 = sshll.u32 [#allocation7], 4
    %s499 = int_to_ptr.vmem [resolvable:$true] %s498
    %501 = dma.hbm_to_vmem [thread:$0]  %s14, 4096, %s499, %s490
    %502 = vst [vmem:[#allocation2] sm:$0x11] 0
    %503 = vst [vmem:[#allocation2 + $0x10] sm:$0x22] 0
    %504 = vst [vmem:[#allocation3] sm:$0x11] 0
    %505 = vst [vmem:[#allocation3 + $0x8] sm:$0x22] 0
    %s506 = scalar_lea.vmem [#allocation2], 24
    %507 = vst [vmem:[%s506] sm:$0x11] 0
    %508 = vst [vmem:[%s506 + $0x10] sm:$0x22] 0
    %s509 = scalar_lea.vmem [#allocation3], 16
    %510 = vst [vmem:[%s509] sm:$0x11] 0
    %511 = vst [vmem:[%s509 + $0x8] sm:$0x22] 0
    %s512 = scalar_lea.vmem %s0, 20
    %v513 = vld [vmem:[%s512] sm:$0xf]
    %v514 = vld [vmem:[%s512 + $0x4] sm:$0xf]
    %v515 = vld [vmem:[%s512 + $0x8] sm:$0xf]
    %v516 = vld [vmem:[%s512 + $0xc] sm:$0xf]
    %v517 = vld [vmem:[#allocation11] sm:$0xff]
    %v518 = vld [vmem:[#allocation11 + $0x8] sm:$0xff]
    %v519 = vld [vmem:[#allocation11 + $0x10] sm:$0xff]
    %v520 = vld [vmem:[#allocation11 + $0x18] sm:$0xff]
    %v521 = vld [vmem:[#allocation11 + $0x20] sm:$0xff]
    %v522 = vld [vmem:[#allocation11 + $0x28] sm:$0xff]
    %v523 = vld [vmem:[#allocation11 + $0x30] sm:$0xff]
    %v524 = vld [vmem:[#allocation11 + $0x38] sm:$0xff]
    %v525 = vld [vmem:[#allocation11 + $0x40] sm:$0xff]
    %v526 = vld [vmem:[#allocation11 + $0x48] sm:$0xff]
    %v527 = vld [vmem:[#allocation11 + $0x50] sm:$0xff]
    %v528 = vld [vmem:[#allocation11 + $0x58] sm:$0xff]
    %v529 = vld [vmem:[#allocation11 + $0x60] sm:$0xff]
    %v530 = vld [vmem:[#allocation11 + $0x68] sm:$0xff]
    %v531 = vld [vmem:[#allocation11 + $0x70] sm:$0xff]
    %v532 = vld [vmem:[#allocation11 + $0x78] sm:$0xff]
    %v533 = vld [vmem:[%s0] sm:$0xe]
    %v534 = vld [vmem:[%s0 + $0x4] sm:$0xf]
    %v535 = vld [vmem:[%s0 + $0x8] sm:$0xf]
    %v536 = vld [vmem:[%s0 + $0xc] sm:$0xf]
    %v537 = vld [vmem:[%s0 + $0x10] sm:$0x1]
    %s538 = scalar_lea.vmem [#allocation11], 128
    %v539 = vld [vmem:[%s538] sm:$0xff]
    %v540 = vld [vmem:[%s538 + $0x8] sm:$0xff]
    %v541 = vld [vmem:[%s538 + $0x10] sm:$0xff]
    %v542 = vld [vmem:[%s538 + $0x18] sm:$0xff]
    %v543 = vld [vmem:[%s538 + $0x20] sm:$0xff]
    %v544 = vld [vmem:[%s538 + $0x28] sm:$0xff]
    %v545 = vld [vmem:[%s538 + $0x30] sm:$0xff]
    %v546 = vld [vmem:[%s538 + $0x38] sm:$0xff]
    %v547 = vld [vmem:[%s538 + $0x40] sm:$0xff]
    %v548 = vld [vmem:[%s538 + $0x48] sm:$0xff]
    %v549 = vld [vmem:[%s538 + $0x50] sm:$0xff]
    %v550 = vld [vmem:[%s538 + $0x58] sm:$0xff]
    %v551 = vld [vmem:[%s538 + $0x60] sm:$0xff]
    %v552 = vld [vmem:[%s538 + $0x68] sm:$0xff]
    %v553 = vld [vmem:[%s538 + $0x70] sm:$0xff]
    %v554 = vld [vmem:[%s538 + $0x78] sm:$0xff]
    %v560 = vunpack.c.l.b16 %v533
    %v561 = vunpack.c.l.b16 %v534
    %v562 = vunpack.c.l.b16 %v535
    %v563 = vunpack.c.l.b16 %v536
    %v564 = vunpack.c.l.b16 %v537
    %v565 = vpack.c.b16 %v561, %v560
    %v566 = vpack.c.b16 %v563, %v562
    %v567 = vpack.c.b16 %v564, %v564
    %vm568 = vcmask 1046528
    %v569 = vrot.slane %v565, 1
    %v570 = vrot.slane %v566, 1
    %v571 = vsel %vm568, %v569, %v570
    %v572 = vrot.slane %v567, 1
    %v573 = vsel %vm568, %v570, %v572
    %v592 = vunpack.c.l.b16 %v539
    %v593 = vunpack.c.h.b16 %v539
    %v594 = vunpack.c.l.b16 %v540
    %v595 = vunpack.c.h.b16 %v540
    %v596 = vunpack.c.l.b16 %v541
    %v597 = vunpack.c.h.b16 %v541
    %v598 = vunpack.c.l.b16 %v542
    %v599 = vunpack.c.h.b16 %v542
    %v600 = vunpack.c.l.b16 %v543
    %v601 = vunpack.c.h.b16 %v543
    %v602 = vunpack.c.l.b16 %v544
    %v603 = vunpack.c.h.b16 %v544
    %v604 = vunpack.c.l.b16 %v545
    %v605 = vunpack.c.h.b16 %v545
    %v606 = vunpack.c.l.b16 %v546
    %v607 = vunpack.c.h.b16 %v546
    %v608 = vunpack.c.l.b16 %v547
    %v609 = vunpack.c.h.b16 %v547
    %v610 = vunpack.c.l.b16 %v548
    %v611 = vunpack.c.h.b16 %v548
    %v612 = vunpack.c.l.b16 %v549
    %v613 = vunpack.c.h.b16 %v549
    %v614 = vunpack.c.l.b16 %v550
    %v615 = vunpack.c.h.b16 %v550
    %v616 = vunpack.c.l.b16 %v551
    %v617 = vunpack.c.h.b16 %v551
    %v618 = vunpack.c.l.b16 %v552
    %v619 = vunpack.c.h.b16 %v552
    %v620 = vunpack.c.l.b16 %v553
    %v621 = vunpack.c.h.b16 %v553
    %v622 = vunpack.c.l.b16 %v554
    %v623 = vunpack.c.h.b16 %v554
    %v624 = vpack.c.b16 %v594, %v592
    %v625 = vpack.c.b16 %v595, %v593
    %v626 = vpack.c.b16 %v598, %v596
    %v627 = vpack.c.b16 %v599, %v597
    %v628 = vpack.c.b16 %v602, %v600
    %v629 = vpack.c.b16 %v603, %v601
    %v630 = vpack.c.b16 %v606, %v604
    %v631 = vpack.c.b16 %v607, %v605
    %v632 = vpack.c.b16 %v610, %v608
    %v633 = vpack.c.b16 %v611, %v609
    %v634 = vpack.c.b16 %v614, %v612
    %v635 = vpack.c.b16 %v615, %v613
    %v636 = vpack.c.b16 %v618, %v616
    %v637 = vpack.c.b16 %v619, %v617
    %v638 = vpack.c.b16 %v622, %v620
    %v639 = vpack.c.b16 %v623, %v621
    %656 = vmatprep.subr.bf16.mxu0 %v639
    %657 = vmatpush1.bf16.msra.mxu0 %v638
    %658 = vmatprep.subr.bf16.mxu0 %v637
    %659 = vmatpush1.bf16.msra.mxu0 %v636
    %660 = vmatprep.subr.bf16.mxu0 %v635
    %661 = vmatpush1.bf16.msra.mxu0 %v634
    %662 = vmatprep.subr.bf16.mxu0 %v633
    %663 = vmatpush1.bf16.msra.mxu0 %v632
    %664 = vmatprep.subr.bf16.mxu0 %v631
    %665 = vmatpush1.bf16.msra.mxu0 %v630
    %666 = vmatprep.subr.bf16.mxu0 %v629
    %667 = vmatpush1.bf16.msra.mxu0 %v628
    %668 = vmatprep.subr.bf16.mxu0 %v627
    %669 = vmatpush1.bf16.msra.mxu0 %v626
    %670 = vmatprep.subr.bf16.mxu0 %v625
    %671 = vmatpush1.bf16.msra.mxu0 %v624
    %672 = vmatprep.subr.bf16.mxu0 0
    %673 = vmatpush2.bf16.msra.mxu0 0
    %674 = vmatprep.subr.bf16.mxu0 0
    %675 = vmatpush2.bf16.msra.mxu0 0
    %676 = vmatprep.subr.bf16.mxu0 0
    %677 = vmatpush2.bf16.msra.mxu0 0
    %678 = vmatprep.subr.bf16.mxu0 0
    %679 = vmatpush2.bf16.msra.mxu0 0
    %680 = vmatprep.subr.bf16.mxu0 0
    %681 = vmatpush2.bf16.msra.mxu0 0
    %682 = vmatprep.subr.bf16.mxu0 0
    %683 = vmatpush2.bf16.msra.mxu0 0
    %684 = vmatprep.subr.bf16.mxu0 0
    %685 = vmatpush2.bf16.msra.mxu0 0
    %686 = vmatprep.subr.bf16.mxu0 0
    %687 = vmatpush2.bf16.msra.mxu0 0
    %688 = vmatprep.mubr.bf16.mxu0 0
    %689 = vmatmul.mubr.bf16.gmra.mxu0 %v571
    %v690 = vpop.f32.mrf.mxu0
    %v691 = vadd.f32 0.0, %v690
    %v692 = vpop.f32.mrf.mxu0
    %v693 = vadd.f32 0.0, %v692
    %v694 = vpop.f32.mrf.mxu0
    %v695 = vadd.f32 0.0, %v694
    %v696 = vpop.f32.mrf.mxu0
    %v697 = vadd.f32 0.0, %v696
    %698 = vmatprep.mubr.bf16.mxu0 0
    %699 = vmatmul.mubr.bf16.gmra.mxu0 %v573
    %v700 = vpop.f32.mrf.mxu0
    %v701 = vadd.f32 0.0, %v700
    %v702 = vpop.f32.mrf.mxu0
    %v703 = vadd.f32 0.0, %v702
    %v704 = vpop.f32.mrf.mxu0
    %v705 = vadd.f32 0.0, %v704
    %v706 = vpop.f32.mrf.mxu0
    %v707 = vadd.f32 0.0, %v706
    %708 = vdwg.mxu0
    %v713 = vunpack.c.l.b16 %v513
    %v714 = vunpack.c.l.b16 %v514
    %v715 = vunpack.c.l.b16 %v515
    %v716 = vunpack.c.l.b16 %v516
    %v717 = vpack.c.b16 %v714, %v713
    %v718 = vpack.c.b16 %v716, %v715
    %v737 = vunpack.c.l.b16 %v517
    %v738 = vunpack.c.h.b16 %v517
    %v739 = vunpack.c.l.b16 %v518
    %v740 = vunpack.c.h.b16 %v518
    %v741 = vunpack.c.l.b16 %v519
    %v742 = vunpack.c.h.b16 %v519
    %v743 = vunpack.c.l.b16 %v520
    %v744 = vunpack.c.h.b16 %v520
    %v745 = vunpack.c.l.b16 %v521
    %v746 = vunpack.c.h.b16 %v521
    %v747 = vunpack.c.l.b16 %v522
    %v748 = vunpack.c.h.b16 %v522
    %v749 = vunpack.c.l.b16 %v523
    %v750 = vunpack.c.h.b16 %v523
    %v751 = vunpack.c.l.b16 %v524
    %v752 = vunpack.c.h.b16 %v524
    %v753 = vunpack.c.l.b16 %v525
    %v754 = vunpack.c.h.b16 %v525
    %v755 = vunpack.c.l.b16 %v526
    %v756 = vunpack.c.h.b16 %v526
    %v757 = vunpack.c.l.b16 %v527
    %v758 = vunpack.c.h.b16 %v527
    %v759 = vunpack.c.l.b16 %v528
    %v760 = vunpack.c.h.b16 %v528
    %v761 = vunpack.c.l.b16 %v529
    %v762 = vunpack.c.h.b16 %v529
    %v763 = vunpack.c.l.b16 %v530
    %v764 = vunpack.c.h.b16 %v530
    %v765 = vunpack.c.l.b16 %v531
    %v766 = vunpack.c.h.b16 %v531
    %v767 = vunpack.c.l.b16 %v532
    %v768 = vunpack.c.h.b16 %v532
    %v769 = vpack.c.b16 %v739, %v737
    %v770 = vpack.c.b16 %v740, %v738
    %v771 = vpack.c.b16 %v743, %v741
    %v772 = vpack.c.b16 %v744, %v742
    %v773 = vpack.c.b16 %v747, %v745
    %v774 = vpack.c.b16 %v748, %v746
    %v775 = vpack.c.b16 %v751, %v749
    %v776 = vpack.c.b16 %v752, %v750
    %v777 = vpack.c.b16 %v755, %v753
    %v778 = vpack.c.b16 %v756, %v754
    %v779 = vpack.c.b16 %v759, %v757
    %v780 = vpack.c.b16 %v760, %v758
    %v781 = vpack.c.b16 %v763, %v761
    %v782 = vpack.c.b16 %v764, %v762
    %v783 = vpack.c.b16 %v767, %v765
    %v784 = vpack.c.b16 %v768, %v766
    %801 = vmatprep.subr.bf16.mxu0 %v784
    %802 = vmatpush1.bf16.msra.mxu0 %v783
    %803 = vmatprep.subr.bf16.mxu0 %v782
    %804 = vmatpush1.bf16.msra.mxu0 %v781
    %805 = vmatprep.subr.bf16.mxu0 %v780
    %806 = vmatpush1.bf16.msra.mxu0 %v779
    %807 = vmatprep.subr.bf16.mxu0 %v778
    %808 = vmatpush1.bf16.msra.mxu0 %v777
    %809 = vmatprep.subr.bf16.mxu0 %v776
    %810 = vmatpush1.bf16.msra.mxu0 %v775
    %811 = vmatprep.subr.bf16.mxu0 %v774
    %812 = vmatpush1.bf16.msra.mxu0 %v773
    %813 = vmatprep.subr.bf16.mxu0 %v772
    %814 = vmatpush1.bf16.msra.mxu0 %v771
    %815 = vmatprep.subr.bf16.mxu0 %v770
    %816 = vmatpush1.bf16.msra.mxu0 %v769
    %817 = vmatprep.subr.bf16.mxu0 0
    %818 = vmatpush2.bf16.msra.mxu0 0
    %819 = vmatprep.subr.bf16.mxu0 0
    %820 = vmatpush2.bf16.msra.mxu0 0
    %821 = vmatprep.subr.bf16.mxu0 0
    %822 = vmatpush2.bf16.msra.mxu0 0
    %823 = vmatprep.subr.bf16.mxu0 0
    %824 = vmatpush2.bf16.msra.mxu0 0
    %825 = vmatprep.subr.bf16.mxu0 0
    %826 = vmatpush2.bf16.msra.mxu0 0
    %827 = vmatprep.subr.bf16.mxu0 0
    %828 = vmatpush2.bf16.msra.mxu0 0
    %829 = vmatprep.subr.bf16.mxu0 0
    %830 = vmatpush2.bf16.msra.mxu0 0
    %831 = vmatprep.subr.bf16.mxu0 0
    %832 = vmatpush2.bf16.msra.mxu0 0
    %833 = vmatprep.mubr.bf16.mxu0 0
    %834 = vmatmul.mubr.bf16.gmra.mxu0 %v717
    %v835 = vpop.f32.mrf.mxu0
    %v836 = vadd.f32 %v691, %v835
    %v837 = vpop.f32.mrf.mxu0
    %v838 = vadd.f32 %v693, %v837
    %v839 = vpop.f32.mrf.mxu0
    %v840 = vadd.f32 %v695, %v839
    %v841 = vpop.f32.mrf.mxu0
    %v842 = vadd.f32 %v697, %v841
    %843 = vmatprep.mubr.bf16.mxu0 0
    %844 = vmatmul.mubr.bf16.gmra.mxu0 %v718
    %v845 = vpop.f32.mrf.mxu0
    %v846 = vadd.f32 %v701, %v845
    %v847 = vpop.f32.mrf.mxu0
    %v848 = vadd.f32 %v703, %v847
    %v849 = vpop.f32.mrf.mxu0
    %v850 = vadd.f32 %v705, %v849
    %v851 = vpop.f32.mrf.mxu0
    %v852 = vadd.f32 %v707, %v851
    %853 = vdwg.mxu0
    %v854 = vld [vmem:[%s512] sm:$0xe]
    %v855 = vld [vmem:[%s512 + $0x4] sm:$0xf]
    %v856 = vld [vmem:[%s512 + $0x8] sm:$0xf]
    %v857 = vld [vmem:[%s512 + $0xc] sm:$0xf]
    %v858 = vld [vmem:[%s512 + $0x10] sm:$0x1]
    %s859 = scalar_lea.vmem [#allocation11], 256
    %v860 = vld [vmem:[%s859] sm:$0xff]
    %v861 = vld [vmem:[%s859 + $0x8] sm:$0xff]
    %v862 = vld [vmem:[%s859 + $0x10] sm:$0xff]
    %v863 = vld [vmem:[%s859 + $0x18] sm:$0xff]
    %v864 = vld [vmem:[%s859 + $0x20] sm:$0xff]
    %v865 = vld [vmem:[%s859 + $0x28] sm:$0xff]
    %v866 = vld [vmem:[%s859 + $0x30] sm:$0xff]
    %v867 = vld [vmem:[%s859 + $0x38] sm:$0xff]
    %v868 = vld [vmem:[%s859 + $0x40] sm:$0xff]
    %v869 = vld [vmem:[%s859 + $0x48] sm:$0xff]
    %v870 = vld [vmem:[%s859 + $0x50] sm:$0xff]
    %v871 = vld [vmem:[%s859 + $0x58] sm:$0xff]
    %v872 = vld [vmem:[%s859 + $0x60] sm:$0xff]
    %v873 = vld [vmem:[%s859 + $0x68] sm:$0xff]
    %v874 = vld [vmem:[%s859 + $0x70] sm:$0xff]
    %v875 = vld [vmem:[%s859 + $0x78] sm:$0xff]
    %v881 = vunpack.c.l.b16 %v854
    %v882 = vunpack.c.l.b16 %v855
    %v883 = vunpack.c.l.b16 %v856
    %v884 = vunpack.c.l.b16 %v857
    %v885 = vunpack.c.l.b16 %v858
    %v886 = vpack.c.b16 %v882, %v881
    %v887 = vpack.c.b16 %v884, %v883
    %v888 = vpack.c.b16 %v885, %v885
    %v889 = vrot.slane %v886, 1
    %v890 = vrot.slane %v887, 1
    %v891 = vsel %vm568, %v889, %v890
    %v892 = vrot.slane %v888, 1
    %v893 = vsel %vm568, %v890, %v892
    %v912 = vunpack.c.l.b16 %v860
    %v913 = vunpack.c.h.b16 %v860
    %v914 = vunpack.c.l.b16 %v861
    %v915 = vunpack.c.h.b16 %v861
    %v916 = vunpack.c.l.b16 %v862
    %v917 = vunpack.c.h.b16 %v862
    %v918 = vunpack.c.l.b16 %v863
    %v919 = vunpack.c.h.b16 %v863
    %v920 = vunpack.c.l.b16 %v864
    %v921 = vunpack.c.h.b16 %v864
    %v922 = vunpack.c.l.b16 %v865
    %v923 = vunpack.c.h.b16 %v865
    %v924 = vunpack.c.l.b16 %v866
    %v925 = vunpack.c.h.b16 %v866
    %v926 = vunpack.c.l.b16 %v867
    %v927 = vunpack.c.h.b16 %v867
    %v928 = vunpack.c.l.b16 %v868
    %v929 = vunpack.c.h.b16 %v868
    %v930 = vunpack.c.l.b16 %v869
    %v931 = vunpack.c.h.b16 %v869
    %v932 = vunpack.c.l.b16 %v870
    %v933 = vunpack.c.h.b16 %v870
    %v934 = vunpack.c.l.b16 %v871
    %v935 = vunpack.c.h.b16 %v871
    %v936 = vunpack.c.l.b16 %v872
    %v937 = vunpack.c.h.b16 %v872
    %v938 = vunpack.c.l.b16 %v873
    %v939 = vunpack.c.h.b16 %v873
    %v940 = vunpack.c.l.b16 %v874
    %v941 = vunpack.c.h.b16 %v874
    %v942 = vunpack.c.l.b16 %v875
    %v943 = vunpack.c.h.b16 %v875
    %v944 = vpack.c.b16 %v914, %v912
    %v945 = vpack.c.b16 %v915, %v913
    %v946 = vpack.c.b16 %v918, %v916
    %v947 = vpack.c.b16 %v919, %v917
    %v948 = vpack.c.b16 %v922, %v920
    %v949 = vpack.c.b16 %v923, %v921
    %v950 = vpack.c.b16 %v926, %v924
    %v951 = vpack.c.b16 %v927, %v925
    %v952 = vpack.c.b16 %v930, %v928
    %v953 = vpack.c.b16 %v931, %v929
    %v954 = vpack.c.b16 %v934, %v932
    %v955 = vpack.c.b16 %v935, %v933
    %v956 = vpack.c.b16 %v938, %v936
    %v957 = vpack.c.b16 %v939, %v937
    %v958 = vpack.c.b16 %v942, %v940
    %v959 = vpack.c.b16 %v943, %v941
    %976 = vmatprep.subr.bf16.mxu0 %v959
    %977 = vmatpush1.bf16.msra.mxu0 %v958
    %978 = vmatprep.subr.bf16.mxu0 %v957
    %979 = vmatpush1.bf16.msra.mxu0 %v956
    %980 = vmatprep.subr.bf16.mxu0 %v955
    %981 = vmatpush1.bf16.msra.mxu0 %v954
    %982 = vmatprep.subr.bf16.mxu0 %v953
    %983 = vmatpush1.bf16.msra.mxu0 %v952
    %984 = vmatprep.subr.bf16.mxu0 %v951
    %985 = vmatpush1.bf16.msra.mxu0 %v950
    %986 = vmatprep.subr.bf16.mxu0 %v949
    %987 = vmatpush1.bf16.msra.mxu0 %v948
    %988 = vmatprep.subr.bf16.mxu0 %v947
    %989 = vmatpush1.bf16.msra.mxu0 %v946
    %990 = vmatprep.subr.bf16.mxu0 %v945
    %991 = vmatpush1.bf16.msra.mxu0 %v944
    %992 = vmatprep.subr.bf16.mxu0 0
    %993 = vmatpush2.bf16.msra.mxu0 0
    %994 = vmatprep.subr.bf16.mxu0 0
    %995 = vmatpush2.bf16.msra.mxu0 0
    %996 = vmatprep.subr.bf16.mxu0 0
    %997 = vmatpush2.bf16.msra.mxu0 0
    %998 = vmatprep.subr.bf16.mxu0 0
    %999 = vmatpush2.bf16.msra.mxu0 0
    %1000 = vmatprep.subr.bf16.mxu0 0
    %1001 = vmatpush2.bf16.msra.mxu0 0
    %1002 = vmatprep.subr.bf16.mxu0 0
    %1003 = vmatpush2.bf16.msra.mxu0 0
    %1004 = vmatprep.subr.bf16.mxu0 0
    %1005 = vmatpush2.bf16.msra.mxu0 0
    %1006 = vmatprep.subr.bf16.mxu0 0
    %1007 = vmatpush2.bf16.msra.mxu0 0
    %1008 = vmatprep.mubr.bf16.mxu0 0
    %1009 = vmatmul.mubr.bf16.gmra.mxu0 %v891
    %v1010 = vpop.f32.mrf.mxu0
    %v1011 = vadd.f32 0.0, %v1010
    %v1012 = vpop.f32.mrf.mxu0
    %v1013 = vadd.f32 0.0, %v1012
    %v1014 = vpop.f32.mrf.mxu0
    %v1015 = vadd.f32 0.0, %v1014
    %v1016 = vpop.f32.mrf.mxu0
    %v1017 = vadd.f32 0.0, %v1016
    %1018 = vmatprep.mubr.bf16.mxu0 0
    %1019 = vmatmul.mubr.bf16.gmra.mxu0 %v893
    %v1020 = vpop.f32.mrf.mxu0
    %v1021 = vadd.f32 0.0, %v1020
    %v1022 = vpop.f32.mrf.mxu0
    %v1023 = vadd.f32 0.0, %v1022
    %v1024 = vpop.f32.mrf.mxu0
    %v1025 = vadd.f32 0.0, %v1024
    %v1026 = vpop.f32.mrf.mxu0
    %v1027 = vadd.f32 0.0, %v1026
    %1028 = vdwg.mxu0
    %v1029 = vadd.f32 %v836, %v1011
    %v1030 = vadd.f32 %v838, %v1013
    %v1031 = vadd.f32 %v840, %v1015
    %v1032 = vadd.f32 %v842, %v1017
    %v1033 = vadd.f32 %v846, %v1021
    %v1034 = vadd.f32 %v848, %v1023
    %v1035 = vadd.f32 %v850, %v1025
    %v1036 = vadd.f32 %v852, %v1027
    %v1037 = vadd.f32 %v1029, %v1031
    %v1038 = vadd.f32 %v1037, %v1033
    %v1039 = vadd.f32 %v1038, %v1035
    %v1040 = vrot.slane %v1039, 4
    %v1041 = vadd.f32 %v1039, %v1040
    %v1042 = vrot.slane %v1041, 2
    %v1043 = vadd.f32 %v1041, %v1042
    %v1044 = vrot.slane %v1043, 1
    %v1045 = vadd.f32 %v1043, %v1044
    %v1046 = vadd.f32 %v1030, %v1032
    %v1047 = vadd.f32 %v1046, %v1034
    %v1048 = vadd.f32 %v1047, %v1036
    %v1049 = vrot.slane %v1048, 4
    %v1050 = vadd.f32 %v1048, %v1049
    %v1051 = vrot.slane %v1050, 2
    %v1052 = vadd.f32 %v1050, %v1051
    %v1053 = vrot.slane %v1052, 1
    %v1054 = vadd.f32 %v1052, %v1053
    %v1057 = vcombine.low %v1045, %v1054
    %v1059 = vunpack.c.l.s4 1966171168
    %v1060 = vunpack.c.0.s8 %v1059
    %v1061 = vlaneseq
    %v1062 = vshrl.u32 %v1061, 7
    %v1063 = vsub.s32 %v1060, %v1062
    %v1064 = vrot.slane %v1057, %v1063
    %v1066 = vunpack.c.l.s4 1966171168
    %v1067 = vunpack.c.0.s8 %v1066
    %v1068 = vlaneseq
    %v1069 = vshrl.u32 %v1068, 7
    %v1070 = vsub.s32 %v1067, %v1069
    %v1071 = vrot.slane %v1064, %v1070
    %v1073 = vlaneseq
    %vm1074 = vcmp.ge.s32.totalorder %v1073, 0
    %vm1075 = vcmp.lt.s32.totalorder %v1073, 256
    %vm1076 = vmand %vm1074, %vm1075
    %1077 = vst.msk [vmem:[#allocation8] ss:$2 sm:$0x3] %vm1076, %v1071
    %v1078 = vmul.f32 %v1029, %v1029
    %v1079 = vmul.f32 %v1030, %v1030
    %v1080 = vmul.f32 %v1031, %v1031
    %v1081 = vmul.f32 %v1032, %v1032
    %v1082 = vmul.f32 %v1033, %v1033
    %v1083 = vmul.f32 %v1034, %v1034
    %v1084 = vmul.f32 %v1035, %v1035
    %v1085 = vmul.f32 %v1036, %v1036
    %v1086 = vadd.f32 %v1078, %v1080
    %v1087 = vadd.f32 %v1086, %v1082
    %v1088 = vadd.f32 %v1087, %v1084
    %v1089 = vrot.slane %v1088, 4
    %v1090 = vadd.f32 %v1088, %v1089
    %v1091 = vrot.slane %v1090, 2
    %v1092 = vadd.f32 %v1090, %v1091
    %v1093 = vrot.slane %v1092, 1
    %v1094 = vadd.f32 %v1092, %v1093
    %v1095 = vadd.f32 %v1079, %v1081
    %v1096 = vadd.f32 %v1095, %v1083
    %v1097 = vadd.f32 %v1096, %v1085
    %v1098 = vrot.slane %v1097, 4
    %v1099 = vadd.f32 %v1097, %v1098
    %v1100 = vrot.slane %v1099, 2
    %v1101 = vadd.f32 %v1099, %v1100
    %v1102 = vrot.slane %v1101, 1
    %v1103 = vadd.f32 %v1101, %v1102
    %v1106 = vcombine.low %v1094, %v1103
    %v1108 = vunpack.c.l.s4 1966171168
    %v1109 = vunpack.c.0.s8 %v1108
    %v1110 = vlaneseq
    %v1111 = vshrl.u32 %v1110, 7
    %v1112 = vsub.s32 %v1109, %v1111
    %v1113 = vrot.slane %v1106, %v1112
    %v1115 = vunpack.c.l.s4 1966171168
    %v1116 = vunpack.c.0.s8 %v1115
    %v1117 = vlaneseq
    %v1118 = vshrl.u32 %v1117, 7
    %v1119 = vsub.s32 %v1116, %v1118
    %v1120 = vrot.slane %v1113, %v1119
    %s1122 = scalar_lea.vmem [#allocation8], 1
    %1123 = vst.msk [vmem:[%s1122] ss:$2 sm:$0x3] %vm1076, %v1120
    %v1124 = vld [vmem:[%s2] sm:$0xff]
    %v1125 = vld [vmem:[%s2 + $0x8] sm:$0xff]
    %v1126 = vld [vmem:[%s2 + $0x10] sm:$0xff]
    %v1127 = vld [vmem:[%s2 + $0x18] sm:$0xff]
    %v1128 = vld [vmem:[%s2 + $0x20] sm:$0xff]
    %v1129 = vld [vmem:[%s2 + $0x28] sm:$0xff]
    %v1130 = vld [vmem:[%s2 + $0x30] sm:$0xff]
    %v1131 = vld [vmem:[%s2 + $0x38] sm:$0xff]
    %v1132 = vld [vmem:[%s2 + $0x40] sm:$0xff]
    %v1133 = vld [vmem:[%s2 + $0x48] sm:$0xff]
    %v1134 = vld [vmem:[%s2 + $0x50] sm:$0xff]
    %v1135 = vld [vmem:[%s2 + $0x58] sm:$0xff]
    %v1136 = vld [vmem:[%s2 + $0x60] sm:$0xff]
    %v1137 = vld [vmem:[%s2 + $0x68] sm:$0xff]
    %v1138 = vld [vmem:[%s2 + $0x70] sm:$0xff]
    %v1139 = vld [vmem:[%s2 + $0x78] sm:$0xff]
    %v1140 = vld [vmem:[%s2 + $0x80] sm:$0xff]
    %v1141 = vld [vmem:[%s2 + $0x88] sm:$0xff]
    %v1142 = vld [vmem:[%s2 + $0x90] sm:$0xff]
    %v1143 = vld [vmem:[%s2 + $0x98] sm:$0xff]
    %v1144 = vld [vmem:[%s2 + $0xa0] sm:$0xff]
    %v1145 = vld [vmem:[%s2 + $0xa8] sm:$0xff]
    %v1146 = vld [vmem:[%s2 + $0xb0] sm:$0xff]
    %v1147 = vld [vmem:[%s2 + $0xb8] sm:$0xff]
    %v1148 = vld [vmem:[%s2 + $0xc0] sm:$0xff]
    %v1149 = vld [vmem:[%s2 + $0xc8] sm:$0xff]
    %v1150 = vld [vmem:[%s2 + $0xd0] sm:$0xff]
    %v1151 = vld [vmem:[%s2 + $0xd8] sm:$0xff]
    %v1152 = vld [vmem:[%s2 + $0xe0] sm:$0xff]
    %v1153 = vld [vmem:[%s2 + $0xe8] sm:$0xff]
    %v1154 = vld [vmem:[%s2 + $0xf0] sm:$0xff]
    %v1155 = vld [vmem:[%s2 + $0xf8] sm:$0xff]
    %v1156 = vunpack.c.l.bf16 %v1124
    %v1157 = vunpack.c.h.bf16 %v1124
    %v1158 = vunpack.c.l.bf16 %v1125
    %v1159 = vunpack.c.h.bf16 %v1125
    %v1160 = vunpack.c.l.bf16 %v1126
    %v1161 = vunpack.c.h.bf16 %v1126
    %v1162 = vunpack.c.l.bf16 %v1127
    %v1163 = vunpack.c.h.bf16 %v1127
    %v1164 = vunpack.c.l.bf16 %v1128
    %v1165 = vunpack.c.h.bf16 %v1128
    %v1166 = vunpack.c.l.bf16 %v1129
    %v1167 = vunpack.c.h.bf16 %v1129
    %v1168 = vunpack.c.l.bf16 %v1130
    %v1169 = vunpack.c.h.bf16 %v1130
    %v1170 = vunpack.c.l.bf16 %v1131
    %v1171 = vunpack.c.h.bf16 %v1131
    %v1172 = vunpack.c.l.bf16 %v1132
    %v1173 = vunpack.c.h.bf16 %v1132
    %v1174 = vunpack.c.l.bf16 %v1133
    %v1175 = vunpack.c.h.bf16 %v1133
    %v1176 = vunpack.c.l.bf16 %v1134
    %v1177 = vunpack.c.h.bf16 %v1134
    %v1178 = vunpack.c.l.bf16 %v1135
    %v1179 = vunpack.c.h.bf16 %v1135
    %v1180 = vunpack.c.l.bf16 %v1136
    %v1181 = vunpack.c.h.bf16 %v1136
    %v1182 = vunpack.c.l.bf16 %v1137
    %v1183 = vunpack.c.h.bf16 %v1137
    %v1184 = vunpack.c.l.bf16 %v1138
    %v1185 = vunpack.c.h.bf16 %v1138
    %v1186 = vunpack.c.l.bf16 %v1139
    %v1187 = vunpack.c.h.bf16 %v1139
    %v1188 = vunpack.c.l.bf16 %v1140
    %v1189 = vunpack.c.h.bf16 %v1140
    %v1190 = vunpack.c.l.bf16 %v1141
    %v1191 = vunpack.c.h.bf16 %v1141
    %v1192 = vunpack.c.l.bf16 %v1142
    %v1193 = vunpack.c.h.bf16 %v1142
    %v1194 = vunpack.c.l.bf16 %v1143
    %v1195 = vunpack.c.h.bf16 %v1143
    %v1196 = vunpack.c.l.bf16 %v1144
    %v1197 = vunpack.c.h.bf16 %v1144
    %v1198 = vunpack.c.l.bf16 %v1145
    %v1199 = vunpack.c.h.bf16 %v1145
    %v1200 = vunpack.c.l.bf16 %v1146
    %v1201 = vunpack.c.h.bf16 %v1146
    %v1202 = vunpack.c.l.bf16 %v1147
    %v1203 = vunpack.c.h.bf16 %v1147
    %v1204 = vunpack.c.l.bf16 %v1148
    %v1205 = vunpack.c.h.bf16 %v1148
    %v1206 = vunpack.c.l.bf16 %v1149
    %v1207 = vunpack.c.h.bf16 %v1149
    %v1208 = vunpack.c.l.bf16 %v1150
    %v1209 = vunpack.c.h.bf16 %v1150
    %v1210 = vunpack.c.l.bf16 %v1151
    %v1211 = vunpack.c.h.bf16 %v1151
    %v1212 = vunpack.c.l.bf16 %v1152
    %v1213 = vunpack.c.h.bf16 %v1152
    %v1214 = vunpack.c.l.bf16 %v1153
    %v1215 = vunpack.c.h.bf16 %v1153
    %v1216 = vunpack.c.l.bf16 %v1154
    %v1217 = vunpack.c.h.bf16 %v1154
    %v1218 = vunpack.c.l.bf16 %v1155
    %v1219 = vunpack.c.h.bf16 %v1155
    %v1220 = vld [vmem:[#allocation8] sm:$0xf]
    %v1223 = vunpack.c.l.s4 1983009808
    %v1224 = vunpack.c.0.s8 %v1223
    %v1225 = vlaneseq
    %v1226 = vshrl.u32 %v1225, 7
    %v1227 = vsub.s32 %v1224, %v1226
    %v1228 = vrot.slane %v1220, %v1227
    %v1229 = vcombine.high %v1228, %v1228
    %1232 = vmatprep.subr.mxu0 %v1187
    %1233 = vmatpush1.msra.mxu0 %v1186
    %1234 = vmatprep.subr.mxu0 %v1185
    %1235 = vmatpush1.msra.mxu0 %v1184
    %1236 = vmatprep.subr.mxu0 %v1183
    %1237 = vmatpush1.msra.mxu0 %v1182
    %1238 = vmatprep.subr.mxu0 %v1181
    %1239 = vmatpush1.msra.mxu0 %v1180
    %1240 = vmatprep.subr.mxu0 %v1179
    %1241 = vmatpush1.msra.mxu0 %v1178
    %1242 = vmatprep.subr.mxu0 %v1177
    %1243 = vmatpush1.msra.mxu0 %v1176
    %1244 = vmatprep.subr.mxu0 %v1175
    %1245 = vmatpush1.msra.mxu0 %v1174
    %1246 = vmatprep.subr.mxu0 %v1173
    %1247 = vmatpush1.msra.mxu0 %v1172
    %1248 = vmatprep.subr.mxu0 %v1171
    %1249 = vmatpush1.msra.mxu0 %v1170
    %1250 = vmatprep.subr.mxu0 %v1169
    %1251 = vmatpush1.msra.mxu0 %v1168
    %1252 = vmatprep.subr.mxu0 %v1167
    %1253 = vmatpush1.msra.mxu0 %v1166
    %1254 = vmatprep.subr.mxu0 %v1165
    %1255 = vmatpush1.msra.mxu0 %v1164
    %1256 = vmatprep.subr.mxu0 %v1163
    %1257 = vmatpush1.msra.mxu0 %v1162
    %1258 = vmatprep.subr.mxu0 %v1161
    %1259 = vmatpush1.msra.mxu0 %v1160
    %1260 = vmatprep.subr.mxu0 %v1159
    %1261 = vmatpush1.msra.mxu0 %v1158
    %1262 = vmatprep.subr.mxu0 %v1157
    %1263 = vmatpush1.msra.mxu0 %v1156
    %1264 = vmatprep.subr.mxu0 %v1219
    %1265 = vmatpush2.msra.mxu0 %v1218
    %1266 = vmatprep.subr.mxu0 %v1217
    %1267 = vmatpush2.msra.mxu0 %v1216
    %1268 = vmatprep.subr.mxu0 %v1215
    %1269 = vmatpush2.msra.mxu0 %v1214
    %1270 = vmatprep.subr.mxu0 %v1213
    %1271 = vmatpush2.msra.mxu0 %v1212
    %1272 = vmatprep.subr.mxu0 %v1211
    %1273 = vmatpush2.msra.mxu0 %v1210
    %1274 = vmatprep.subr.mxu0 %v1209
    %1275 = vmatpush2.msra.mxu0 %v1208
    %1276 = vmatprep.subr.mxu0 %v1207
    %1277 = vmatpush2.msra.mxu0 %v1206
    %1278 = vmatprep.subr.mxu0 %v1205
    %1279 = vmatpush2.msra.mxu0 %v1204
    %1280 = vmatprep.subr.mxu0 %v1203
    %1281 = vmatpush2.msra.mxu0 %v1202
    %1282 = vmatprep.subr.mxu0 %v1201
    %1283 = vmatpush2.msra.mxu0 %v1200
    %1284 = vmatprep.subr.mxu0 %v1199
    %1285 = vmatpush2.msra.mxu0 %v1198
    %1286 = vmatprep.subr.mxu0 %v1197
    %1287 = vmatpush2.msra.mxu0 %v1196
    %1288 = vmatprep.subr.mxu0 %v1195
    %1289 = vmatpush2.msra.mxu0 %v1194
    %1290 = vmatprep.subr.mxu0 %v1193
    %1291 = vmatpush2.msra.mxu0 %v1192
    %1292 = vmatprep.subr.mxu0 %v1191
    %1293 = vmatpush2.msra.mxu0 %v1190
    %1294 = vmatprep.subr.mxu0 %v1189
    %1295 = vmatpush2.msra.mxu0 %v1188
    %1296 = vmatprep.mubr.f32.mxu0 %v1229
    %1297 = vmatmul.mubr.f32.gmra.mxu0 %v1228
    %v1298 = vpop.f32.mrf.mxu0
    %v1299 = vadd.f32 0.0, %v1298
    %v1300 = vpop.f32.mrf.mxu0
    %v1301 = vadd.f32 0.0, %v1300
    %1302 = vdwg.mxu0
    %v1303 = vmul.f32 %v1299, 0.001953125
    %v1304 = vmul.f32 %v1301, 0.001953125
    %v1305 = vmul.f32 %v1303, %v1303
    %v1306 = vmul.f32 %v1304, %v1304
    %v1309 = vrot.slane %v1305, 7
    %v1310 = vrot.slane %v1306, 7
    %v1313 = vsub.f32 %v1303, %v1309
    %v1314 = vsub.f32 %v1304, %v1310
    %v1315 = vmax.f32 %v1313, 0.0
    %v1316 = vmax.f32 %v1314, 0.0
    %v1317 = vadd.f32 %v1315, 1e-05
    %v1318 = vadd.f32 %v1316, 1e-05
    %v1319 = vrsqrt.pop %v1317
    %v1320 = vrsqrt.pop %v1318
    %v1321 = vld [vmem:[%s3] sm:$0x3]
    %v1323 = vlaneseq
    %v1324 = vshrl.u32 %v1323, 7
    %v1325 = vsub.s32 0, %v1324
    %v1326 = vrot.slane %v1321, %v1325
    %v1327 = vlaneseq
    %v1328 = vshrl.u32 %v1327, 7
    %v1329 = vsub.s32 1, %v1328
    %v1330 = vrot.slane %v1321, %v1329
    %v1333 = vmul.f32 %v1319, %v1326
    %v1334 = vmul.f32 %v1320, %v1330
    %v1335 = vlaneseq
    %v1336 = vshrl.u32 %v1335, 7
    %v1337 = vsub.s32 0, %v1336
    %v1338 = vrot.slane %v1303, %v1337
    %v1339 = vlaneseq
    %v1340 = vshrl.u32 %v1339, 7
    %v1341 = vsub.s32 0, %v1340
    %v1342 = vrot.slane %v1304, %v1341
    %v1343 = vsub.f32 %v1029, %v1338
    %v1344 = vsub.f32 %v1030, %v1342
    %v1345 = vsub.f32 %v1031, %v1338
    %v1346 = vsub.f32 %v1032, %v1342
    %v1347 = vsub.f32 %v1033, %v1338
    %v1348 = vsub.f32 %v1034, %v1342
    %v1349 = vsub.f32 %v1035, %v1338
    %v1350 = vsub.f32 %v1036, %v1342
    %v1351 = vlaneseq
    %v1352 = vshrl.u32 %v1351, 7
    %v1353 = vsub.s32 1, %v1352
    %v1354 = vrot.slane %v1333, %v1353
    %v1355 = vlaneseq
    %v1356 = vshrl.u32 %v1355, 7
    %v1357 = vsub.s32 1, %v1356
    %v1358 = vrot.slane %v1334, %v1357
    %v1359 = vmul.f32 %v1343, %v1354
    %v1360 = vmul.f32 %v1344, %v1358
    %v1361 = vmul.f32 %v1345, %v1354
    %v1362 = vmul.f32 %v1346, %v1358
    %v1363 = vmul.f32 %v1347, %v1354
    %v1364 = vmul.f32 %v1348, %v1358
    %v1365 = vmul.f32 %v1349, %v1354
    %v1366 = vmul.f32 %v1350, %v1358
    %v1367 = vld [vmem:[%s4] sm:$0x3]
    %v1369 = vlaneseq
    %v1370 = vshrl.u32 %v1369, 7
    %v1371 = vsub.s32 0, %v1370
    %v1372 = vrot.slane %v1367, %v1371
    %v1373 = vlaneseq
    %v1374 = vshrl.u32 %v1373, 7
    %v1375 = vsub.s32 1, %v1374
    %v1376 = vrot.slane %v1367, %v1375
    %v1379 = vadd.f32 %v1359, %v1372
    %v1380 = vadd.f32 %v1360, %v1376
    %v1381 = vadd.f32 %v1361, %v1372
    %v1382 = vadd.f32 %v1362, %v1376
    %v1383 = vadd.f32 %v1363, %v1372
    %v1384 = vadd.f32 %v1364, %v1376
    %v1385 = vadd.f32 %v1365, %v1372
    %v1386 = vadd.f32 %v1366, %v1376
    %vm1387 = vcmp.ge.f32.partialorder %v1379, 0.0
    %vm1388 = vcmp.ge.f32.partialorder %v1380, 0.0
    %vm1389 = vcmp.ge.f32.partialorder %v1381, 0.0
    %vm1390 = vcmp.ge.f32.partialorder %v1382, 0.0
    %vm1391 = vcmp.ge.f32.partialorder %v1383, 0.0
    %vm1392 = vcmp.ge.f32.partialorder %v1384, 0.0
    %vm1393 = vcmp.ge.f32.partialorder %v1385, 0.0
    %vm1394 = vcmp.ge.f32.partialorder %v1386, 0.0
    %v1395 = vmul.f32 %v1379, 0.2
    %v1396 = vmul.f32 %v1380, 0.2
    %v1397 = vmul.f32 %v1381, 0.2
    %v1398 = vmul.f32 %v1382, 0.2
    %v1399 = vmul.f32 %v1383, 0.2
    %v1400 = vmul.f32 %v1384, 0.2
    %v1401 = vmul.f32 %v1385, 0.2
    %v1402 = vmul.f32 %v1386, 0.2
    %v1403 = vsel %vm1387, %v1379, %v1395
    %v1404 = vsel %vm1388, %v1380, %v1396
    %v1405 = vsel %vm1389, %v1381, %v1397
    %v1406 = vsel %vm1390, %v1382, %v1398
    %v1407 = vsel %vm1391, %v1383, %v1399
    %v1408 = vsel %vm1392, %v1384, %v1400
    %v1409 = vsel %vm1393, %v1385, %v1401
    %v1410 = vsel %vm1394, %v1386, %v1402
    %v1411 = vpack.c.bf16 %v1405, %v1403
    %v1412 = vpack.c.bf16 %v1406, %v1404
    %v1413 = vpack.c.bf16 %v1409, %v1407
    %v1414 = vpack.c.bf16 %v1410, %v1408
    %v1417 = vunpack.c.l.b16 %v1411
    %v1418 = vunpack.c.l.b16 %v1412
    %v1419 = vpack.c.b16 %v1418, %v1417
    %v1420 = vrot.slane %v1419, 7
    %1422 = vst [vmem:[#allocation2] sm:$0x22] %v1420
    %1424 = vst [vmem:[%s506] sm:$0x22] %v1419
    %1425 = vst [vmem:[#allocation2] sm:$0x44] %v1419
    %v1426 = vrot.slane %v1419, 5
    %v1427 = vrot.slane %v1426, 4
    %1429 = vst [vmem:[%s506] sm:$0x44] %v1427
    %v1430 = vunpack.c.h.b16 %v1411
    %v1431 = vunpack.c.h.b16 %v1412
    %v1432 = vpack.c.b16 %v1431, %v1430
    %v1433 = vrot.slane %v1432, 5
    %1435 = vst [vmem:[#allocation2] sm:$0x88] %v1433
    %v1436 = vrot.slane %v1432, 6
    %1438 = vst [vmem:[%s506] sm:$0x88] %v1436
    %v1439 = vrot.slane %v1436, 4
    %1441 = vst [vmem:[#allocation2 + $0x8] sm:$0x11] %v1439
    %v1442 = vrot.slane %v1432, 7
    %v1443 = vrot.slane %v1442, 4
    %1445 = vst [vmem:[%s506 + $0x8] sm:$0x11] %v1443
    %v1448 = vunpack.c.l.b16 %v1413
    %v1449 = vunpack.c.l.b16 %v1414
    %v1450 = vpack.c.b16 %v1449, %v1448
    %v1451 = vrot.slane %v1450, 7
    %1453 = vst [vmem:[#allocation2 + $0x8] sm:$0x22] %v1451
    %1455 = vst [vmem:[%s506 + $0x8] sm:$0x22] %v1450
    %1456 = vst [vmem:[#allocation2 + $0x8] sm:$0x44] %v1450
    %v1457 = vrot.slane %v1450, 5
    %v1458 = vrot.slane %v1457, 4
    %1460 = vst [vmem:[%s506 + $0x8] sm:$0x44] %v1458
    %v1461 = vunpack.c.h.b16 %v1413
    %v1462 = vunpack.c.h.b16 %v1414
    %v1463 = vpack.c.b16 %v1462, %v1461
    %v1464 = vrot.slane %v1463, 5
    %1466 = vst [vmem:[#allocation2 + $0x8] sm:$0x88] %v1464
    %v1467 = vrot.slane %v1463, 6
    %1469 = vst [vmem:[%s506 + $0x8] sm:$0x88] %v1467
    %v1470 = vrot.slane %v1467, 4
    %1472 = vst [vmem:[#allocation2 + $0x10] sm:$0x11] %v1470
    %v1473 = vrot.slane %v1463, 7
    %v1474 = vrot.slane %v1473, 4
    %1476 = vst [vmem:[%s506 + $0x10] sm:$0x11] %v1474
    %s1477 = smul.u32 4, 5
    %s1478 = smul.u32 %s1477, 32
    %s1479 = smul.u32 %s1478, 2
    %s1480 = sshll.u32 %s1479, 4
    %1481 = dma.done [#allocation9], %s1480
    %s1482 = smul.u32 4, 32
    %s1483 = smul.u32 %s1482, 2
    %s1484 = sshll.u32 %s1483, 4
    %1485 = dma.done %s466, %s1484
    %v1486 = vld [vmem:[#allocation2] sm:$0xff]
    %v1487 = vld [vmem:[#allocation2 + $0x8] sm:$0xff]
    %v1488 = vld [vmem:[#allocation4] sm:$0xff]
    %v1489 = vld [vmem:[#allocation4 + $0x8] sm:$0xff]
    %v1490 = vld [vmem:[#allocation4 + $0x10] sm:$0xff]
    %v1491 = vld [vmem:[#allocation4 + $0x18] sm:$0xff]
    %v1492 = vld [vmem:[#allocation4 + $0x20] sm:$0xff]
    %v1493 = vld [vmem:[#allocation4 + $0x28] sm:$0xff]
    %v1494 = vld [vmem:[#allocation4 + $0x30] sm:$0xff]
    %v1495 = vld [vmem:[#allocation4 + $0x38] sm:$0xff]
    %v1496 = vld [vmem:[#allocation4 + $0x40] sm:$0xff]
    %v1497 = vld [vmem:[#allocation4 + $0x48] sm:$0xff]
    %v1498 = vld [vmem:[#allocation4 + $0x50] sm:$0xff]
    %v1499 = vld [vmem:[#allocation4 + $0x58] sm:$0xff]
    %v1500 = vld [vmem:[#allocation4 + $0x60] sm:$0xff]
    %v1501 = vld [vmem:[#allocation4 + $0x68] sm:$0xff]
    %v1502 = vld [vmem:[#allocation4 + $0x70] sm:$0xff]
    %v1503 = vld [vmem:[#allocation4 + $0x78] sm:$0xff]
    %v1504 = vld [vmem:[#allocation4 + $0x80] sm:$0xff]
    %v1505 = vld [vmem:[#allocation4 + $0x88] sm:$0xff]
    %v1506 = vld [vmem:[#allocation4 + $0x90] sm:$0xff]
    %v1507 = vld [vmem:[#allocation4 + $0x98] sm:$0xff]
    %v1508 = vld [vmem:[#allocation4 + $0xa0] sm:$0xff]
    %v1509 = vld [vmem:[#allocation4 + $0xa8] sm:$0xff]
    %v1510 = vld [vmem:[#allocation4 + $0xb0] sm:$0xff]
    %v1511 = vld [vmem:[#allocation4 + $0xb8] sm:$0xff]
    %v1512 = vld [vmem:[#allocation4 + $0xc0] sm:$0xff]
    %v1513 = vld [vmem:[#allocation4 + $0xc8] sm:$0xff]
    %v1514 = vld [vmem:[#allocation4 + $0xd0] sm:$0xff]
    %v1515 = vld [vmem:[#allocation4 + $0xd8] sm:$0xff]
    %v1516 = vld [vmem:[#allocation4 + $0xe0] sm:$0xff]
    %v1517 = vld [vmem:[#allocation4 + $0xe8] sm:$0xff]
    %v1518 = vld [vmem:[#allocation4 + $0xf0] sm:$0xff]
    %v1519 = vld [vmem:[#allocation4 + $0xf8] sm:$0xff]
    %v1520 = vld [vmem:[%s506] sm:$0xff]
    %v1521 = vld [vmem:[%s506 + $0x8] sm:$0xff]
    %s1522 = scalar_lea.vmem [#allocation4], 256
    %v1523 = vld [vmem:[%s1522] sm:$0xff]
    %v1524 = vld [vmem:[%s1522 + $0x8] sm:$0xff]
    %v1525 = vld [vmem:[%s1522 + $0x10] sm:$0xff]
    %v1526 = vld [vmem:[%s1522 + $0x18] sm:$0xff]
    %v1527 = vld [vmem:[%s1522 + $0x20] sm:$0xff]
    %v1528 = vld [vmem:[%s1522 + $0x28] sm:$0xff]
    %v1529 = vld [vmem:[%s1522 + $0x30] sm:$0xff]
    %v1530 = vld [vmem:[%s1522 + $0x38] sm:$0xff]
    %v1531 = vld [vmem:[%s1522 + $0x40] sm:$0xff]
    %v1532 = vld [vmem:[%s1522 + $0x48] sm:$0xff]
    %v1533 = vld [vmem:[%s1522 + $0x50] sm:$0xff]
    %v1534 = vld [vmem:[%s1522 + $0x58] sm:$0xff]
    %v1535 = vld [vmem:[%s1522 + $0x60] sm:$0xff]
    %v1536 = vld [vmem:[%s1522 + $0x68] sm:$0xff]
    %v1537 = vld [vmem:[%s1522 + $0x70] sm:$0xff]
    %v1538 = vld [vmem:[%s1522 + $0x78] sm:$0xff]
    %v1539 = vld [vmem:[%s1522 + $0x80] sm:$0xff]
    %v1540 = vld [vmem:[%s1522 + $0x88] sm:$0xff]
    %v1541 = vld [vmem:[%s1522 + $0x90] sm:$0xff]
    %v1542 = vld [vmem:[%s1522 + $0x98] sm:$0xff]
    %v1543 = vld [vmem:[%s1522 + $0xa0] sm:$0xff]
    %v1544 = vld [vmem:[%s1522 + $0xa8] sm:$0xff]
    %v1545 = vld [vmem:[%s1522 + $0xb0] sm:$0xff]
    %v1546 = vld [vmem:[%s1522 + $0xb8] sm:$0xff]
    %v1547 = vld [vmem:[%s1522 + $0xc0] sm:$0xff]
    %v1548 = vld [vmem:[%s1522 + $0xc8] sm:$0xff]
    %v1549 = vld [vmem:[%s1522 + $0xd0] sm:$0xff]
    %v1550 = vld [vmem:[%s1522 + $0xd8] sm:$0xff]
    %v1551 = vld [vmem:[%s1522 + $0xe0] sm:$0xff]
    %v1552 = vld [vmem:[%s1522 + $0xe8] sm:$0xff]
    %v1553 = vld [vmem:[%s1522 + $0xf0] sm:$0xff]
    %v1554 = vld [vmem:[%s1522 + $0xf8] sm:$0xff]
    %v1557 = vunpack.c.l.b16 %v1520
    %v1558 = vunpack.c.h.b16 %v1520
    %v1559 = vunpack.c.l.b16 %v1521
    %v1560 = vunpack.c.h.b16 %v1521
    %v1561 = vpack.c.b16 %v1559, %v1557
    %v1562 = vpack.c.b16 %v1560, %v1558
    %v1597 = vunpack.c.l.b16 %v1523
    %v1598 = vunpack.c.h.b16 %v1523
    %v1599 = vunpack.c.l.b16 %v1524
    %v1600 = vunpack.c.h.b16 %v1524
    %v1601 = vunpack.c.l.b16 %v1525
    %v1602 = vunpack.c.h.b16 %v1525
    %v1603 = vunpack.c.l.b16 %v1526
    %v1604 = vunpack.c.h.b16 %v1526
    %v1605 = vunpack.c.l.b16 %v1527
    %v1606 = vunpack.c.h.b16 %v1527
    %v1607 = vunpack.c.l.b16 %v1528
    %v1608 = vunpack.c.h.b16 %v1528
    %v1609 = vunpack.c.l.b16 %v1529
    %v1610 = vunpack.c.h.b16 %v1529
    %v1611 = vunpack.c.l.b16 %v1530
    %v1612 = vunpack.c.h.b16 %v1530
    %v1613 = vunpack.c.l.b16 %v1531
    %v1614 = vunpack.c.h.b16 %v1531
    %v1615 = vunpack.c.l.b16 %v1532
    %v1616 = vunpack.c.h.b16 %v1532
    %v1617 = vunpack.c.l.b16 %v1533
    %v1618 = vunpack.c.h.b16 %v1533
    %v1619 = vunpack.c.l.b16 %v1534
    %v1620 = vunpack.c.h.b16 %v1534
    %v1621 = vunpack.c.l.b16 %v1535
    %v1622 = vunpack.c.h.b16 %v1535
    %v1623 = vunpack.c.l.b16 %v1536
    %v1624 = vunpack.c.h.b16 %v1536
    %v1625 = vunpack.c.l.b16 %v1537
    %v1626 = vunpack.c.h.b16 %v1537
    %v1627 = vunpack.c.l.b16 %v1538
    %v1628 = vunpack.c.h.b16 %v1538
    %v1629 = vunpack.c.l.b16 %v1539
    %v1630 = vunpack.c.h.b16 %v1539
    %v1631 = vunpack.c.l.b16 %v1540
    %v1632 = vunpack.c.h.b16 %v1540
    %v1633 = vunpack.c.l.b16 %v1541
    %v1634 = vunpack.c.h.b16 %v1541
    %v1635 = vunpack.c.l.b16 %v1542
    %v1636 = vunpack.c.h.b16 %v1542
    %v1637 = vunpack.c.l.b16 %v1543
    %v1638 = vunpack.c.h.b16 %v1543
    %v1639 = vunpack.c.l.b16 %v1544
    %v1640 = vunpack.c.h.b16 %v1544
    %v1641 = vunpack.c.l.b16 %v1545
    %v1642 = vunpack.c.h.b16 %v1545
    %v1643 = vunpack.c.l.b16 %v1546
    %v1644 = vunpack.c.h.b16 %v1546
    %v1645 = vunpack.c.l.b16 %v1547
    %v1646 = vunpack.c.h.b16 %v1547
    %v1647 = vunpack.c.l.b16 %v1548
    %v1648 = vunpack.c.h.b16 %v1548
    %v1649 = vunpack.c.l.b16 %v1549
    %v1650 = vunpack.c.h.b16 %v1549
    %v1651 = vunpack.c.l.b16 %v1550
    %v1652 = vunpack.c.h.b16 %v1550
    %v1653 = vunpack.c.l.b16 %v1551
    %v1654 = vunpack.c.h.b16 %v1551
    %v1655 = vunpack.c.l.b16 %v1552
    %v1656 = vunpack.c.h.b16 %v1552
    %v1657 = vunpack.c.l.b16 %v1553
    %v1658 = vunpack.c.h.b16 %v1553
    %v1659 = vunpack.c.l.b16 %v1554
    %v1660 = vunpack.c.h.b16 %v1554
    %v1661 = vpack.c.b16 %v1599, %v1597
    %v1662 = vpack.c.b16 %v1600, %v1598
    %v1663 = vpack.c.b16 %v1603, %v1601
    %v1664 = vpack.c.b16 %v1604, %v1602
    %v1665 = vpack.c.b16 %v1607, %v1605
    %v1666 = vpack.c.b16 %v1608, %v1606
    %v1667 = vpack.c.b16 %v1611, %v1609
    %v1668 = vpack.c.b16 %v1612, %v1610
    %v1669 = vpack.c.b16 %v1615, %v1613
    %v1670 = vpack.c.b16 %v1616, %v1614
    %v1671 = vpack.c.b16 %v1619, %v1617
    %v1672 = vpack.c.b16 %v1620, %v1618
    %v1673 = vpack.c.b16 %v1623, %v1621
    %v1674 = vpack.c.b16 %v1624, %v1622
    %v1675 = vpack.c.b16 %v1627, %v1625
    %v1676 = vpack.c.b16 %v1628, %v1626
    %v1677 = vpack.c.b16 %v1631, %v1629
    %v1678 = vpack.c.b16 %v1632, %v1630
    %v1679 = vpack.c.b16 %v1635, %v1633
    %v1680 = vpack.c.b16 %v1636, %v1634
    %v1681 = vpack.c.b16 %v1639, %v1637
    %v1682 = vpack.c.b16 %v1640, %v1638
    %v1683 = vpack.c.b16 %v1643, %v1641
    %v1684 = vpack.c.b16 %v1644, %v1642
    %v1685 = vpack.c.b16 %v1647, %v1645
    %v1686 = vpack.c.b16 %v1648, %v1646
    %v1687 = vpack.c.b16 %v1651, %v1649
    %v1688 = vpack.c.b16 %v1652, %v1650
    %v1689 = vpack.c.b16 %v1655, %v1653
    %v1690 = vpack.c.b16 %v1656, %v1654
    %v1691 = vpack.c.b16 %v1659, %v1657
    %v1692 = vpack.c.b16 %v1660, %v1658
    %1725 = vmatprep.subr.bf16.mxu0 %v1676
    %1726 = vmatpush1.bf16.msra.mxu0 %v1675
    %1727 = vmatprep.subr.bf16.mxu0 %v1674
    %1728 = vmatpush1.bf16.msra.mxu0 %v1673
    %1729 = vmatprep.subr.bf16.mxu0 %v1672
    %1730 = vmatpush1.bf16.msra.mxu0 %v1671
    %1731 = vmatprep.subr.bf16.mxu0 %v1670
    %1732 = vmatpush1.bf16.msra.mxu0 %v1669
    %1733 = vmatprep.subr.bf16.mxu0 %v1668
    %1734 = vmatpush1.bf16.msra.mxu0 %v1667
    %1735 = vmatprep.subr.bf16.mxu0 %v1666
    %1736 = vmatpush1.bf16.msra.mxu0 %v1665
    %1737 = vmatprep.subr.bf16.mxu0 %v1664
    %1738 = vmatpush1.bf16.msra.mxu0 %v1663
    %1739 = vmatprep.subr.bf16.mxu0 %v1662
    %1740 = vmatpush1.bf16.msra.mxu0 %v1661
    %1741 = vmatprep.subr.bf16.mxu0 %v1692
    %1742 = vmatpush2.bf16.msra.mxu0 %v1691
    %1743 = vmatprep.subr.bf16.mxu0 %v1690
    %1744 = vmatpush2.bf16.msra.mxu0 %v1689
    %1745 = vmatprep.subr.bf16.mxu0 %v1688
    %1746 = vmatpush2.bf16.msra.mxu0 %v1687
    %1747 = vmatprep.subr.bf16.mxu0 %v1686
    %1748 = vmatpush2.bf16.msra.mxu0 %v1685
    %1749 = vmatprep.subr.bf16.mxu0 %v1684
    %1750 = vmatpush2.bf16.msra.mxu0 %v1683
    %1751 = vmatprep.subr.bf16.mxu0 %v1682
    %1752 = vmatpush2.bf16.msra.mxu0 %v1681
    %1753 = vmatprep.subr.bf16.mxu0 %v1680
    %1754 = vmatpush2.bf16.msra.mxu0 %v1679
    %1755 = vmatprep.subr.bf16.mxu0 %v1678
    %1756 = vmatpush2.bf16.msra.mxu0 %v1677
    %1757 = vmatprep.mubr.bf16.mxu0 %v1562
    %1758 = vmatmul.mubr.bf16.gmra.mxu0 %v1561
    %v1759 = vpop.f32.mrf.mxu0
    %v1760 = vadd.f32 0.0, %v1759
    %v1761 = vpop.f32.mrf.mxu0
    %v1762 = vadd.f32 0.0, %v1761
    %v1763 = vpop.f32.mrf.mxu0
    %v1764 = vadd.f32 0.0, %v1763
    %v1765 = vpop.f32.mrf.mxu0
    %v1766 = vadd.f32 0.0, %v1765
    %1767 = vdwg.mxu0
    %v1770 = vunpack.c.l.b16 %v1486
    %v1771 = vunpack.c.h.b16 %v1486
    %v1772 = vunpack.c.l.b16 %v1487
    %v1773 = vunpack.c.h.b16 %v1487
    %v1774 = vpack.c.b16 %v1772, %v1770
    %v1775 = vpack.c.b16 %v1773, %v1771
    %v1810 = vunpack.c.l.b16 %v1488
    %v1811 = vunpack.c.h.b16 %v1488
    %v1812 = vunpack.c.l.b16 %v1489
    %v1813 = vunpack.c.h.b16 %v1489
    %v1814 = vunpack.c.l.b16 %v1490
    %v1815 = vunpack.c.h.b16 %v1490
    %v1816 = vunpack.c.l.b16 %v1491
    %v1817 = vunpack.c.h.b16 %v1491
    %v1818 = vunpack.c.l.b16 %v1492
    %v1819 = vunpack.c.h.b16 %v1492
    %v1820 = vunpack.c.l.b16 %v1493
    %v1821 = vunpack.c.h.b16 %v1493
    %v1822 = vunpack.c.l.b16 %v1494
    %v1823 = vunpack.c.h.b16 %v1494
    %v1824 = vunpack.c.l.b16 %v1495
    %v1825 = vunpack.c.h.b16 %v1495
    %v1826 = vunpack.c.l.b16 %v1496
    %v1827 = vunpack.c.h.b16 %v1496
    %v1828 = vunpack.c.l.b16 %v1497
    %v1829 = vunpack.c.h.b16 %v1497
    %v1830 = vunpack.c.l.b16 %v1498
    %v1831 = vunpack.c.h.b16 %v1498
    %v1832 = vunpack.c.l.b16 %v1499
    %v1833 = vunpack.c.h.b16 %v1499
    %v1834 = vunpack.c.l.b16 %v1500
    %v1835 = vunpack.c.h.b16 %v1500
    %v1836 = vunpack.c.l.b16 %v1501
    %v1837 = vunpack.c.h.b16 %v1501
    %v1838 = vunpack.c.l.b16 %v1502
    %v1839 = vunpack.c.h.b16 %v1502
    %v1840 = vunpack.c.l.b16 %v1503
    %v1841 = vunpack.c.h.b16 %v1503
    %v1842 = vunpack.c.l.b16 %v1504
    %v1843 = vunpack.c.h.b16 %v1504
    %v1844 = vunpack.c.l.b16 %v1505
    %v1845 = vunpack.c.h.b16 %v1505
    %v1846 = vunpack.c.l.b16 %v1506
    %v1847 = vunpack.c.h.b16 %v1506
    %v1848 = vunpack.c.l.b16 %v1507
    %v1849 = vunpack.c.h.b16 %v1507
    %v1850 = vunpack.c.l.b16 %v1508
    %v1851 = vunpack.c.h.b16 %v1508
    %v1852 = vunpack.c.l.b16 %v1509
    %v1853 = vunpack.c.h.b16 %v1509
    %v1854 = vunpack.c.l.b16 %v1510
    %v1855 = vunpack.c.h.b16 %v1510
    %v1856 = vunpack.c.l.b16 %v1511
    %v1857 = vunpack.c.h.b16 %v1511
    %v1858 = vunpack.c.l.b16 %v1512
    %v1859 = vunpack.c.h.b16 %v1512
    %v1860 = vunpack.c.l.b16 %v1513
    %v1861 = vunpack.c.h.b16 %v1513
    %v1862 = vunpack.c.l.b16 %v1514
    %v1863 = vunpack.c.h.b16 %v1514
    %v1864 = vunpack.c.l.b16 %v1515
    %v1865 = vunpack.c.h.b16 %v1515
    %v1866 = vunpack.c.l.b16 %v1516
    %v1867 = vunpack.c.h.b16 %v1516
    %v1868 = vunpack.c.l.b16 %v1517
    %v1869 = vunpack.c.h.b16 %v1517
    %v1870 = vunpack.c.l.b16 %v1518
    %v1871 = vunpack.c.h.b16 %v1518
    %v1872 = vunpack.c.l.b16 %v1519
    %v1873 = vunpack.c.h.b16 %v1519
    %v1874 = vpack.c.b16 %v1812, %v1810
    %v1875 = vpack.c.b16 %v1813, %v1811
    %v1876 = vpack.c.b16 %v1816, %v1814
    %v1877 = vpack.c.b16 %v1817, %v1815
    %v1878 = vpack.c.b16 %v1820, %v1818
    %v1879 = vpack.c.b16 %v1821, %v1819
    %v1880 = vpack.c.b16 %v1824, %v1822
    %v1881 = vpack.c.b16 %v1825, %v1823
    %v1882 = vpack.c.b16 %v1828, %v1826
    %v1883 = vpack.c.b16 %v1829, %v1827
    %v1884 = vpack.c.b16 %v1832, %v1830
    %v1885 = vpack.c.b16 %v1833, %v1831
    %v1886 = vpack.c.b16 %v1836, %v1834
    %v1887 = vpack.c.b16 %v1837, %v1835
    %v1888 = vpack.c.b16 %v1840, %v1838
    %v1889 = vpack.c.b16 %v1841, %v1839
    %v1890 = vpack.c.b16 %v1844, %v1842
    %v1891 = vpack.c.b16 %v1845, %v1843
    %v1892 = vpack.c.b16 %v1848, %v1846
    %v1893 = vpack.c.b16 %v1849, %v1847
    %v1894 = vpack.c.b16 %v1852, %v1850
    %v1895 = vpack.c.b16 %v1853, %v1851
    %v1896 = vpack.c.b16 %v1856, %v1854
    %v1897 = vpack.c.b16 %v1857, %v1855
    %v1898 = vpack.c.b16 %v1860, %v1858
    %v1899 = vpack.c.b16 %v1861, %v1859
    %v1900 = vpack.c.b16 %v1864, %v1862
    %v1901 = vpack.c.b16 %v1865, %v1863
    %v1902 = vpack.c.b16 %v1868, %v1866
    %v1903 = vpack.c.b16 %v1869, %v1867
    %v1904 = vpack.c.b16 %v1872, %v1870
    %v1905 = vpack.c.b16 %v1873, %v1871
    %1938 = vmatprep.subr.bf16.mxu0 %v1889
    %1939 = vmatpush1.bf16.msra.mxu0 %v1888
    %1940 = vmatprep.subr.bf16.mxu0 %v1887
    %1941 = vmatpush1.bf16.msra.mxu0 %v1886
    %1942 = vmatprep.subr.bf16.mxu0 %v1885
    %1943 = vmatpush1.bf16.msra.mxu0 %v1884
    %1944 = vmatprep.subr.bf16.mxu0 %v1883
    %1945 = vmatpush1.bf16.msra.mxu0 %v1882
    %1946 = vmatprep.subr.bf16.mxu0 %v1881
    %1947 = vmatpush1.bf16.msra.mxu0 %v1880
    %1948 = vmatprep.subr.bf16.mxu0 %v1879
    %1949 = vmatpush1.bf16.msra.mxu0 %v1878
    %1950 = vmatprep.subr.bf16.mxu0 %v1877
    %1951 = vmatpush1.bf16.msra.mxu0 %v1876
    %1952 = vmatprep.subr.bf16.mxu0 %v1875
    %1953 = vmatpush1.bf16.msra.mxu0 %v1874
    %1954 = vmatprep.subr.bf16.mxu0 %v1905
    %1955 = vmatpush2.bf16.msra.mxu0 %v1904
    %1956 = vmatprep.subr.bf16.mxu0 %v1903
    %1957 = vmatpush2.bf16.msra.mxu0 %v1902
    %1958 = vmatprep.subr.bf16.mxu0 %v1901
    %1959 = vmatpush2.bf16.msra.mxu0 %v1900
    %1960 = vmatprep.subr.bf16.mxu0 %v1899
    %1961 = vmatpush2.bf16.msra.mxu0 %v1898
    %1962 = vmatprep.subr.bf16.mxu0 %v1897
    %1963 = vmatpush2.bf16.msra.mxu0 %v1896
    %1964 = vmatprep.subr.bf16.mxu0 %v1895
    %1965 = vmatpush2.bf16.msra.mxu0 %v1894
    %1966 = vmatprep.subr.bf16.mxu0 %v1893
    %1967 = vmatpush2.bf16.msra.mxu0 %v1892
    %1968 = vmatprep.subr.bf16.mxu0 %v1891
    %1969 = vmatpush2.bf16.msra.mxu0 %v1890
    %1970 = vmatprep.mubr.bf16.mxu0 %v1775
    %1971 = vmatmul.mubr.bf16.gmra.mxu0 %v1774
    %v1972 = vpop.f32.mrf.mxu0
    %v1973 = vadd.f32 %v1760, %v1972
    %v1974 = vpop.f32.mrf.mxu0
    %v1975 = vadd.f32 %v1762, %v1974
    %v1976 = vpop.f32.mrf.mxu0
    %v1977 = vadd.f32 %v1764, %v1976
    %v1978 = vpop.f32.mrf.mxu0
    %v1979 = vadd.f32 %v1766, %v1978
    %1980 = vdwg.mxu0
    %v1981 = vld [vmem:[#allocation2] sm:$0xee]
    %v1982 = vld [vmem:[#allocation2 + $0x8] sm:$0xff]
    %v1983 = vld [vmem:[#allocation2 + $0x10] sm:$0x11]
    %s1984 = scalar_lea.vmem [#allocation4], 512
    %v1985 = vld [vmem:[%s1984] sm:$0xff]
    %v1986 = vld [vmem:[%s1984 + $0x8] sm:$0xff]
    %v1987 = vld [vmem:[%s1984 + $0x10] sm:$0xff]
    %v1988 = vld [vmem:[%s1984 + $0x18] sm:$0xff]
    %v1989 = vld [vmem:[%s1984 + $0x20] sm:$0xff]
    %v1990 = vld [vmem:[%s1984 + $0x28] sm:$0xff]
    %v1991 = vld [vmem:[%s1984 + $0x30] sm:$0xff]
    %v1992 = vld [vmem:[%s1984 + $0x38] sm:$0xff]
    %v1993 = vld [vmem:[%s1984 + $0x40] sm:$0xff]
    %v1994 = vld [vmem:[%s1984 + $0x48] sm:$0xff]
    %v1995 = vld [vmem:[%s1984 + $0x50] sm:$0xff]
    %v1996 = vld [vmem:[%s1984 + $0x58] sm:$0xff]
    %v1997 = vld [vmem:[%s1984 + $0x60] sm:$0xff]
    %v1998 = vld [vmem:[%s1984 + $0x68] sm:$0xff]
    %v1999 = vld [vmem:[%s1984 + $0x70] sm:$0xff]
    %v2000 = vld [vmem:[%s1984 + $0x78] sm:$0xff]
    %v2001 = vld [vmem:[%s1984 + $0x80] sm:$0xff]
    %v2002 = vld [vmem:[%s1984 + $0x88] sm:$0xff]
    %v2003 = vld [vmem:[%s1984 + $0x90] sm:$0xff]
    %v2004 = vld [vmem:[%s1984 + $0x98] sm:$0xff]
    %v2005 = vld [vmem:[%s1984 + $0xa0] sm:$0xff]
    %v2006 = vld [vmem:[%s1984 + $0xa8] sm:$0xff]
    %v2007 = vld [vmem:[%s1984 + $0xb0] sm:$0xff]
    %v2008 = vld [vmem:[%s1984 + $0xb8] sm:$0xff]
    %v2009 = vld [vmem:[%s1984 + $0xc0] sm:$0xff]
    %v2010 = vld [vmem:[%s1984 + $0xc8] sm:$0xff]
    %v2011 = vld [vmem:[%s1984 + $0xd0] sm:$0xff]
    %v2012 = vld [vmem:[%s1984 + $0xd8] sm:$0xff]
    %v2013 = vld [vmem:[%s1984 + $0xe0] sm:$0xff]
    %v2014 = vld [vmem:[%s1984 + $0xe8] sm:$0xff]
    %v2015 = vld [vmem:[%s1984 + $0xf0] sm:$0xff]
    %v2016 = vld [vmem:[%s1984 + $0xf8] sm:$0xff]
    %v2020 = vunpack.c.l.b16 %v1981
    %v2021 = vunpack.c.h.b16 %v1981
    %v2022 = vunpack.c.l.b16 %v1982
    %v2023 = vunpack.c.h.b16 %v1982
    %v2024 = vunpack.c.l.b16 %v1983
    %v2025 = vunpack.c.h.b16 %v1983
    %v2026 = vpack.c.b16 %v2022, %v2020
    %v2027 = vpack.c.b16 %v2023, %v2021
    %v2028 = vpack.c.b16 %v2024, %v2024
    %v2029 = vpack.c.b16 %v2025, %v2025
    %v2030 = vrot.slane %v2026, 1
    %v2031 = vrot.slane %v2028, 1
    %v2032 = vsel %vm568, %v2030, %v2031
    %v2033 = vrot.slane %v2027, 1
    %v2034 = vrot.slane %v2029, 1
    %v2035 = vsel %vm568, %v2033, %v2034
    %v2070 = vunpack.c.l.b16 %v1985
    %v2071 = vunpack.c.h.b16 %v1985
    %v2072 = vunpack.c.l.b16 %v1986
    %v2073 = vunpack.c.h.b16 %v1986
    %v2074 = vunpack.c.l.b16 %v1987
    %v2075 = vunpack.c.h.b16 %v1987
    %v2076 = vunpack.c.l.b16 %v1988
    %v2077 = vunpack.c.h.b16 %v1988
    %v2078 = vunpack.c.l.b16 %v1989
    %v2079 = vunpack.c.h.b16 %v1989
    %v2080 = vunpack.c.l.b16 %v1990
    %v2081 = vunpack.c.h.b16 %v1990
    %v2082 = vunpack.c.l.b16 %v1991
    %v2083 = vunpack.c.h.b16 %v1991
    %v2084 = vunpack.c.l.b16 %v1992
    %v2085 = vunpack.c.h.b16 %v1992
    %v2086 = vunpack.c.l.b16 %v1993
    %v2087 = vunpack.c.h.b16 %v1993
    %v2088 = vunpack.c.l.b16 %v1994
    %v2089 = vunpack.c.h.b16 %v1994
    %v2090 = vunpack.c.l.b16 %v1995
    %v2091 = vunpack.c.h.b16 %v1995
    %v2092 = vunpack.c.l.b16 %v1996
    %v2093 = vunpack.c.h.b16 %v1996
    %v2094 = vunpack.c.l.b16 %v1997
    %v2095 = vunpack.c.h.b16 %v1997
    %v2096 = vunpack.c.l.b16 %v1998
    %v2097 = vunpack.c.h.b16 %v1998
    %v2098 = vunpack.c.l.b16 %v1999
    %v2099 = vunpack.c.h.b16 %v1999
    %v2100 = vunpack.c.l.b16 %v2000
    %v2101 = vunpack.c.h.b16 %v2000
    %v2102 = vunpack.c.l.b16 %v2001
    %v2103 = vunpack.c.h.b16 %v2001
    %v2104 = vunpack.c.l.b16 %v2002
    %v2105 = vunpack.c.h.b16 %v2002
    %v2106 = vunpack.c.l.b16 %v2003
    %v2107 = vunpack.c.h.b16 %v2003
    %v2108 = vunpack.c.l.b16 %v2004
    %v2109 = vunpack.c.h.b16 %v2004
    %v2110 = vunpack.c.l.b16 %v2005
    %v2111 = vunpack.c.h.b16 %v2005
    %v2112 = vunpack.c.l.b16 %v2006
    %v2113 = vunpack.c.h.b16 %v2006
    %v2114 = vunpack.c.l.b16 %v2007
    %v2115 = vunpack.c.h.b16 %v2007
    %v2116 = vunpack.c.l.b16 %v2008
    %v2117 = vunpack.c.h.b16 %v2008
    %v2118 = vunpack.c.l.b16 %v2009
    %v2119 = vunpack.c.h.b16 %v2009
    %v2120 = vunpack.c.l.b16 %v2010
    %v2121 = vunpack.c.h.b16 %v2010
    %v2122 = vunpack.c.l.b16 %v2011
    %v2123 = vunpack.c.h.b16 %v2011
    %v2124 = vunpack.c.l.b16 %v2012
    %v2125 = vunpack.c.h.b16 %v2012
    %v2126 = vunpack.c.l.b16 %v2013
    %v2127 = vunpack.c.h.b16 %v2013
    %v2128 = vunpack.c.l.b16 %v2014
    %v2129 = vunpack.c.h.b16 %v2014
    %v2130 = vunpack.c.l.b16 %v2015
    %v2131 = vunpack.c.h.b16 %v2015
    %v2132 = vunpack.c.l.b16 %v2016
    %v2133 = vunpack.c.h.b16 %v2016
    %v2134 = vpack.c.b16 %v2072, %v2070
    %v2135 = vpack.c.b16 %v2073, %v2071
    %v2136 = vpack.c.b16 %v2076, %v2074
    %v2137 = vpack.c.b16 %v2077, %v2075
    %v2138 = vpack.c.b16 %v2080, %v2078
    %v2139 = vpack.c.b16 %v2081, %v2079
    %v2140 = vpack.c.b16 %v2084, %v2082
    %v2141 = vpack.c.b16 %v2085, %v2083
    %v2142 = vpack.c.b16 %v2088, %v2086
    %v2143 = vpack.c.b16 %v2089, %v2087
    %v2144 = vpack.c.b16 %v2092, %v2090
    %v2145 = vpack.c.b16 %v2093, %v2091
    %v2146 = vpack.c.b16 %v2096, %v2094
    %v2147 = vpack.c.b16 %v2097, %v2095
    %v2148 = vpack.c.b16 %v2100, %v2098
    %v2149 = vpack.c.b16 %v2101, %v2099
    %v2150 = vpack.c.b16 %v2104, %v2102
    %v2151 = vpack.c.b16 %v2105, %v2103
    %v2152 = vpack.c.b16 %v2108, %v2106
    %v2153 = vpack.c.b16 %v2109, %v2107
    %v2154 = vpack.c.b16 %v2112, %v2110
    %v2155 = vpack.c.b16 %v2113, %v2111
    %v2156 = vpack.c.b16 %v2116, %v2114
    %v2157 = vpack.c.b16 %v2117, %v2115
    %v2158 = vpack.c.b16 %v2120, %v2118
    %v2159 = vpack.c.b16 %v2121, %v2119
    %v2160 = vpack.c.b16 %v2124, %v2122
    %v2161 = vpack.c.b16 %v2125, %v2123
    %v2162 = vpack.c.b16 %v2128, %v2126
    %v2163 = vpack.c.b16 %v2129, %v2127
    %v2164 = vpack.c.b16 %v2132, %v2130
    %v2165 = vpack.c.b16 %v2133, %v2131
    %2198 = vmatprep.subr.bf16.mxu0 %v2149
    %2199 = vmatpush1.bf16.msra.mxu0 %v2148
    %2200 = vmatprep.subr.bf16.mxu0 %v2147
    %2201 = vmatpush1.bf16.msra.mxu0 %v2146
    %2202 = vmatprep.subr.bf16.mxu0 %v2145
    %2203 = vmatpush1.bf16.msra.mxu0 %v2144
    %2204 = vmatprep.subr.bf16.mxu0 %v2143
    %2205 = vmatpush1.bf16.msra.mxu0 %v2142
    %2206 = vmatprep.subr.bf16.mxu0 %v2141
    %2207 = vmatpush1.bf16.msra.mxu0 %v2140
    %2208 = vmatprep.subr.bf16.mxu0 %v2139
    %2209 = vmatpush1.bf16.msra.mxu0 %v2138
    %2210 = vmatprep.subr.bf16.mxu0 %v2137
    %2211 = vmatpush1.bf16.msra.mxu0 %v2136
    %2212 = vmatprep.subr.bf16.mxu0 %v2135
    %2213 = vmatpush1.bf16.msra.mxu0 %v2134
    %2214 = vmatprep.subr.bf16.mxu0 %v2165
    %2215 = vmatpush2.bf16.msra.mxu0 %v2164
    %2216 = vmatprep.subr.bf16.mxu0 %v2163
    %2217 = vmatpush2.bf16.msra.mxu0 %v2162
    %2218 = vmatprep.subr.bf16.mxu0 %v2161
    %2219 = vmatpush2.bf16.msra.mxu0 %v2160
    %2220 = vmatprep.subr.bf16.mxu0 %v2159
    %2221 = vmatpush2.bf16.msra.mxu0 %v2158
    %2222 = vmatprep.subr.bf16.mxu0 %v2157
    %2223 = vmatpush2.bf16.msra.mxu0 %v2156
    %2224 = vmatprep.subr.bf16.mxu0 %v2155
    %2225 = vmatpush2.bf16.msra.mxu0 %v2154
    %2226 = vmatprep.subr.bf16.mxu0 %v2153
    %2227 = vmatpush2.bf16.msra.mxu0 %v2152
    %2228 = vmatprep.subr.bf16.mxu0 %v2151
    %2229 = vmatpush2.bf16.msra.mxu0 %v2150
    %2230 = vmatprep.mubr.bf16.mxu0 %v2035
    %2231 = vmatmul.mubr.bf16.gmra.mxu0 %v2032
    %v2232 = vpop.f32.mrf.mxu0
    %v2233 = vadd.f32 0.0, %v2232
    %v2234 = vpop.f32.mrf.mxu0
    %v2235 = vadd.f32 0.0, %v2234
    %v2236 = vpop.f32.mrf.mxu0
    %v2237 = vadd.f32 0.0, %v2236
    %v2238 = vpop.f32.mrf.mxu0
    %v2239 = vadd.f32 0.0, %v2238
    %2240 = vdwg.mxu0
    %v2241 = vadd.f32 %v1973, %v2233
    %v2242 = vadd.f32 %v1975, %v2235
    %v2243 = vadd.f32 %v1977, %v2237
    %v2244 = vadd.f32 %v1979, %v2239
    %v2245 = vld [vmem:[%s506] sm:$0xee]
    %v2246 = vld [vmem:[%s506 + $0x8] sm:$0xff]
    %v2247 = vld [vmem:[%s506 + $0x10] sm:$0x11]
    %s2248 = scalar_lea.vmem [#allocation4], 768
    %v2249 = vld [vmem:[%s2248] sm:$0xff]
    %v2250 = vld [vmem:[%s2248 + $0x8] sm:$0xff]
    %v2251 = vld [vmem:[%s2248 + $0x10] sm:$0xff]
    %v2252 = vld [vmem:[%s2248 + $0x18] sm:$0xff]
    %v2253 = vld [vmem:[%s2248 + $0x20] sm:$0xff]
    %v2254 = vld [vmem:[%s2248 + $0x28] sm:$0xff]
    %v2255 = vld [vmem:[%s2248 + $0x30] sm:$0xff]
    %v2256 = vld [vmem:[%s2248 + $0x38] sm:$0xff]
    %v2257 = vld [vmem:[%s2248 + $0x40] sm:$0xff]
    %v2258 = vld [vmem:[%s2248 + $0x48] sm:$0xff]
    %v2259 = vld [vmem:[%s2248 + $0x50] sm:$0xff]
    %v2260 = vld [vmem:[%s2248 + $0x58] sm:$0xff]
    %v2261 = vld [vmem:[%s2248 + $0x60] sm:$0xff]
    %v2262 = vld [vmem:[%s2248 + $0x68] sm:$0xff]
    %v2263 = vld [vmem:[%s2248 + $0x70] sm:$0xff]
    %v2264 = vld [vmem:[%s2248 + $0x78] sm:$0xff]
    %v2265 = vld [vmem:[%s2248 + $0x80] sm:$0xff]
    %v2266 = vld [vmem:[%s2248 + $0x88] sm:$0xff]
    %v2267 = vld [vmem:[%s2248 + $0x90] sm:$0xff]
    %v2268 = vld [vmem:[%s2248 + $0x98] sm:$0xff]
    %v2269 = vld [vmem:[%s2248 + $0xa0] sm:$0xff]
    %v2270 = vld [vmem:[%s2248 + $0xa8] sm:$0xff]
    %v2271 = vld [vmem:[%s2248 + $0xb0] sm:$0xff]
    %v2272 = vld [vmem:[%s2248 + $0xb8] sm:$0xff]
    %v2273 = vld [vmem:[%s2248 + $0xc0] sm:$0xff]
    %v2274 = vld [vmem:[%s2248 + $0xc8] sm:$0xff]
    %v2275 = vld [vmem:[%s2248 + $0xd0] sm:$0xff]
    %v2276 = vld [vmem:[%s2248 + $0xd8] sm:$0xff]
    %v2277 = vld [vmem:[%s2248 + $0xe0] sm:$0xff]
    %v2278 = vld [vmem:[%s2248 + $0xe8] sm:$0xff]
    %v2279 = vld [vmem:[%s2248 + $0xf0] sm:$0xff]
    %v2280 = vld [vmem:[%s2248 + $0xf8] sm:$0xff]
    %v2284 = vunpack.c.l.b16 %v2245
    %v2285 = vunpack.c.h.b16 %v2245
    %v2286 = vunpack.c.l.b16 %v2246
    %v2287 = vunpack.c.h.b16 %v2246
    %v2288 = vunpack.c.l.b16 %v2247
    %v2289 = vunpack.c.h.b16 %v2247
    %v2290 = vpack.c.b16 %v2286, %v2284
    %v2291 = vpack.c.b16 %v2287, %v2285
    %v2292 = vpack.c.b16 %v2288, %v2288
    %v2293 = vpack.c.b16 %v2289, %v2289
    %v2294 = vrot.slane %v2290, 1
    %v2295 = vrot.slane %v2292, 1
    %v2296 = vsel %vm568, %v2294, %v2295
    %v2297 = vrot.slane %v2291, 1
    %v2298 = vrot.slane %v2293, 1
    %v2299 = vsel %vm568, %v2297, %v2298
    %v2334 = vunpack.c.l.b16 %v2249
    %v2335 = vunpack.c.h.b16 %v2249
    %v2336 = vunpack.c.l.b16 %v2250
    %v2337 = vunpack.c.h.b16 %v2250
    %v2338 = vunpack.c.l.b16 %v2251
    %v2339 = vunpack.c.h.b16 %v2251
    %v2340 = vunpack.c.l.b16 %v2252
    %v2341 = vunpack.c.h.b16 %v2252
    %v2342 = vunpack.c.l.b16 %v2253
    %v2343 = vunpack.c.h.b16 %v2253
    %v2344 = vunpack.c.l.b16 %v2254
    %v2345 = vunpack.c.h.b16 %v2254
    %v2346 = vunpack.c.l.b16 %v2255
    %v2347 = vunpack.c.h.b16 %v2255
    %v2348 = vunpack.c.l.b16 %v2256
    %v2349 = vunpack.c.h.b16 %v2256
    %v2350 = vunpack.c.l.b16 %v2257
    %v2351 = vunpack.c.h.b16 %v2257
    %v2352 = vunpack.c.l.b16 %v2258
    %v2353 = vunpack.c.h.b16 %v2258
    %v2354 = vunpack.c.l.b16 %v2259
    %v2355 = vunpack.c.h.b16 %v2259
    %v2356 = vunpack.c.l.b16 %v2260
    %v2357 = vunpack.c.h.b16 %v2260
    %v2358 = vunpack.c.l.b16 %v2261
    %v2359 = vunpack.c.h.b16 %v2261
    %v2360 = vunpack.c.l.b16 %v2262
    %v2361 = vunpack.c.h.b16 %v2262
    %v2362 = vunpack.c.l.b16 %v2263
    %v2363 = vunpack.c.h.b16 %v2263
    %v2364 = vunpack.c.l.b16 %v2264
    %v2365 = vunpack.c.h.b16 %v2264
    %v2366 = vunpack.c.l.b16 %v2265
    %v2367 = vunpack.c.h.b16 %v2265
    %v2368 = vunpack.c.l.b16 %v2266
    %v2369 = vunpack.c.h.b16 %v2266
    %v2370 = vunpack.c.l.b16 %v2267
    %v2371 = vunpack.c.h.b16 %v2267
    %v2372 = vunpack.c.l.b16 %v2268
    %v2373 = vunpack.c.h.b16 %v2268
    %v2374 = vunpack.c.l.b16 %v2269
    %v2375 = vunpack.c.h.b16 %v2269
    %v2376 = vunpack.c.l.b16 %v2270
    %v2377 = vunpack.c.h.b16 %v2270
    %v2378 = vunpack.c.l.b16 %v2271
    %v2379 = vunpack.c.h.b16 %v2271
    %v2380 = vunpack.c.l.b16 %v2272
    %v2381 = vunpack.c.h.b16 %v2272
    %v2382 = vunpack.c.l.b16 %v2273
    %v2383 = vunpack.c.h.b16 %v2273
    %v2384 = vunpack.c.l.b16 %v2274
    %v2385 = vunpack.c.h.b16 %v2274
    %v2386 = vunpack.c.l.b16 %v2275
    %v2387 = vunpack.c.h.b16 %v2275
    %v2388 = vunpack.c.l.b16 %v2276
    %v2389 = vunpack.c.h.b16 %v2276
    %v2390 = vunpack.c.l.b16 %v2277
    %v2391 = vunpack.c.h.b16 %v2277
    %v2392 = vunpack.c.l.b16 %v2278
    %v2393 = vunpack.c.h.b16 %v2278
    %v2394 = vunpack.c.l.b16 %v2279
    %v2395 = vunpack.c.h.b16 %v2279
    %v2396 = vunpack.c.l.b16 %v2280
    %v2397 = vunpack.c.h.b16 %v2280
    %v2398 = vpack.c.b16 %v2336, %v2334
    %v2399 = vpack.c.b16 %v2337, %v2335
    %v2400 = vpack.c.b16 %v2340, %v2338
    %v2401 = vpack.c.b16 %v2341, %v2339
    %v2402 = vpack.c.b16 %v2344, %v2342
    %v2403 = vpack.c.b16 %v2345, %v2343
    %v2404 = vpack.c.b16 %v2348, %v2346
    %v2405 = vpack.c.b16 %v2349, %v2347
    %v2406 = vpack.c.b16 %v2352, %v2350
    %v2407 = vpack.c.b16 %v2353, %v2351
    %v2408 = vpack.c.b16 %v2356, %v2354
    %v2409 = vpack.c.b16 %v2357, %v2355
    %v2410 = vpack.c.b16 %v2360, %v2358
    %v2411 = vpack.c.b16 %v2361, %v2359
    %v2412 = vpack.c.b16 %v2364, %v2362
    %v2413 = vpack.c.b16 %v2365, %v2363
    %v2414 = vpack.c.b16 %v2368, %v2366
    %v2415 = vpack.c.b16 %v2369, %v2367
    %v2416 = vpack.c.b16 %v2372, %v2370
    %v2417 = vpack.c.b16 %v2373, %v2371
    %v2418 = vpack.c.b16 %v2376, %v2374
    %v2419 = vpack.c.b16 %v2377, %v2375
    %v2420 = vpack.c.b16 %v2380, %v2378
    %v2421 = vpack.c.b16 %v2381, %v2379
    %v2422 = vpack.c.b16 %v2384, %v2382
    %v2423 = vpack.c.b16 %v2385, %v2383
    %v2424 = vpack.c.b16 %v2388, %v2386
    %v2425 = vpack.c.b16 %v2389, %v2387
    %v2426 = vpack.c.b16 %v2392, %v2390
    %v2427 = vpack.c.b16 %v2393, %v2391
    %v2428 = vpack.c.b16 %v2396, %v2394
    %v2429 = vpack.c.b16 %v2397, %v2395
    %2462 = vmatprep.subr.bf16.mxu0 %v2413
    %2463 = vmatpush1.bf16.msra.mxu0 %v2412
    %2464 = vmatprep.subr.bf16.mxu0 %v2411
    %2465 = vmatpush1.bf16.msra.mxu0 %v2410
    %2466 = vmatprep.subr.bf16.mxu0 %v2409
    %2467 = vmatpush1.bf16.msra.mxu0 %v2408
    %2468 = vmatprep.subr.bf16.mxu0 %v2407
    %2469 = vmatpush1.bf16.msra.mxu0 %v2406
    %2470 = vmatprep.subr.bf16.mxu0 %v2405
    %2471 = vmatpush1.bf16.msra.mxu0 %v2404
    %2472 = vmatprep.subr.bf16.mxu0 %v2403
    %2473 = vmatpush1.bf16.msra.mxu0 %v2402
    %2474 = vmatprep.subr.bf16.mxu0 %v2401
    %2475 = vmatpush1.bf16.msra.mxu0 %v2400
    %2476 = vmatprep.subr.bf16.mxu0 %v2399
    %2477 = vmatpush1.bf16.msra.mxu0 %v2398
    %2478 = vmatprep.subr.bf16.mxu0 %v2429
    %2479 = vmatpush2.bf16.msra.mxu0 %v2428
    %2480 = vmatprep.subr.bf16.mxu0 %v2427
    %2481 = vmatpush2.bf16.msra.mxu0 %v2426
    %2482 = vmatprep.subr.bf16.mxu0 %v2425
    %2483 = vmatpush2.bf16.msra.mxu0 %v2424
    %2484 = vmatprep.subr.bf16.mxu0 %v2423
    %2485 = vmatpush2.bf16.msra.mxu0 %v2422
    %2486 = vmatprep.subr.bf16.mxu0 %v2421
    %2487 = vmatpush2.bf16.msra.mxu0 %v2420
    %2488 = vmatprep.subr.bf16.mxu0 %v2419
    %2489 = vmatpush2.bf16.msra.mxu0 %v2418
    %2490 = vmatprep.subr.bf16.mxu0 %v2417
    %2491 = vmatpush2.bf16.msra.mxu0 %v2416
    %2492 = vmatprep.subr.bf16.mxu0 %v2415
    %2493 = vmatpush2.bf16.msra.mxu0 %v2414
    %2494 = vmatprep.mubr.bf16.mxu0 %v2299
    %2495 = vmatmul.mubr.bf16.gmra.mxu0 %v2296
    %v2496 = vpop.f32.mrf.mxu0
    %v2497 = vadd.f32 0.0, %v2496
    %v2498 = vpop.f32.mrf.mxu0
    %v2499 = vadd.f32 0.0, %v2498
    %v2500 = vpop.f32.mrf.mxu0
    %v2501 = vadd.f32 0.0, %v2500
    %v2502 = vpop.f32.mrf.mxu0
    %v2503 = vadd.f32 0.0, %v2502
    %2504 = vdwg.mxu0
    %v2505 = vadd.f32 %v2241, %v2497
    %v2506 = vadd.f32 %v2242, %v2499
    %v2507 = vadd.f32 %v2243, %v2501
    %v2508 = vadd.f32 %v2244, %v2503
    %v2509 = vld [vmem:[#allocation2] sm:$0xcc]
    %v2510 = vld [vmem:[#allocation2 + $0x10] sm:$0x33]
    %s2511 = scalar_lea.vmem [#allocation4], 1024
    %v2512 = vld [vmem:[%s2511] sm:$0xff]
    %v2513 = vld [vmem:[%s2511 + $0x8] sm:$0xff]
    %v2514 = vld [vmem:[%s2511 + $0x10] sm:$0xff]
    %v2515 = vld [vmem:[%s2511 + $0x18] sm:$0xff]
    %v2516 = vld [vmem:[%s2511 + $0x20] sm:$0xff]
    %v2517 = vld [vmem:[%s2511 + $0x28] sm:$0xff]
    %v2518 = vld [vmem:[%s2511 + $0x30] sm:$0xff]
    %v2519 = vld [vmem:[%s2511 + $0x38] sm:$0xff]
    %v2520 = vld [vmem:[%s2511 + $0x40] sm:$0xff]
    %v2521 = vld [vmem:[%s2511 + $0x48] sm:$0xff]
    %v2522 = vld [vmem:[%s2511 + $0x50] sm:$0xff]
    %v2523 = vld [vmem:[%s2511 + $0x58] sm:$0xff]
    %v2524 = vld [vmem:[%s2511 + $0x60] sm:$0xff]
    %v2525 = vld [vmem:[%s2511 + $0x68] sm:$0xff]
    %v2526 = vld [vmem:[%s2511 + $0x70] sm:$0xff]
    %v2527 = vld [vmem:[%s2511 + $0x78] sm:$0xff]
    %v2528 = vld [vmem:[%s2511 + $0x80] sm:$0xff]
    %v2529 = vld [vmem:[%s2511 + $0x88] sm:$0xff]
    %v2530 = vld [vmem:[%s2511 + $0x90] sm:$0xff]
    %v2531 = vld [vmem:[%s2511 + $0x98] sm:$0xff]
    %v2532 = vld [vmem:[%s2511 + $0xa0] sm:$0xff]
    %v2533 = vld [vmem:[%s2511 + $0xa8] sm:$0xff]
    %v2534 = vld [vmem:[%s2511 + $0xb0] sm:$0xff]
    %v2535 = vld [vmem:[%s2511 + $0xb8] sm:$0xff]
    %v2536 = vld [vmem:[%s2511 + $0xc0] sm:$0xff]
    %v2537 = vld [vmem:[%s2511 + $0xc8] sm:$0xff]
    %v2538 = vld [vmem:[%s2511 + $0xd0] sm:$0xff]
    %v2539 = vld [vmem:[%s2511 + $0xd8] sm:$0xff]
    %v2540 = vld [vmem:[%s2511 + $0xe0] sm:$0xff]
    %v2541 = vld [vmem:[%s2511 + $0xe8] sm:$0xff]
    %v2542 = vld [vmem:[%s2511 + $0xf0] sm:$0xff]
    %v2543 = vld [vmem:[%s2511 + $0xf8] sm:$0xff]
    %v2546 = vunpack.c.l.b16 %v2509
    %v2547 = vunpack.c.h.b16 %v2509
    %v2548 = vunpack.c.l.b16 %v2510
    %v2549 = vunpack.c.h.b16 %v2510
    %v2550 = vpack.c.b16 %v2022, %v2546
    %v2551 = vpack.c.b16 %v2023, %v2547
    %v2552 = vpack.c.b16 %v2548, %v2548
    %v2553 = vpack.c.b16 %v2549, %v2549
    %vm2554 = vcmask 1045504
    %v2555 = vrot.slane %v2550, 2
    %v2556 = vrot.slane %v2552, 2
    %v2557 = vsel %vm2554, %v2555, %v2556
    %v2558 = vrot.slane %v2551, 2
    %v2559 = vrot.slane %v2553, 2
    %v2560 = vsel %vm2554, %v2558, %v2559
    %v2595 = vunpack.c.l.b16 %v2512
    %v2596 = vunpack.c.h.b16 %v2512
    %v2597 = vunpack.c.l.b16 %v2513
    %v2598 = vunpack.c.h.b16 %v2513
    %v2599 = vunpack.c.l.b16 %v2514
    %v2600 = vunpack.c.h.b16 %v2514
    %v2601 = vunpack.c.l.b16 %v2515
    %v2602 = vunpack.c.h.b16 %v2515
    %v2603 = vunpack.c.l.b16 %v2516
    %v2604 = vunpack.c.h.b16 %v2516
    %v2605 = vunpack.c.l.b16 %v2517
    %v2606 = vunpack.c.h.b16 %v2517
    %v2607 = vunpack.c.l.b16 %v2518
    %v2608 = vunpack.c.h.b16 %v2518
    %v2609 = vunpack.c.l.b16 %v2519
    %v2610 = vunpack.c.h.b16 %v2519
    %v2611 = vunpack.c.l.b16 %v2520
    %v2612 = vunpack.c.h.b16 %v2520
    %v2613 = vunpack.c.l.b16 %v2521
    %v2614 = vunpack.c.h.b16 %v2521
    %v2615 = vunpack.c.l.b16 %v2522
    %v2616 = vunpack.c.h.b16 %v2522
    %v2617 = vunpack.c.l.b16 %v2523
    %v2618 = vunpack.c.h.b16 %v2523
    %v2619 = vunpack.c.l.b16 %v2524
    %v2620 = vunpack.c.h.b16 %v2524
    %v2621 = vunpack.c.l.b16 %v2525
    %v2622 = vunpack.c.h.b16 %v2525
    %v2623 = vunpack.c.l.b16 %v2526
    %v2624 = vunpack.c.h.b16 %v2526
    %v2625 = vunpack.c.l.b16 %v2527
    %v2626 = vunpack.c.h.b16 %v2527
    %v2627 = vunpack.c.l.b16 %v2528
    %v2628 = vunpack.c.h.b16 %v2528
    %v2629 = vunpack.c.l.b16 %v2529
    %v2630 = vunpack.c.h.b16 %v2529
    %v2631 = vunpack.c.l.b16 %v2530
    %v2632 = vunpack.c.h.b16 %v2530
    %v2633 = vunpack.c.l.b16 %v2531
    %v2634 = vunpack.c.h.b16 %v2531
    %v2635 = vunpack.c.l.b16 %v2532
    %v2636 = vunpack.c.h.b16 %v2532
    %v2637 = vunpack.c.l.b16 %v2533
    %v2638 = vunpack.c.h.b16 %v2533
    %v2639 = vunpack.c.l.b16 %v2534
    %v2640 = vunpack.c.h.b16 %v2534
    %v2641 = vunpack.c.l.b16 %v2535
    %v2642 = vunpack.c.h.b16 %v2535
    %v2643 = vunpack.c.l.b16 %v2536
    %v2644 = vunpack.c.h.b16 %v2536
    %v2645 = vunpack.c.l.b16 %v2537
    %v2646 = vunpack.c.h.b16 %v2537
    %v2647 = vunpack.c.l.b16 %v2538
    %v2648 = vunpack.c.h.b16 %v2538
    %v2649 = vunpack.c.l.b16 %v2539
    %v2650 = vunpack.c.h.b16 %v2539
    %v2651 = vunpack.c.l.b16 %v2540
    %v2652 = vunpack.c.h.b16 %v2540
    %v2653 = vunpack.c.l.b16 %v2541
    %v2654 = vunpack.c.h.b16 %v2541
    %v2655 = vunpack.c.l.b16 %v2542
    %v2656 = vunpack.c.h.b16 %v2542
    %v2657 = vunpack.c.l.b16 %v2543
    %v2658 = vunpack.c.h.b16 %v2543
    %v2659 = vpack.c.b16 %v2597, %v2595
    %v2660 = vpack.c.b16 %v2598, %v2596
    %v2661 = vpack.c.b16 %v2601, %v2599
    %v2662 = vpack.c.b16 %v2602, %v2600
    %v2663 = vpack.c.b16 %v2605, %v2603
    %v2664 = vpack.c.b16 %v2606, %v2604
    %v2665 = vpack.c.b16 %v2609, %v2607
    %v2666 = vpack.c.b16 %v2610, %v2608
    %v2667 = vpack.c.b16 %v2613, %v2611
    %v2668 = vpack.c.b16 %v2614, %v2612
    %v2669 = vpack.c.b16 %v2617, %v2615
    %v2670 = vpack.c.b16 %v2618, %v2616
    %v2671 = vpack.c.b16 %v2621, %v2619
    %v2672 = vpack.c.b16 %v2622, %v2620
    %v2673 = vpack.c.b16 %v2625, %v2623
    %v2674 = vpack.c.b16 %v2626, %v2624
    %v2675 = vpack.c.b16 %v2629, %v2627
    %v2676 = vpack.c.b16 %v2630, %v2628
    %v2677 = vpack.c.b16 %v2633, %v2631
    %v2678 = vpack.c.b16 %v2634, %v2632
    %v2679 = vpack.c.b16 %v2637, %v2635
    %v2680 = vpack.c.b16 %v2638, %v2636
    %v2681 = vpack.c.b16 %v2641, %v2639
    %v2682 = vpack.c.b16 %v2642, %v2640
    %v2683 = vpack.c.b16 %v2645, %v2643
    %v2684 = vpack.c.b16 %v2646, %v2644
    %v2685 = vpack.c.b16 %v2649, %v2647
    %v2686 = vpack.c.b16 %v2650, %v2648
    %v2687 = vpack.c.b16 %v2653, %v2651
    %v2688 = vpack.c.b16 %v2654, %v2652
    %v2689 = vpack.c.b16 %v2657, %v2655
    %v2690 = vpack.c.b16 %v2658, %v2656
    %2723 = vmatprep.subr.bf16.mxu0 %v2674
    %2724 = vmatpush1.bf16.msra.mxu0 %v2673
    %2725 = vmatprep.subr.bf16.mxu0 %v2672
    %2726 = vmatpush1.bf16.msra.mxu0 %v2671
    %2727 = vmatprep.subr.bf16.mxu0 %v2670
    %2728 = vmatpush1.bf16.msra.mxu0 %v2669
    %2729 = vmatprep.subr.bf16.mxu0 %v2668
    %2730 = vmatpush1.bf16.msra.mxu0 %v2667
    %2731 = vmatprep.subr.bf16.mxu0 %v2666
    %2732 = vmatpush1.bf16.msra.mxu0 %v2665
    %2733 = vmatprep.subr.bf16.mxu0 %v2664
    %2734 = vmatpush1.bf16.msra.mxu0 %v2663
    %2735 = vmatprep.subr.bf16.mxu0 %v2662
    %2736 = vmatpush1.bf16.msra.mxu0 %v2661
    %2737 = vmatprep.subr.bf16.mxu0 %v2660
    %2738 = vmatpush1.bf16.msra.mxu0 %v2659
    %2739 = vmatprep.subr.bf16.mxu0 %v2690
    %2740 = vmatpush2.bf16.msra.mxu0 %v2689
    %2741 = vmatprep.subr.bf16.mxu0 %v2688
    %2742 = vmatpush2.bf16.msra.mxu0 %v2687
    %2743 = vmatprep.subr.bf16.mxu0 %v2686
    %2744 = vmatpush2.bf16.msra.mxu0 %v2685
    %2745 = vmatprep.subr.bf16.mxu0 %v2684
    %2746 = vmatpush2.bf16.msra.mxu0 %v2683
    %2747 = vmatprep.subr.bf16.mxu0 %v2682
    %2748 = vmatpush2.bf16.msra.mxu0 %v2681
    %2749 = vmatprep.subr.bf16.mxu0 %v2680
    %2750 = vmatpush2.bf16.msra.mxu0 %v2679
    %2751 = vmatprep.subr.bf16.mxu0 %v2678
    %2752 = vmatpush2.bf16.msra.mxu0 %v2677
    %2753 = vmatprep.subr.bf16.mxu0 %v2676
    %2754 = vmatpush2.bf16.msra.mxu0 %v2675
    %2755 = vmatprep.mubr.bf16.mxu0 %v2560
    %2756 = vmatmul.mubr.bf16.gmra.mxu0 %v2557
    %v2757 = vpop.f32.mrf.mxu0
    %v2758 = vadd.f32 0.0, %v2757
    %v2759 = vpop.f32.mrf.mxu0
    %v2760 = vadd.f32 0.0, %v2759
    %v2761 = vpop.f32.mrf.mxu0
    %v2762 = vadd.f32 0.0, %v2761
    %v2763 = vpop.f32.mrf.mxu0
    %v2764 = vadd.f32 0.0, %v2763
    %2765 = vdwg.mxu0
    %v2766 = vadd.f32 %v2505, %v2758
    %v2767 = vadd.f32 %v2506, %v2760
    %v2768 = vadd.f32 %v2507, %v2762
    %v2769 = vadd.f32 %v2508, %v2764
    %v2770 = vadd.f32 %v2766, %v2768
    %v2771 = vrot.slane %v2770, 4
    %v2772 = vadd.f32 %v2770, %v2771
    %v2773 = vrot.slane %v2772, 2
    %v2774 = vadd.f32 %v2772, %v2773
    %v2775 = vrot.slane %v2774, 1
    %v2776 = vadd.f32 %v2774, %v2775
    %v2777 = vadd.f32 %v2767, %v2769
    %v2778 = vrot.slane %v2777, 4
    %v2779 = vadd.f32 %v2777, %v2778
    %v2780 = vrot.slane %v2779, 2
    %v2781 = vadd.f32 %v2779, %v2780
    %v2782 = vrot.slane %v2781, 1
    %v2783 = vadd.f32 %v2781, %v2782
    %v2786 = vcombine.low %v2776, %v2783
    %v2788 = vunpack.c.l.s4 1966171168
    %v2789 = vunpack.c.0.s8 %v2788
    %v2790 = vlaneseq
    %v2791 = vshrl.u32 %v2790, 7
    %v2792 = vsub.s32 %v2789, %v2791
    %v2793 = vrot.slane %v2786, %v2792
    %v2795 = vunpack.c.l.s4 1966171168
    %v2796 = vunpack.c.0.s8 %v2795
    %v2797 = vlaneseq
    %v2798 = vshrl.u32 %v2797, 7
    %v2799 = vsub.s32 %v2796, %v2798
    %v2800 = vrot.slane %v2793, %v2799
    %2802 = vst.msk [vmem:[#allocation8] ss:$2 sm:$0x3] %vm1076, %v2800
    %v2803 = vmul.f32 %v2766, %v2766
    %v2804 = vmul.f32 %v2767, %v2767
    %v2805 = vmul.f32 %v2768, %v2768
    %v2806 = vmul.f32 %v2769, %v2769
    %v2807 = vadd.f32 %v2803, %v2805
    %v2808 = vrot.slane %v2807, 4
    %v2809 = vadd.f32 %v2807, %v2808
    %v2810 = vrot.slane %v2809, 2
    %v2811 = vadd.f32 %v2809, %v2810
    %v2812 = vrot.slane %v2811, 1
    %v2813 = vadd.f32 %v2811, %v2812
    %v2814 = vadd.f32 %v2804, %v2806
    %v2815 = vrot.slane %v2814, 4
    %v2816 = vadd.f32 %v2814, %v2815
    %v2817 = vrot.slane %v2816, 2
    %v2818 = vadd.f32 %v2816, %v2817
    %v2819 = vrot.slane %v2818, 1
    %v2820 = vadd.f32 %v2818, %v2819
    %v2823 = vcombine.low %v2813, %v2820
    %v2825 = vunpack.c.l.s4 1966171168
    %v2826 = vunpack.c.0.s8 %v2825
    %v2827 = vlaneseq
    %v2828 = vshrl.u32 %v2827, 7
    %v2829 = vsub.s32 %v2826, %v2828
    %v2830 = vrot.slane %v2823, %v2829
    %v2832 = vunpack.c.l.s4 1966171168
    %v2833 = vunpack.c.0.s8 %v2832
    %v2834 = vlaneseq
    %v2835 = vshrl.u32 %v2834, 7
    %v2836 = vsub.s32 %v2833, %v2835
    %v2837 = vrot.slane %v2830, %v2836
    %2839 = vst.msk [vmem:[%s1122] ss:$2 sm:$0x3] %vm1076, %v2837
    %v2840 = vld [vmem:[#allocation6] sm:$0xff]
    %v2841 = vld [vmem:[#allocation6 + $0x8] sm:$0xff]
    %v2842 = vld [vmem:[#allocation6 + $0x10] sm:$0xff]
    %v2843 = vld [vmem:[#allocation6 + $0x18] sm:$0xff]
    %v2844 = vld [vmem:[#allocation6 + $0x20] sm:$0xff]
    %v2845 = vld [vmem:[#allocation6 + $0x28] sm:$0xff]
    %v2846 = vld [vmem:[#allocation6 + $0x30] sm:$0xff]
    %v2847 = vld [vmem:[#allocation6 + $0x38] sm:$0xff]
    %v2848 = vld [vmem:[#allocation6 + $0x40] sm:$0xff]
    %v2849 = vld [vmem:[#allocation6 + $0x48] sm:$0xff]
    %v2850 = vld [vmem:[#allocation6 + $0x50] sm:$0xff]
    %v2851 = vld [vmem:[#allocation6 + $0x58] sm:$0xff]
    %v2852 = vld [vmem:[#allocation6 + $0x60] sm:$0xff]
    %v2853 = vld [vmem:[#allocation6 + $0x68] sm:$0xff]
    %v2854 = vld [vmem:[#allocation6 + $0x70] sm:$0xff]
    %v2855 = vld [vmem:[#allocation6 + $0x78] sm:$0xff]
    %v2856 = vld [vmem:[#allocation6 + $0x80] sm:$0xff]
    %v2857 = vld [vmem:[#allocation6 + $0x88] sm:$0xff]
    %v2858 = vld [vmem:[#allocation6 + $0x90] sm:$0xff]
    %v2859 = vld [vmem:[#allocation6 + $0x98] sm:$0xff]
    %v2860 = vld [vmem:[#allocation6 + $0xa0] sm:$0xff]
    %v2861 = vld [vmem:[#allocation6 + $0xa8] sm:$0xff]
    %v2862 = vld [vmem:[#allocation6 + $0xb0] sm:$0xff]
    %v2863 = vld [vmem:[#allocation6 + $0xb8] sm:$0xff]
    %v2864 = vld [vmem:[#allocation6 + $0xc0] sm:$0xff]
    %v2865 = vld [vmem:[#allocation6 + $0xc8] sm:$0xff]
    %v2866 = vld [vmem:[#allocation6 + $0xd0] sm:$0xff]
    %v2867 = vld [vmem:[#allocation6 + $0xd8] sm:$0xff]
    %v2868 = vld [vmem:[#allocation6 + $0xe0] sm:$0xff]
    %v2869 = vld [vmem:[#allocation6 + $0xe8] sm:$0xff]
    %v2870 = vld [vmem:[#allocation6 + $0xf0] sm:$0xff]
    %v2871 = vld [vmem:[#allocation6 + $0xf8] sm:$0xff]
    %v2872 = vunpack.c.l.bf16 %v2840
    %v2873 = vunpack.c.h.bf16 %v2840
    %v2874 = vunpack.c.l.bf16 %v2841
    %v2875 = vunpack.c.h.bf16 %v2841
    %v2876 = vunpack.c.l.bf16 %v2842
    %v2877 = vunpack.c.h.bf16 %v2842
    %v2878 = vunpack.c.l.bf16 %v2843
    %v2879 = vunpack.c.h.bf16 %v2843
    %v2880 = vunpack.c.l.bf16 %v2844
    %v2881 = vunpack.c.h.bf16 %v2844
    %v2882 = vunpack.c.l.bf16 %v2845
    %v2883 = vunpack.c.h.bf16 %v2845
    %v2884 = vunpack.c.l.bf16 %v2846
    %v2885 = vunpack.c.h.bf16 %v2846
    %v2886 = vunpack.c.l.bf16 %v2847
    %v2887 = vunpack.c.h.bf16 %v2847
    %v2888 = vunpack.c.l.bf16 %v2848
    %v2889 = vunpack.c.h.bf16 %v2848
    %v2890 = vunpack.c.l.bf16 %v2849
    %v2891 = vunpack.c.h.bf16 %v2849
    %v2892 = vunpack.c.l.bf16 %v2850
    %v2893 = vunpack.c.h.bf16 %v2850
    %v2894 = vunpack.c.l.bf16 %v2851
    %v2895 = vunpack.c.h.bf16 %v2851
    %v2896 = vunpack.c.l.bf16 %v2852
    %v2897 = vunpack.c.h.bf16 %v2852
    %v2898 = vunpack.c.l.bf16 %v2853
    %v2899 = vunpack.c.h.bf16 %v2853
    %v2900 = vunpack.c.l.bf16 %v2854
    %v2901 = vunpack.c.h.bf16 %v2854
    %v2902 = vunpack.c.l.bf16 %v2855
    %v2903 = vunpack.c.h.bf16 %v2855
    %v2904 = vunpack.c.l.bf16 %v2856
    %v2905 = vunpack.c.h.bf16 %v2856
    %v2906 = vunpack.c.l.bf16 %v2857
    %v2907 = vunpack.c.h.bf16 %v2857
    %v2908 = vunpack.c.l.bf16 %v2858
    %v2909 = vunpack.c.h.bf16 %v2858
    %v2910 = vunpack.c.l.bf16 %v2859
    %v2911 = vunpack.c.h.bf16 %v2859
    %v2912 = vunpack.c.l.bf16 %v2860
    %v2913 = vunpack.c.h.bf16 %v2860
    %v2914 = vunpack.c.l.bf16 %v2861
    %v2915 = vunpack.c.h.bf16 %v2861
    %v2916 = vunpack.c.l.bf16 %v2862
    %v2917 = vunpack.c.h.bf16 %v2862
    %v2918 = vunpack.c.l.bf16 %v2863
    %v2919 = vunpack.c.h.bf16 %v2863
    %v2920 = vunpack.c.l.bf16 %v2864
    %v2921 = vunpack.c.h.bf16 %v2864
    %v2922 = vunpack.c.l.bf16 %v2865
    %v2923 = vunpack.c.h.bf16 %v2865
    %v2924 = vunpack.c.l.bf16 %v2866
    %v2925 = vunpack.c.h.bf16 %v2866
    %v2926 = vunpack.c.l.bf16 %v2867
    %v2927 = vunpack.c.h.bf16 %v2867
    %v2928 = vunpack.c.l.bf16 %v2868
    %v2929 = vunpack.c.h.bf16 %v2868
    %v2930 = vunpack.c.l.bf16 %v2869
    %v2931 = vunpack.c.h.bf16 %v2869
    %v2932 = vunpack.c.l.bf16 %v2870
    %v2933 = vunpack.c.h.bf16 %v2870
    %v2934 = vunpack.c.l.bf16 %v2871
    %v2935 = vunpack.c.h.bf16 %v2871
    %v2936 = vld [vmem:[#allocation8] sm:$0xf]
    %v2939 = vunpack.c.l.s4 1983009808
    %v2940 = vunpack.c.0.s8 %v2939
    %v2941 = vlaneseq
    %v2942 = vshrl.u32 %v2941, 7
    %v2943 = vsub.s32 %v2940, %v2942
    %v2944 = vrot.slane %v2936, %v2943
    %v2945 = vcombine.high %v2944, %v2944
    %2948 = vmatprep.subr.mxu0 %v2903
    %2949 = vmatpush1.msra.mxu0 %v2902
    %2950 = vmatprep.subr.mxu0 %v2901
    %2951 = vmatpush1.msra.mxu0 %v2900
    %2952 = vmatprep.subr.mxu0 %v2899
    %2953 = vmatpush1.msra.mxu0 %v2898
    %2954 = vmatprep.subr.mxu0 %v2897
    %2955 = vmatpush1.msra.mxu0 %v2896
    %2956 = vmatprep.subr.mxu0 %v2895
    %2957 = vmatpush1.msra.mxu0 %v2894
    %2958 = vmatprep.subr.mxu0 %v2893
    %2959 = vmatpush1.msra.mxu0 %v2892
    %2960 = vmatprep.subr.mxu0 %v2891
    %2961 = vmatpush1.msra.mxu0 %v2890
    %2962 = vmatprep.subr.mxu0 %v2889
    %2963 = vmatpush1.msra.mxu0 %v2888
    %2964 = vmatprep.subr.mxu0 %v2887
    %2965 = vmatpush1.msra.mxu0 %v2886
    %2966 = vmatprep.subr.mxu0 %v2885
    %2967 = vmatpush1.msra.mxu0 %v2884
    %2968 = vmatprep.subr.mxu0 %v2883
    %2969 = vmatpush1.msra.mxu0 %v2882
    %2970 = vmatprep.subr.mxu0 %v2881
    %2971 = vmatpush1.msra.mxu0 %v2880
    %2972 = vmatprep.subr.mxu0 %v2879
    %2973 = vmatpush1.msra.mxu0 %v2878
    %2974 = vmatprep.subr.mxu0 %v2877
    %2975 = vmatpush1.msra.mxu0 %v2876
    %2976 = vmatprep.subr.mxu0 %v2875
    %2977 = vmatpush1.msra.mxu0 %v2874
    %2978 = vmatprep.subr.mxu0 %v2873
    %2979 = vmatpush1.msra.mxu0 %v2872
    %2980 = vmatprep.subr.mxu0 %v2935
    %2981 = vmatpush2.msra.mxu0 %v2934
    %2982 = vmatprep.subr.mxu0 %v2933
    %2983 = vmatpush2.msra.mxu0 %v2932
    %2984 = vmatprep.subr.mxu0 %v2931
    %2985 = vmatpush2.msra.mxu0 %v2930
    %2986 = vmatprep.subr.mxu0 %v2929
    %2987 = vmatpush2.msra.mxu0 %v2928
    %2988 = vmatprep.subr.mxu0 %v2927
    %2989 = vmatpush2.msra.mxu0 %v2926
    %2990 = vmatprep.subr.mxu0 %v2925
    %2991 = vmatpush2.msra.mxu0 %v2924
    %2992 = vmatprep.subr.mxu0 %v2923
    %2993 = vmatpush2.msra.mxu0 %v2922
    %2994 = vmatprep.subr.mxu0 %v2921
    %2995 = vmatpush2.msra.mxu0 %v2920
    %2996 = vmatprep.subr.mxu0 %v2919
    %2997 = vmatpush2.msra.mxu0 %v2918
    %2998 = vmatprep.subr.mxu0 %v2917
    %2999 = vmatpush2.msra.mxu0 %v2916
    %3000 = vmatprep.subr.mxu0 %v2915
    %3001 = vmatpush2.msra.mxu0 %v2914
    %3002 = vmatprep.subr.mxu0 %v2913
    %3003 = vmatpush2.msra.mxu0 %v2912
    %3004 = vmatprep.subr.mxu0 %v2911
    %3005 = vmatpush2.msra.mxu0 %v2910
    %3006 = vmatprep.subr.mxu0 %v2909
    %3007 = vmatpush2.msra.mxu0 %v2908
    %3008 = vmatprep.subr.mxu0 %v2907
    %3009 = vmatpush2.msra.mxu0 %v2906
    %3010 = vmatprep.subr.mxu0 %v2905
    %3011 = vmatpush2.msra.mxu0 %v2904
    %3012 = vmatprep.mubr.f32.mxu0 %v2945
    %3013 = vmatmul.mubr.f32.gmra.mxu0 %v2944
    %v3014 = vpop.f32.mrf.mxu0
    %v3015 = vadd.f32 0.0, %v3014
    %v3016 = vpop.f32.mrf.mxu0
    %v3017 = vadd.f32 0.0, %v3016
    %3018 = vdwg.mxu0
    %v3019 = vmul.f32 %v3015, 0.0078125
    %v3020 = vmul.f32 %v3017, 0.0078125
    %v3021 = vmul.f32 %v3019, %v3019
    %v3022 = vmul.f32 %v3020, %v3020
    %v3025 = vrot.slane %v3021, 7
    %v3026 = vrot.slane %v3022, 7
    %v3029 = vsub.f32 %v3019, %v3025
    %v3030 = vsub.f32 %v3020, %v3026
    %v3031 = vmax.f32 %v3029, 0.0
    %v3032 = vmax.f32 %v3030, 0.0
    %v3033 = vadd.f32 %v3031, 1e-05
    %v3034 = vadd.f32 %v3032, 1e-05
    %v3035 = vrsqrt.pop %v3033
    %v3036 = vrsqrt.pop %v3034
    %v3037 = vld [vmem:[#allocation13] sm:$0x3]
    %v3039 = vlaneseq
    %v3040 = vshrl.u32 %v3039, 7
    %v3041 = vsub.s32 0, %v3040
    %v3042 = vrot.slane %v3037, %v3041
    %v3043 = vlaneseq
    %v3044 = vshrl.u32 %v3043, 7
    %v3045 = vsub.s32 1, %v3044
    %v3046 = vrot.slane %v3037, %v3045
    %v3049 = vmul.f32 %v3035, %v3042
    %v3050 = vmul.f32 %v3036, %v3046
    %v3051 = vlaneseq
    %v3052 = vshrl.u32 %v3051, 7
    %v3053 = vsub.s32 0, %v3052
    %v3054 = vrot.slane %v3019, %v3053
    %v3055 = vlaneseq
    %v3056 = vshrl.u32 %v3055, 7
    %v3057 = vsub.s32 0, %v3056
    %v3058 = vrot.slane %v3020, %v3057
    %v3059 = vsub.f32 %v2766, %v3054
    %v3060 = vsub.f32 %v2767, %v3058
    %v3061 = vsub.f32 %v2768, %v3054
    %v3062 = vsub.f32 %v2769, %v3058
    %v3063 = vlaneseq
    %v3064 = vshrl.u32 %v3063, 7
    %v3065 = vsub.s32 1, %v3064
    %v3066 = vrot.slane %v3049, %v3065
    %v3067 = vlaneseq
    %v3068 = vshrl.u32 %v3067, 7
    %v3069 = vsub.s32 1, %v3068
    %v3070 = vrot.slane %v3050, %v3069
    %v3071 = vmul.f32 %v3059, %v3066
    %v3072 = vmul.f32 %v3060, %v3070
    %v3073 = vmul.f32 %v3061, %v3066
    %v3074 = vmul.f32 %v3062, %v3070
    %v3075 = vld [vmem:[#allocation15] sm:$0x3]
    %v3077 = vlaneseq
    %v3078 = vshrl.u32 %v3077, 7
    %v3079 = vsub.s32 0, %v3078
    %v3080 = vrot.slane %v3075, %v3079
    %v3081 = vlaneseq
    %v3082 = vshrl.u32 %v3081, 7
    %v3083 = vsub.s32 1, %v3082
    %v3084 = vrot.slane %v3075, %v3083
    %v3087 = vadd.f32 %v3071, %v3080
    %v3088 = vadd.f32 %v3072, %v3084
    %v3089 = vadd.f32 %v3073, %v3080
    %v3090 = vadd.f32 %v3074, %v3084
    %vm3091 = vcmp.ge.f32.partialorder %v3087, 0.0
    %vm3092 = vcmp.ge.f32.partialorder %v3088, 0.0
    %vm3093 = vcmp.ge.f32.partialorder %v3089, 0.0
    %vm3094 = vcmp.ge.f32.partialorder %v3090, 0.0
    %v3095 = vmul.f32 %v3087, 0.2
    %v3096 = vmul.f32 %v3088, 0.2
    %v3097 = vmul.f32 %v3089, 0.2
    %v3098 = vmul.f32 %v3090, 0.2
    %v3099 = vsel %vm3091, %v3087, %v3095
    %v3100 = vsel %vm3092, %v3088, %v3096
    %v3101 = vsel %vm3093, %v3089, %v3097
    %v3102 = vsel %vm3094, %v3090, %v3098
    %v3103 = vpack.c.bf16 %v3101, %v3099
    %v3104 = vpack.c.bf16 %v3102, %v3100
    %v3107 = vunpack.c.l.b16 %v3103
    %v3108 = vunpack.c.l.b16 %v3104
    %v3109 = vpack.c.b16 %v3108, %v3107
    %v3110 = vrot.slane %v3109, 7
    %3112 = vst [vmem:[#allocation3] sm:$0x22] %v3110
    %3114 = vst [vmem:[%s509] sm:$0x22] %v3109
    %3115 = vst [vmem:[#allocation3] sm:$0x44] %v3109
    %v3116 = vrot.slane %v3109, 5
    %v3117 = vrot.slane %v3116, 4
    %3119 = vst [vmem:[%s509] sm:$0x44] %v3117
    %v3120 = vunpack.c.h.b16 %v3103
    %v3121 = vunpack.c.h.b16 %v3104
    %v3122 = vpack.c.b16 %v3121, %v3120
    %v3123 = vrot.slane %v3122, 5
    %3125 = vst [vmem:[#allocation3] sm:$0x88] %v3123
    %v3126 = vrot.slane %v3122, 6
    %3128 = vst [vmem:[%s509] sm:$0x88] %v3126
    %v3129 = vrot.slane %v3126, 4
    %3131 = vst [vmem:[#allocation3 + $0x8] sm:$0x11] %v3129
    %v3132 = vrot.slane %v3122, 7
    %v3133 = vrot.slane %v3132, 4
    %3135 = vst [vmem:[%s509 + $0x8] sm:$0x11] %v3133
    %s3136 = sshll.u32 %s1479, 4
    %3137 = dma.done %s478, %s3136
    %s3138 = sshll.u32 %s1483, 4
    %3139 = dma.done %s490, %s3138
    %v3140 = vld [vmem:[#allocation3] sm:$0xff]
    %v3141 = vld [vmem:[#allocation5] sm:$0xff]
    %v3142 = vld [vmem:[#allocation5 + $0x8] sm:$0xff]
    %v3143 = vld [vmem:[#allocation5 + $0x10] sm:$0xff]
    %v3144 = vld [vmem:[#allocation5 + $0x18] sm:$0xff]
    %v3145 = vld [vmem:[#allocation5 + $0x20] sm:$0xff]
    %v3146 = vld [vmem:[#allocation5 + $0x28] sm:$0xff]
    %v3147 = vld [vmem:[#allocation5 + $0x30] sm:$0xff]
    %v3148 = vld [vmem:[#allocation5 + $0x38] sm:$0xff]
    %v3149 = vld [vmem:[#allocation5 + $0x40] sm:$0xff]
    %v3150 = vld [vmem:[#allocation5 + $0x48] sm:$0xff]
    %v3151 = vld [vmem:[#allocation5 + $0x50] sm:$0xff]
    %v3152 = vld [vmem:[#allocation5 + $0x58] sm:$0xff]
    %v3153 = vld [vmem:[#allocation5 + $0x60] sm:$0xff]
    %v3154 = vld [vmem:[#allocation5 + $0x68] sm:$0xff]
    %v3155 = vld [vmem:[#allocation5 + $0x70] sm:$0xff]
    %v3156 = vld [vmem:[#allocation5 + $0x78] sm:$0xff]
    %v3157 = vld [vmem:[#allocation5 + $0x80] sm:$0xff]
    %v3158 = vld [vmem:[#allocation5 + $0x88] sm:$0xff]
    %v3159 = vld [vmem:[#allocation5 + $0x90] sm:$0xff]
    %v3160 = vld [vmem:[#allocation5 + $0x98] sm:$0xff]
    %v3161 = vld [vmem:[#allocation5 + $0xa0] sm:$0xff]
    %v3162 = vld [vmem:[#allocation5 + $0xa8] sm:$0xff]
    %v3163 = vld [vmem:[#allocation5 + $0xb0] sm:$0xff]
    %v3164 = vld [vmem:[#allocation5 + $0xb8] sm:$0xff]
    %v3165 = vld [vmem:[#allocation5 + $0xc0] sm:$0xff]
    %v3166 = vld [vmem:[#allocation5 + $0xc8] sm:$0xff]
    %v3167 = vld [vmem:[#allocation5 + $0xd0] sm:$0xff]
    %v3168 = vld [vmem:[#allocation5 + $0xd8] sm:$0xff]
    %v3169 = vld [vmem:[#allocation5 + $0xe0] sm:$0xff]
    %v3170 = vld [vmem:[#allocation5 + $0xe8] sm:$0xff]
    %v3171 = vld [vmem:[#allocation5 + $0xf0] sm:$0xff]
    %v3172 = vld [vmem:[#allocation5 + $0xf8] sm:$0xff]
    %v3173 = vld [vmem:[%s509] sm:$0xff]
    %s3174 = scalar_lea.vmem [#allocation5], 256
    %v3175 = vld [vmem:[%s3174] sm:$0xff]
    %v3176 = vld [vmem:[%s3174 + $0x8] sm:$0xff]
    %v3177 = vld [vmem:[%s3174 + $0x10] sm:$0xff]
    %v3178 = vld [vmem:[%s3174 + $0x18] sm:$0xff]
    %v3179 = vld [vmem:[%s3174 + $0x20] sm:$0xff]
    %v3180 = vld [vmem:[%s3174 + $0x28] sm:$0xff]
    %v3181 = vld [vmem:[%s3174 + $0x30] sm:$0xff]
    %v3182 = vld [vmem:[%s3174 + $0x38] sm:$0xff]
    %v3183 = vld [vmem:[%s3174 + $0x40] sm:$0xff]
    %v3184 = vld [vmem:[%s3174 + $0x48] sm:$0xff]
    %v3185 = vld [vmem:[%s3174 + $0x50] sm:$0xff]
    %v3186 = vld [vmem:[%s3174 + $0x58] sm:$0xff]
    %v3187 = vld [vmem:[%s3174 + $0x60] sm:$0xff]
    %v3188 = vld [vmem:[%s3174 + $0x68] sm:$0xff]
    %v3189 = vld [vmem:[%s3174 + $0x70] sm:$0xff]
    %v3190 = vld [vmem:[%s3174 + $0x78] sm:$0xff]
    %v3191 = vld [vmem:[%s3174 + $0x80] sm:$0xff]
    %v3192 = vld [vmem:[%s3174 + $0x88] sm:$0xff]
    %v3193 = vld [vmem:[%s3174 + $0x90] sm:$0xff]
    %v3194 = vld [vmem:[%s3174 + $0x98] sm:$0xff]
    %v3195 = vld [vmem:[%s3174 + $0xa0] sm:$0xff]
    %v3196 = vld [vmem:[%s3174 + $0xa8] sm:$0xff]
    %v3197 = vld [vmem:[%s3174 + $0xb0] sm:$0xff]
    %v3198 = vld [vmem:[%s3174 + $0xb8] sm:$0xff]
    %v3199 = vld [vmem:[%s3174 + $0xc0] sm:$0xff]
    %v3200 = vld [vmem:[%s3174 + $0xc8] sm:$0xff]
    %v3201 = vld [vmem:[%s3174 + $0xd0] sm:$0xff]
    %v3202 = vld [vmem:[%s3174 + $0xd8] sm:$0xff]
    %v3203 = vld [vmem:[%s3174 + $0xe0] sm:$0xff]
    %v3204 = vld [vmem:[%s3174 + $0xe8] sm:$0xff]
    %v3205 = vld [vmem:[%s3174 + $0xf0] sm:$0xff]
    %v3206 = vld [vmem:[%s3174 + $0xf8] sm:$0xff]
    %v3208 = vunpack.c.l.b16 %v3173
    %v3209 = vunpack.c.h.b16 %v3173
    %v3210 = vpack.c.b16 %v3208, %v3208
    %v3211 = vpack.c.b16 %v3209, %v3209
    %v3246 = vunpack.c.l.b16 %v3175
    %v3247 = vunpack.c.h.b16 %v3175
    %v3248 = vunpack.c.l.b16 %v3176
    %v3249 = vunpack.c.h.b16 %v3176
    %v3250 = vunpack.c.l.b16 %v3177
    %v3251 = vunpack.c.h.b16 %v3177
    %v3252 = vunpack.c.l.b16 %v3178
    %v3253 = vunpack.c.h.b16 %v3178
    %v3254 = vunpack.c.l.b16 %v3179
    %v3255 = vunpack.c.h.b16 %v3179
    %v3256 = vunpack.c.l.b16 %v3180
    %v3257 = vunpack.c.h.b16 %v3180
    %v3258 = vunpack.c.l.b16 %v3181
    %v3259 = vunpack.c.h.b16 %v3181
    %v3260 = vunpack.c.l.b16 %v3182
    %v3261 = vunpack.c.h.b16 %v3182
    %v3262 = vunpack.c.l.b16 %v3183
    %v3263 = vunpack.c.h.b16 %v3183
    %v3264 = vunpack.c.l.b16 %v3184
    %v3265 = vunpack.c.h.b16 %v3184
    %v3266 = vunpack.c.l.b16 %v3185
    %v3267 = vunpack.c.h.b16 %v3185
    %v3268 = vunpack.c.l.b16 %v3186
    %v3269 = vunpack.c.h.b16 %v3186
    %v3270 = vunpack.c.l.b16 %v3187
    %v3271 = vunpack.c.h.b16 %v3187
    %v3272 = vunpack.c.l.b16 %v3188
    %v3273 = vunpack.c.h.b16 %v3188
    %v3274 = vunpack.c.l.b16 %v3189
    %v3275 = vunpack.c.h.b16 %v3189
    %v3276 = vunpack.c.l.b16 %v3190
    %v3277 = vunpack.c.h.b16 %v3190
    %v3278 = vunpack.c.l.b16 %v3191
    %v3279 = vunpack.c.h.b16 %v3191
    %v3280 = vunpack.c.l.b16 %v3192
    %v3281 = vunpack.c.h.b16 %v3192
    %v3282 = vunpack.c.l.b16 %v3193
    %v3283 = vunpack.c.h.b16 %v3193
    %v3284 = vunpack.c.l.b16 %v3194
    %v3285 = vunpack.c.h.b16 %v3194
    %v3286 = vunpack.c.l.b16 %v3195
    %v3287 = vunpack.c.h.b16 %v3195
    %v3288 = vunpack.c.l.b16 %v3196
    %v3289 = vunpack.c.h.b16 %v3196
    %v3290 = vunpack.c.l.b16 %v3197
    %v3291 = vunpack.c.h.b16 %v3197
    %v3292 = vunpack.c.l.b16 %v3198
    %v3293 = vunpack.c.h.b16 %v3198
    %v3294 = vunpack.c.l.b16 %v3199
    %v3295 = vunpack.c.h.b16 %v3199
    %v3296 = vunpack.c.l.b16 %v3200
    %v3297 = vunpack.c.h.b16 %v3200
    %v3298 = vunpack.c.l.b16 %v3201
    %v3299 = vunpack.c.h.b16 %v3201
    %v3300 = vunpack.c.l.b16 %v3202
    %v3301 = vunpack.c.h.b16 %v3202
    %v3302 = vunpack.c.l.b16 %v3203
    %v3303 = vunpack.c.h.b16 %v3203
    %v3304 = vunpack.c.l.b16 %v3204
    %v3305 = vunpack.c.h.b16 %v3204
    %v3306 = vunpack.c.l.b16 %v3205
    %v3307 = vunpack.c.h.b16 %v3205
    %v3308 = vunpack.c.l.b16 %v3206
    %v3309 = vunpack.c.h.b16 %v3206
    %v3310 = vpack.c.b16 %v3248, %v3246
    %v3311 = vpack.c.b16 %v3249, %v3247
    %v3312 = vpack.c.b16 %v3252, %v3250
    %v3313 = vpack.c.b16 %v3253, %v3251
    %v3314 = vpack.c.b16 %v3256, %v3254
    %v3315 = vpack.c.b16 %v3257, %v3255
    %v3316 = vpack.c.b16 %v3260, %v3258
    %v3317 = vpack.c.b16 %v3261, %v3259
    %v3318 = vpack.c.b16 %v3264, %v3262
    %v3319 = vpack.c.b16 %v3265, %v3263
    %v3320 = vpack.c.b16 %v3268, %v3266
    %v3321 = vpack.c.b16 %v3269, %v3267
    %v3322 = vpack.c.b16 %v3272, %v3270
    %v3323 = vpack.c.b16 %v3273, %v3271
    %v3324 = vpack.c.b16 %v3276, %v3274
    %v3325 = vpack.c.b16 %v3277, %v3275
    %v3326 = vpack.c.b16 %v3280, %v3278
    %v3327 = vpack.c.b16 %v3281, %v3279
    %v3328 = vpack.c.b16 %v3284, %v3282
    %v3329 = vpack.c.b16 %v3285, %v3283
    %v3330 = vpack.c.b16 %v3288, %v3286
    %v3331 = vpack.c.b16 %v3289, %v3287
    %v3332 = vpack.c.b16 %v3292, %v3290
    %v3333 = vpack.c.b16 %v3293, %v3291
    %v3334 = vpack.c.b16 %v3296, %v3294
    %v3335 = vpack.c.b16 %v3297, %v3295
    %v3336 = vpack.c.b16 %v3300, %v3298
    %v3337 = vpack.c.b16 %v3301, %v3299
    %v3338 = vpack.c.b16 %v3304, %v3302
    %v3339 = vpack.c.b16 %v3305, %v3303
    %v3340 = vpack.c.b16 %v3308, %v3306
    %v3341 = vpack.c.b16 %v3309, %v3307
    %3374 = vmatprep.subr.bf16.mxu0 %v3325
    %3375 = vmatpush1.bf16.msra.mxu0 %v3324
    %3376 = vmatprep.subr.bf16.mxu0 %v3323
    %3377 = vmatpush1.bf16.msra.mxu0 %v3322
    %3378 = vmatprep.subr.bf16.mxu0 %v3321
    %3379 = vmatpush1.bf16.msra.mxu0 %v3320
    %3380 = vmatprep.subr.bf16.mxu0 %v3319
    %3381 = vmatpush1.bf16.msra.mxu0 %v3318
    %3382 = vmatprep.subr.bf16.mxu0 %v3317
    %3383 = vmatpush1.bf16.msra.mxu0 %v3316
    %3384 = vmatprep.subr.bf16.mxu0 %v3315
    %3385 = vmatpush1.bf16.msra.mxu0 %v3314
    %3386 = vmatprep.subr.bf16.mxu0 %v3313
    %3387 = vmatpush1.bf16.msra.mxu0 %v3312
    %3388 = vmatprep.subr.bf16.mxu0 %v3311
    %3389 = vmatpush1.bf16.msra.mxu0 %v3310
    %3390 = vmatprep.subr.bf16.mxu0 %v3341
    %3391 = vmatpush2.bf16.msra.mxu0 %v3340
    %3392 = vmatprep.subr.bf16.mxu0 %v3339
    %3393 = vmatpush2.bf16.msra.mxu0 %v3338
    %3394 = vmatprep.subr.bf16.mxu0 %v3337
    %3395 = vmatpush2.bf16.msra.mxu0 %v3336
    %3396 = vmatprep.subr.bf16.mxu0 %v3335
    %3397 = vmatpush2.bf16.msra.mxu0 %v3334
    %3398 = vmatprep.subr.bf16.mxu0 %v3333
    %3399 = vmatpush2.bf16.msra.mxu0 %v3332
    %3400 = vmatprep.subr.bf16.mxu0 %v3331
    %3401 = vmatpush2.bf16.msra.mxu0 %v3330
    %3402 = vmatprep.subr.bf16.mxu0 %v3329
    %3403 = vmatpush2.bf16.msra.mxu0 %v3328
    %3404 = vmatprep.subr.bf16.mxu0 %v3327
    %3405 = vmatpush2.bf16.msra.mxu0 %v3326
    %3406 = vmatprep.mubr.bf16.mxu0 %v3211
    %3407 = vmatmul.mubr.bf16.gmra.mxu0 %v3210
    %v3408 = vpop.f32.mrf.mxu0
    %v3409 = vadd.f32 0.0, %v3408
    %v3410 = vpop.f32.mrf.mxu0
    %v3411 = vadd.f32 0.0, %v3410
    %v3412 = vpop.f32.mrf.mxu0
    %v3413 = vpop.f32.mrf.mxu0
    %3414 = vdwg.mxu0
    %v3416 = vunpack.c.l.b16 %v3140
    %v3417 = vunpack.c.h.b16 %v3140
    %v3418 = vpack.c.b16 %v3416, %v3416
    %v3419 = vpack.c.b16 %v3417, %v3417
    %v3454 = vunpack.c.l.b16 %v3141
    %v3455 = vunpack.c.h.b16 %v3141
    %v3456 = vunpack.c.l.b16 %v3142
    %v3457 = vunpack.c.h.b16 %v3142
    %v3458 = vunpack.c.l.b16 %v3143
    %v3459 = vunpack.c.h.b16 %v3143
    %v3460 = vunpack.c.l.b16 %v3144
    %v3461 = vunpack.c.h.b16 %v3144
    %v3462 = vunpack.c.l.b16 %v3145
    %v3463 = vunpack.c.h.b16 %v3145
    %v3464 = vunpack.c.l.b16 %v3146
    %v3465 = vunpack.c.h.b16 %v3146
    %v3466 = vunpack.c.l.b16 %v3147
    %v3467 = vunpack.c.h.b16 %v3147
    %v3468 = vunpack.c.l.b16 %v3148
    %v3469 = vunpack.c.h.b16 %v3148
    %v3470 = vunpack.c.l.b16 %v3149
    %v3471 = vunpack.c.h.b16 %v3149
    %v3472 = vunpack.c.l.b16 %v3150
    %v3473 = vunpack.c.h.b16 %v3150
    %v3474 = vunpack.c.l.b16 %v3151
    %v3475 = vunpack.c.h.b16 %v3151
    %v3476 = vunpack.c.l.b16 %v3152
    %v3477 = vunpack.c.h.b16 %v3152
    %v3478 = vunpack.c.l.b16 %v3153
    %v3479 = vunpack.c.h.b16 %v3153
    %v3480 = vunpack.c.l.b16 %v3154
    %v3481 = vunpack.c.h.b16 %v3154
    %v3482 = vunpack.c.l.b16 %v3155
    %v3483 = vunpack.c.h.b16 %v3155
    %v3484 = vunpack.c.l.b16 %v3156
    %v3485 = vunpack.c.h.b16 %v3156
    %v3486 = vunpack.c.l.b16 %v3157
    %v3487 = vunpack.c.h.b16 %v3157
    %v3488 = vunpack.c.l.b16 %v3158
    %v3489 = vunpack.c.h.b16 %v3158
    %v3490 = vunpack.c.l.b16 %v3159
    %v3491 = vunpack.c.h.b16 %v3159
    %v3492 = vunpack.c.l.b16 %v3160
    %v3493 = vunpack.c.h.b16 %v3160
    %v3494 = vunpack.c.l.b16 %v3161
    %v3495 = vunpack.c.h.b16 %v3161
    %v3496 = vunpack.c.l.b16 %v3162
    %v3497 = vunpack.c.h.b16 %v3162
    %v3498 = vunpack.c.l.b16 %v3163
    %v3499 = vunpack.c.h.b16 %v3163
    %v3500 = vunpack.c.l.b16 %v3164
    %v3501 = vunpack.c.h.b16 %v3164
    %v3502 = vunpack.c.l.b16 %v3165
    %v3503 = vunpack.c.h.b16 %v3165
    %v3504 = vunpack.c.l.b16 %v3166
    %v3505 = vunpack.c.h.b16 %v3166
    %v3506 = vunpack.c.l.b16 %v3167
    %v3507 = vunpack.c.h.b16 %v3167
    %v3508 = vunpack.c.l.b16 %v3168
    %v3509 = vunpack.c.h.b16 %v3168
    %v3510 = vunpack.c.l.b16 %v3169
    %v3511 = vunpack.c.h.b16 %v3169
    %v3512 = vunpack.c.l.b16 %v3170
    %v3513 = vunpack.c.h.b16 %v3170
    %v3514 = vunpack.c.l.b16 %v3171
    %v3515 = vunpack.c.h.b16 %v3171
    %v3516 = vunpack.c.l.b16 %v3172
    %v3517 = vunpack.c.h.b16 %v3172
    %v3518 = vpack.c.b16 %v3456, %v3454
    %v3519 = vpack.c.b16 %v3457, %v3455
    %v3520 = vpack.c.b16 %v3460, %v3458
    %v3521 = vpack.c.b16 %v3461, %v3459
    %v3522 = vpack.c.b16 %v3464, %v3462
    %v3523 = vpack.c.b16 %v3465, %v3463
    %v3524 = vpack.c.b16 %v3468, %v3466
    %v3525 = vpack.c.b16 %v3469, %v3467
    %v3526 = vpack.c.b16 %v3472, %v3470
    %v3527 = vpack.c.b16 %v3473, %v3471
    %v3528 = vpack.c.b16 %v3476, %v3474
    %v3529 = vpack.c.b16 %v3477, %v3475
    %v3530 = vpack.c.b16 %v3480, %v3478
    %v3531 = vpack.c.b16 %v3481, %v3479
    %v3532 = vpack.c.b16 %v3484, %v3482
    %v3533 = vpack.c.b16 %v3485, %v3483
    %v3534 = vpack.c.b16 %v3488, %v3486
    %v3535 = vpack.c.b16 %v3489, %v3487
    %v3536 = vpack.c.b16 %v3492, %v3490
    %v3537 = vpack.c.b16 %v3493, %v3491
    %v3538 = vpack.c.b16 %v3496, %v3494
    %v3539 = vpack.c.b16 %v3497, %v3495
    %v3540 = vpack.c.b16 %v3500, %v3498
    %v3541 = vpack.c.b16 %v3501, %v3499
    %v3542 = vpack.c.b16 %v3504, %v3502
    %v3543 = vpack.c.b16 %v3505, %v3503
    %v3544 = vpack.c.b16 %v3508, %v3506
    %v3545 = vpack.c.b16 %v3509, %v3507
    %v3546 = vpack.c.b16 %v3512, %v3510
    %v3547 = vpack.c.b16 %v3513, %v3511
    %v3548 = vpack.c.b16 %v3516, %v3514
    %v3549 = vpack.c.b16 %v3517, %v3515
    %3582 = vmatprep.subr.bf16.mxu0 %v3533
    %3583 = vmatpush1.bf16.msra.mxu0 %v3532
    %3584 = vmatprep.subr.bf16.mxu0 %v3531
    %3585 = vmatpush1.bf16.msra.mxu0 %v3530
    %3586 = vmatprep.subr.bf16.mxu0 %v3529
    %3587 = vmatpush1.bf16.msra.mxu0 %v3528
    %3588 = vmatprep.subr.bf16.mxu0 %v3527
    %3589 = vmatpush1.bf16.msra.mxu0 %v3526
    %3590 = vmatprep.subr.bf16.mxu0 %v3525
    %3591 = vmatpush1.bf16.msra.mxu0 %v3524
    %3592 = vmatprep.subr.bf16.mxu0 %v3523
    %3593 = vmatpush1.bf16.msra.mxu0 %v3522
    %3594 = vmatprep.subr.bf16.mxu0 %v3521
    %3595 = vmatpush1.bf16.msra.mxu0 %v3520
    %3596 = vmatprep.subr.bf16.mxu0 %v3519
    %3597 = vmatpush1.bf16.msra.mxu0 %v3518
    %3598 = vmatprep.subr.bf16.mxu0 %v3549
    %3599 = vmatpush2.bf16.msra.mxu0 %v3548
    %3600 = vmatprep.subr.bf16.mxu0 %v3547
    %3601 = vmatpush2.bf16.msra.mxu0 %v3546
    %3602 = vmatprep.subr.bf16.mxu0 %v3545
    %3603 = vmatpush2.bf16.msra.mxu0 %v3544
    %3604 = vmatprep.subr.bf16.mxu0 %v3543
    %3605 = vmatpush2.bf16.msra.mxu0 %v3542
    %3606 = vmatprep.subr.bf16.mxu0 %v3541
    %3607 = vmatpush2.bf16.msra.mxu0 %v3540
    %3608 = vmatprep.subr.bf16.mxu0 %v3539
    %3609 = vmatpush2.bf16.msra.mxu0 %v3538
    %3610 = vmatprep.subr.bf16.mxu0 %v3537
    %3611 = vmatpush2.bf16.msra.mxu0 %v3536
    %3612 = vmatprep.subr.bf16.mxu0 %v3535
    %3613 = vmatpush2.bf16.msra.mxu0 %v3534
    %3614 = vmatprep.mubr.bf16.mxu0 %v3419
    %3615 = vmatmul.mubr.bf16.gmra.mxu0 %v3418
    %v3616 = vpop.f32.mrf.mxu0
    %v3617 = vadd.f32 %v3409, %v3616
    %v3618 = vpop.f32.mrf.mxu0
    %v3619 = vadd.f32 %v3411, %v3618
    %v3620 = vpop.f32.mrf.mxu0
    %v3621 = vpop.f32.mrf.mxu0
    %3622 = vdwg.mxu0
    %v3623 = vld [vmem:[#allocation3] sm:$0xee]
    %v3624 = vld [vmem:[#allocation3 + $0x8] sm:$0x11]
    %s3625 = scalar_lea.vmem [#allocation5], 512
    %v3626 = vld [vmem:[%s3625] sm:$0xff]
    %v3627 = vld [vmem:[%s3625 + $0x8] sm:$0xff]
    %v3628 = vld [vmem:[%s3625 + $0x10] sm:$0xff]
    %v3629 = vld [vmem:[%s3625 + $0x18] sm:$0xff]
    %v3630 = vld [vmem:[%s3625 + $0x20] sm:$0xff]
    %v3631 = vld [vmem:[%s3625 + $0x28] sm:$0xff]
    %v3632 = vld [vmem:[%s3625 + $0x30] sm:$0xff]
    %v3633 = vld [vmem:[%s3625 + $0x38] sm:$0xff]
    %v3634 = vld [vmem:[%s3625 + $0x40] sm:$0xff]
    %v3635 = vld [vmem:[%s3625 + $0x48] sm:$0xff]
    %v3636 = vld [vmem:[%s3625 + $0x50] sm:$0xff]
    %v3637 = vld [vmem:[%s3625 + $0x58] sm:$0xff]
    %v3638 = vld [vmem:[%s3625 + $0x60] sm:$0xff]
    %v3639 = vld [vmem:[%s3625 + $0x68] sm:$0xff]
    %v3640 = vld [vmem:[%s3625 + $0x70] sm:$0xff]
    %v3641 = vld [vmem:[%s3625 + $0x78] sm:$0xff]
    %v3642 = vld [vmem:[%s3625 + $0x80] sm:$0xff]
    %v3643 = vld [vmem:[%s3625 + $0x88] sm:$0xff]
    %v3644 = vld [vmem:[%s3625 + $0x90] sm:$0xff]
    %v3645 = vld [vmem:[%s3625 + $0x98] sm:$0xff]
    %v3646 = vld [vmem:[%s3625 + $0xa0] sm:$0xff]
    %v3647 = vld [vmem:[%s3625 + $0xa8] sm:$0xff]
    %v3648 = vld [vmem:[%s3625 + $0xb0] sm:$0xff]
    %v3649 = vld [vmem:[%s3625 + $0xb8] sm:$0xff]
    %v3650 = vld [vmem:[%s3625 + $0xc0] sm:$0xff]
    %v3651 = vld [vmem:[%s3625 + $0xc8] sm:$0xff]
    %v3652 = vld [vmem:[%s3625 + $0xd0] sm:$0xff]
    %v3653 = vld [vmem:[%s3625 + $0xd8] sm:$0xff]
    %v3654 = vld [vmem:[%s3625 + $0xe0] sm:$0xff]
    %v3655 = vld [vmem:[%s3625 + $0xe8] sm:$0xff]
    %v3656 = vld [vmem:[%s3625 + $0xf0] sm:$0xff]
    %v3657 = vld [vmem:[%s3625 + $0xf8] sm:$0xff]
    %v3660 = vunpack.c.l.b16 %v3623
    %v3661 = vunpack.c.h.b16 %v3623
    %v3662 = vunpack.c.l.b16 %v3624
    %v3663 = vunpack.c.h.b16 %v3624
    %v3664 = vpack.c.b16 %v3662, %v3660
    %v3665 = vpack.c.b16 %v3663, %v3661
    %v3666 = vrot.slane %v3664, 1
    %v3667 = vrot.slane %v3665, 1
    %v3702 = vunpack.c.l.b16 %v3626
    %v3703 = vunpack.c.h.b16 %v3626
    %v3704 = vunpack.c.l.b16 %v3627
    %v3705 = vunpack.c.h.b16 %v3627
    %v3706 = vunpack.c.l.b16 %v3628
    %v3707 = vunpack.c.h.b16 %v3628
    %v3708 = vunpack.c.l.b16 %v3629
    %v3709 = vunpack.c.h.b16 %v3629
    %v3710 = vunpack.c.l.b16 %v3630
    %v3711 = vunpack.c.h.b16 %v3630
    %v3712 = vunpack.c.l.b16 %v3631
    %v3713 = vunpack.c.h.b16 %v3631
    %v3714 = vunpack.c.l.b16 %v3632
    %v3715 = vunpack.c.h.b16 %v3632
    %v3716 = vunpack.c.l.b16 %v3633
    %v3717 = vunpack.c.h.b16 %v3633
    %v3718 = vunpack.c.l.b16 %v3634
    %v3719 = vunpack.c.h.b16 %v3634
    %v3720 = vunpack.c.l.b16 %v3635
    %v3721 = vunpack.c.h.b16 %v3635
    %v3722 = vunpack.c.l.b16 %v3636
    %v3723 = vunpack.c.h.b16 %v3636
    %v3724 = vunpack.c.l.b16 %v3637
    %v3725 = vunpack.c.h.b16 %v3637
    %v3726 = vunpack.c.l.b16 %v3638
    %v3727 = vunpack.c.h.b16 %v3638
    %v3728 = vunpack.c.l.b16 %v3639
    %v3729 = vunpack.c.h.b16 %v3639
    %v3730 = vunpack.c.l.b16 %v3640
    %v3731 = vunpack.c.h.b16 %v3640
    %v3732 = vunpack.c.l.b16 %v3641
    %v3733 = vunpack.c.h.b16 %v3641
    %v3734 = vunpack.c.l.b16 %v3642
    %v3735 = vunpack.c.h.b16 %v3642
    %v3736 = vunpack.c.l.b16 %v3643
    %v3737 = vunpack.c.h.b16 %v3643
    %v3738 = vunpack.c.l.b16 %v3644
    %v3739 = vunpack.c.h.b16 %v3644
    %v3740 = vunpack.c.l.b16 %v3645
    %v3741 = vunpack.c.h.b16 %v3645
    %v3742 = vunpack.c.l.b16 %v3646
    %v3743 = vunpack.c.h.b16 %v3646
    %v3744 = vunpack.c.l.b16 %v3647
    %v3745 = vunpack.c.h.b16 %v3647
    %v3746 = vunpack.c.l.b16 %v3648
    %v3747 = vunpack.c.h.b16 %v3648
    %v3748 = vunpack.c.l.b16 %v3649
    %v3749 = vunpack.c.h.b16 %v3649
    %v3750 = vunpack.c.l.b16 %v3650
    %v3751 = vunpack.c.h.b16 %v3650
    %v3752 = vunpack.c.l.b16 %v3651
    %v3753 = vunpack.c.h.b16 %v3651
    %v3754 = vunpack.c.l.b16 %v3652
    %v3755 = vunpack.c.h.b16 %v3652
    %v3756 = vunpack.c.l.b16 %v3653
    %v3757 = vunpack.c.h.b16 %v3653
    %v3758 = vunpack.c.l.b16 %v3654
    %v3759 = vunpack.c.h.b16 %v3654
    %v3760 = vunpack.c.l.b16 %v3655
    %v3761 = vunpack.c.h.b16 %v3655
    %v3762 = vunpack.c.l.b16 %v3656
    %v3763 = vunpack.c.h.b16 %v3656
    %v3764 = vunpack.c.l.b16 %v3657
    %v3765 = vunpack.c.h.b16 %v3657
    %v3766 = vpack.c.b16 %v3704, %v3702
    %v3767 = vpack.c.b16 %v3705, %v3703
    %v3768 = vpack.c.b16 %v3708, %v3706
    %v3769 = vpack.c.b16 %v3709, %v3707
    %v3770 = vpack.c.b16 %v3712, %v3710
    %v3771 = vpack.c.b16 %v3713, %v3711
    %v3772 = vpack.c.b16 %v3716, %v3714
    %v3773 = vpack.c.b16 %v3717, %v3715
    %v3774 = vpack.c.b16 %v3720, %v3718
    %v3775 = vpack.c.b16 %v3721, %v3719
    %v3776 = vpack.c.b16 %v3724, %v3722
    %v3777 = vpack.c.b16 %v3725, %v3723
    %v3778 = vpack.c.b16 %v3728, %v3726
    %v3779 = vpack.c.b16 %v3729, %v3727
    %v3780 = vpack.c.b16 %v3732, %v3730
    %v3781 = vpack.c.b16 %v3733, %v3731
    %v3782 = vpack.c.b16 %v3736, %v3734
    %v3783 = vpack.c.b16 %v3737, %v3735
    %v3784 = vpack.c.b16 %v3740, %v3738
    %v3785 = vpack.c.b16 %v3741, %v3739
    %v3786 = vpack.c.b16 %v3744, %v3742
    %v3787 = vpack.c.b16 %v3745, %v3743
    %v3788 = vpack.c.b16 %v3748, %v3746
    %v3789 = vpack.c.b16 %v3749, %v3747
    %v3790 = vpack.c.b16 %v3752, %v3750
    %v3791 = vpack.c.b16 %v3753, %v3751
    %v3792 = vpack.c.b16 %v3756, %v3754
    %v3793 = vpack.c.b16 %v3757, %v3755
    %v3794 = vpack.c.b16 %v3760, %v3758
    %v3795 = vpack.c.b16 %v3761, %v3759
    %v3796 = vpack.c.b16 %v3764, %v3762
    %v3797 = vpack.c.b16 %v3765, %v3763
    %3830 = vmatprep.subr.bf16.mxu0 %v3781
    %3831 = vmatpush1.bf16.msra.mxu0 %v3780
    %3832 = vmatprep.subr.bf16.mxu0 %v3779
    %3833 = vmatpush1.bf16.msra.mxu0 %v3778
    %3834 = vmatprep.subr.bf16.mxu0 %v3777
    %3835 = vmatpush1.bf16.msra.mxu0 %v3776
    %3836 = vmatprep.subr.bf16.mxu0 %v3775
    %3837 = vmatpush1.bf16.msra.mxu0 %v3774
    %3838 = vmatprep.subr.bf16.mxu0 %v3773
    %3839 = vmatpush1.bf16.msra.mxu0 %v3772
    %3840 = vmatprep.subr.bf16.mxu0 %v3771
    %3841 = vmatpush1.bf16.msra.mxu0 %v3770
    %3842 = vmatprep.subr.bf16.mxu0 %v3769
    %3843 = vmatpush1.bf16.msra.mxu0 %v3768
    %3844 = vmatprep.subr.bf16.mxu0 %v3767
    %3845 = vmatpush1.bf16.msra.mxu0 %v3766
    %3846 = vmatprep.subr.bf16.mxu0 %v3797
    %3847 = vmatpush2.bf16.msra.mxu0 %v3796
    %3848 = vmatprep.subr.bf16.mxu0 %v3795
    %3849 = vmatpush2.bf16.msra.mxu0 %v3794
    %3850 = vmatprep.subr.bf16.mxu0 %v3793
    %3851 = vmatpush2.bf16.msra.mxu0 %v3792
    %3852 = vmatprep.subr.bf16.mxu0 %v3791
    %3853 = vmatpush2.bf16.msra.mxu0 %v3790
    %3854 = vmatprep.subr.bf16.mxu0 %v3789
    %3855 = vmatpush2.bf16.msra.mxu0 %v3788
    %3856 = vmatprep.subr.bf16.mxu0 %v3787
    %3857 = vmatpush2.bf16.msra.mxu0 %v3786
    %3858 = vmatprep.subr.bf16.mxu0 %v3785
    %3859 = vmatpush2.bf16.msra.mxu0 %v3784
    %3860 = vmatprep.subr.bf16.mxu0 %v3783
    %3861 = vmatpush2.bf16.msra.mxu0 %v3782
    %3862 = vmatprep.mubr.bf16.mxu0 %v3667
    %3863 = vmatmul.mubr.bf16.gmra.mxu0 %v3666
    %v3864 = vpop.f32.mrf.mxu0
    %v3865 = vadd.f32 0.0, %v3864
    %v3866 = vpop.f32.mrf.mxu0
    %v3867 = vadd.f32 0.0, %v3866
    %v3868 = vpop.f32.mrf.mxu0
    %v3869 = vpop.f32.mrf.mxu0
    %3870 = vdwg.mxu0
    %v3871 = vadd.f32 %v3617, %v3865
    %v3872 = vadd.f32 %v3619, %v3867
    %v3873 = vld [vmem:[%s509] sm:$0xee]
    %v3874 = vld [vmem:[%s509 + $0x8] sm:$0x11]
    %s3875 = scalar_lea.vmem [#allocation5], 768
    %v3876 = vld [vmem:[%s3875] sm:$0xff]
    %v3877 = vld [vmem:[%s3875 + $0x8] sm:$0xff]
    %v3878 = vld [vmem:[%s3875 + $0x10] sm:$0xff]
    %v3879 = vld [vmem:[%s3875 + $0x18] sm:$0xff]
    %v3880 = vld [vmem:[%s3875 + $0x20] sm:$0xff]
    %v3881 = vld [vmem:[%s3875 + $0x28] sm:$0xff]
    %v3882 = vld [vmem:[%s3875 + $0x30] sm:$0xff]
    %v3883 = vld [vmem:[%s3875 + $0x38] sm:$0xff]
    %v3884 = vld [vmem:[%s3875 + $0x40] sm:$0xff]
    %v3885 = vld [vmem:[%s3875 + $0x48] sm:$0xff]
    %v3886 = vld [vmem:[%s3875 + $0x50] sm:$0xff]
    %v3887 = vld [vmem:[%s3875 + $0x58] sm:$0xff]
    %v3888 = vld [vmem:[%s3875 + $0x60] sm:$0xff]
    %v3889 = vld [vmem:[%s3875 + $0x68] sm:$0xff]
    %v3890 = vld [vmem:[%s3875 + $0x70] sm:$0xff]
    %v3891 = vld [vmem:[%s3875 + $0x78] sm:$0xff]
    %v3892 = vld [vmem:[%s3875 + $0x80] sm:$0xff]
    %v3893 = vld [vmem:[%s3875 + $0x88] sm:$0xff]
    %v3894 = vld [vmem:[%s3875 + $0x90] sm:$0xff]
    %v3895 = vld [vmem:[%s3875 + $0x98] sm:$0xff]
    %v3896 = vld [vmem:[%s3875 + $0xa0] sm:$0xff]
    %v3897 = vld [vmem:[%s3875 + $0xa8] sm:$0xff]
    %v3898 = vld [vmem:[%s3875 + $0xb0] sm:$0xff]
    %v3899 = vld [vmem:[%s3875 + $0xb8] sm:$0xff]
    %v3900 = vld [vmem:[%s3875 + $0xc0] sm:$0xff]
    %v3901 = vld [vmem:[%s3875 + $0xc8] sm:$0xff]
    %v3902 = vld [vmem:[%s3875 + $0xd0] sm:$0xff]
    %v3903 = vld [vmem:[%s3875 + $0xd8] sm:$0xff]
    %v3904 = vld [vmem:[%s3875 + $0xe0] sm:$0xff]
    %v3905 = vld [vmem:[%s3875 + $0xe8] sm:$0xff]
    %v3906 = vld [vmem:[%s3875 + $0xf0] sm:$0xff]
    %v3907 = vld [vmem:[%s3875 + $0xf8] sm:$0xff]
    %v3910 = vunpack.c.l.b16 %v3873
    %v3911 = vunpack.c.h.b16 %v3873
    %v3912 = vunpack.c.l.b16 %v3874
    %v3913 = vunpack.c.h.b16 %v3874
    %v3914 = vpack.c.b16 %v3912, %v3910
    %v3915 = vpack.c.b16 %v3913, %v3911
    %v3916 = vrot.slane %v3914, 1
    %v3917 = vrot.slane %v3915, 1
    %v3952 = vunpack.c.l.b16 %v3876
    %v3953 = vunpack.c.h.b16 %v3876
    %v3954 = vunpack.c.l.b16 %v3877
    %v3955 = vunpack.c.h.b16 %v3877
    %v3956 = vunpack.c.l.b16 %v3878
    %v3957 = vunpack.c.h.b16 %v3878
    %v3958 = vunpack.c.l.b16 %v3879
    %v3959 = vunpack.c.h.b16 %v3879
    %v3960 = vunpack.c.l.b16 %v3880
    %v3961 = vunpack.c.h.b16 %v3880
    %v3962 = vunpack.c.l.b16 %v3881
    %v3963 = vunpack.c.h.b16 %v3881
    %v3964 = vunpack.c.l.b16 %v3882
    %v3965 = vunpack.c.h.b16 %v3882
    %v3966 = vunpack.c.l.b16 %v3883
    %v3967 = vunpack.c.h.b16 %v3883
    %v3968 = vunpack.c.l.b16 %v3884
    %v3969 = vunpack.c.h.b16 %v3884
    %v3970 = vunpack.c.l.b16 %v3885
    %v3971 = vunpack.c.h.b16 %v3885
    %v3972 = vunpack.c.l.b16 %v3886
    %v3973 = vunpack.c.h.b16 %v3886
    %v3974 = vunpack.c.l.b16 %v3887
    %v3975 = vunpack.c.h.b16 %v3887
    %v3976 = vunpack.c.l.b16 %v3888
    %v3977 = vunpack.c.h.b16 %v3888
    %v3978 = vunpack.c.l.b16 %v3889
    %v3979 = vunpack.c.h.b16 %v3889
    %v3980 = vunpack.c.l.b16 %v3890
    %v3981 = vunpack.c.h.b16 %v3890
    %v3982 = vunpack.c.l.b16 %v3891
    %v3983 = vunpack.c.h.b16 %v3891
    %v3984 = vunpack.c.l.b16 %v3892
    %v3985 = vunpack.c.h.b16 %v3892
    %v3986 = vunpack.c.l.b16 %v3893
    %v3987 = vunpack.c.h.b16 %v3893
    %v3988 = vunpack.c.l.b16 %v3894
    %v3989 = vunpack.c.h.b16 %v3894
    %v3990 = vunpack.c.l.b16 %v3895
    %v3991 = vunpack.c.h.b16 %v3895
    %v3992 = vunpack.c.l.b16 %v3896
    %v3993 = vunpack.c.h.b16 %v3896
    %v3994 = vunpack.c.l.b16 %v3897
    %v3995 = vunpack.c.h.b16 %v3897
    %v3996 = vunpack.c.l.b16 %v3898
    %v3997 = vunpack.c.h.b16 %v3898
    %v3998 = vunpack.c.l.b16 %v3899
    %v3999 = vunpack.c.h.b16 %v3899
    %v4000 = vunpack.c.l.b16 %v3900
    %v4001 = vunpack.c.h.b16 %v3900
    %v4002 = vunpack.c.l.b16 %v3901
    %v4003 = vunpack.c.h.b16 %v3901
    %v4004 = vunpack.c.l.b16 %v3902
    %v4005 = vunpack.c.h.b16 %v3902
    %v4006 = vunpack.c.l.b16 %v3903
    %v4007 = vunpack.c.h.b16 %v3903
    %v4008 = vunpack.c.l.b16 %v3904
    %v4009 = vunpack.c.h.b16 %v3904
    %v4010 = vunpack.c.l.b16 %v3905
    %v4011 = vunpack.c.h.b16 %v3905
    %v4012 = vunpack.c.l.b16 %v3906
    %v4013 = vunpack.c.h.b16 %v3906
    %v4014 = vunpack.c.l.b16 %v3907
    %v4015 = vunpack.c.h.b16 %v3907
    %v4016 = vpack.c.b16 %v3954, %v3952
    %v4017 = vpack.c.b16 %v3955, %v3953
    %v4018 = vpack.c.b16 %v3958, %v3956
    %v4019 = vpack.c.b16 %v3959, %v3957
    %v4020 = vpack.c.b16 %v3962, %v3960
    %v4021 = vpack.c.b16 %v3963, %v3961
    %v4022 = vpack.c.b16 %v3966, %v3964
    %v4023 = vpack.c.b16 %v3967, %v3965
    %v4024 = vpack.c.b16 %v3970, %v3968
    %v4025 = vpack.c.b16 %v3971, %v3969
    %v4026 = vpack.c.b16 %v3974, %v3972
    %v4027 = vpack.c.b16 %v3975, %v3973
    %v4028 = vpack.c.b16 %v3978, %v3976
    %v4029 = vpack.c.b16 %v3979, %v3977
    %v4030 = vpack.c.b16 %v3982, %v3980
    %v4031 = vpack.c.b16 %v3983, %v3981
    %v4032 = vpack.c.b16 %v3986, %v3984
    %v4033 = vpack.c.b16 %v3987, %v3985
    %v4034 = vpack.c.b16 %v3990, %v3988
    %v4035 = vpack.c.b16 %v3991, %v3989
    %v4036 = vpack.c.b16 %v3994, %v3992
    %v4037 = vpack.c.b16 %v3995, %v3993
    %v4038 = vpack.c.b16 %v3998, %v3996
    %v4039 = vpack.c.b16 %v3999, %v3997
    %v4040 = vpack.c.b16 %v4002, %v4000
    %v4041 = vpack.c.b16 %v4003, %v4001
    %v4042 = vpack.c.b16 %v4006, %v4004
    %v4043 = vpack.c.b16 %v4007, %v4005
    %v4044 = vpack.c.b16 %v4010, %v4008
    %v4045 = vpack.c.b16 %v4011, %v4009
    %v4046 = vpack.c.b16 %v4014, %v4012
    %v4047 = vpack.c.b16 %v4015, %v4013
    %4080 = vmatprep.subr.bf16.mxu0 %v4031
    %4081 = vmatpush1.bf16.msra.mxu0 %v4030
    %4082 = vmatprep.subr.bf16.mxu0 %v4029
    %4083 = vmatpush1.bf16.msra.mxu0 %v4028
    %4084 = vmatprep.subr.bf16.mxu0 %v4027
    %4085 = vmatpush1.bf16.msra.mxu0 %v4026
    %4086 = vmatprep.subr.bf16.mxu0 %v4025
    %4087 = vmatpush1.bf16.msra.mxu0 %v4024
    %4088 = vmatprep.subr.bf16.mxu0 %v4023
    %4089 = vmatpush1.bf16.msra.mxu0 %v4022
    %4090 = vmatprep.subr.bf16.mxu0 %v4021
    %4091 = vmatpush1.bf16.msra.mxu0 %v4020
    %4092 = vmatprep.subr.bf16.mxu0 %v4019
    %4093 = vmatpush1.bf16.msra.mxu0 %v4018
    %4094 = vmatprep.subr.bf16.mxu0 %v4017
    %4095 = vmatpush1.bf16.msra.mxu0 %v4016
    %4096 = vmatprep.subr.bf16.mxu0 %v4047
    %4097 = vmatpush2.bf16.msra.mxu0 %v4046
    %4098 = vmatprep.subr.bf16.mxu0 %v4045
    %4099 = vmatpush2.bf16.msra.mxu0 %v4044
    %4100 = vmatprep.subr.bf16.mxu0 %v4043
    %4101 = vmatpush2.bf16.msra.mxu0 %v4042
    %4102 = vmatprep.subr.bf16.mxu0 %v4041
    %4103 = vmatpush2.bf16.msra.mxu0 %v4040
    %4104 = vmatprep.subr.bf16.mxu0 %v4039
    %4105 = vmatpush2.bf16.msra.mxu0 %v4038
    %4106 = vmatprep.subr.bf16.mxu0 %v4037
    %4107 = vmatpush2.bf16.msra.mxu0 %v4036
    %4108 = vmatprep.subr.bf16.mxu0 %v4035
    %4109 = vmatpush2.bf16.msra.mxu0 %v4034
    %4110 = vmatprep.subr.bf16.mxu0 %v4033
    %4111 = vmatpush2.bf16.msra.mxu0 %v4032
    %4112 = vmatprep.mubr.bf16.mxu0 %v3917
    %4113 = vmatmul.mubr.bf16.gmra.mxu0 %v3916
    %v4114 = vpop.f32.mrf.mxu0
    %v4115 = vadd.f32 0.0, %v4114
    %v4116 = vpop.f32.mrf.mxu0
    %v4117 = vadd.f32 0.0, %v4116
    %v4118 = vpop.f32.mrf.mxu0
    %v4119 = vpop.f32.mrf.mxu0
    %4120 = vdwg.mxu0
    %v4121 = vadd.f32 %v3871, %v4115
    %v4122 = vadd.f32 %v3872, %v4117
    %v4123 = vld [vmem:[#allocation3] sm:$0xcc]
    %v4124 = vld [vmem:[#allocation3 + $0x8] sm:$0x33]
    %s4125 = scalar_lea.vmem [#allocation5], 1024
    %v4126 = vld [vmem:[%s4125] sm:$0xff]
    %v4127 = vld [vmem:[%s4125 + $0x8] sm:$0xff]
    %v4128 = vld [vmem:[%s4125 + $0x10] sm:$0xff]
    %v4129 = vld [vmem:[%s4125 + $0x18] sm:$0xff]
    %v4130 = vld [vmem:[%s4125 + $0x20] sm:$0xff]
    %v4131 = vld [vmem:[%s4125 + $0x28] sm:$0xff]
    %v4132 = vld [vmem:[%s4125 + $0x30] sm:$0xff]
    %v4133 = vld [vmem:[%s4125 + $0x38] sm:$0xff]
    %v4134 = vld [vmem:[%s4125 + $0x40] sm:$0xff]
    %v4135 = vld [vmem:[%s4125 + $0x48] sm:$0xff]
    %v4136 = vld [vmem:[%s4125 + $0x50] sm:$0xff]
    %v4137 = vld [vmem:[%s4125 + $0x58] sm:$0xff]
    %v4138 = vld [vmem:[%s4125 + $0x60] sm:$0xff]
    %v4139 = vld [vmem:[%s4125 + $0x68] sm:$0xff]
    %v4140 = vld [vmem:[%s4125 + $0x70] sm:$0xff]
    %v4141 = vld [vmem:[%s4125 + $0x78] sm:$0xff]
    %v4142 = vld [vmem:[%s4125 + $0x80] sm:$0xff]
    %v4143 = vld [vmem:[%s4125 + $0x88] sm:$0xff]
    %v4144 = vld [vmem:[%s4125 + $0x90] sm:$0xff]
    %v4145 = vld [vmem:[%s4125 + $0x98] sm:$0xff]
    %v4146 = vld [vmem:[%s4125 + $0xa0] sm:$0xff]
    %v4147 = vld [vmem:[%s4125 + $0xa8] sm:$0xff]
    %v4148 = vld [vmem:[%s4125 + $0xb0] sm:$0xff]
    %v4149 = vld [vmem:[%s4125 + $0xb8] sm:$0xff]
    %v4150 = vld [vmem:[%s4125 + $0xc0] sm:$0xff]
    %v4151 = vld [vmem:[%s4125 + $0xc8] sm:$0xff]
    %v4152 = vld [vmem:[%s4125 + $0xd0] sm:$0xff]
    %v4153 = vld [vmem:[%s4125 + $0xd8] sm:$0xff]
    %v4154 = vld [vmem:[%s4125 + $0xe0] sm:$0xff]
    %v4155 = vld [vmem:[%s4125 + $0xe8] sm:$0xff]
    %v4156 = vld [vmem:[%s4125 + $0xf0] sm:$0xff]
    %v4157 = vld [vmem:[%s4125 + $0xf8] sm:$0xff]
    %v4160 = vunpack.c.l.b16 %v4123
    %v4161 = vunpack.c.h.b16 %v4123
    %v4162 = vunpack.c.l.b16 %v4124
    %v4163 = vunpack.c.h.b16 %v4124
    %v4164 = vpack.c.b16 %v4162, %v4160
    %v4165 = vpack.c.b16 %v4163, %v4161
    %v4166 = vrot.slane %v4164, 2
    %v4167 = vrot.slane %v4165, 2
    %v4202 = vunpack.c.l.b16 %v4126
    %v4203 = vunpack.c.h.b16 %v4126
    %v4204 = vunpack.c.l.b16 %v4127
    %v4205 = vunpack.c.h.b16 %v4127
    %v4206 = vunpack.c.l.b16 %v4128
    %v4207 = vunpack.c.h.b16 %v4128
    %v4208 = vunpack.c.l.b16 %v4129
    %v4209 = vunpack.c.h.b16 %v4129
    %v4210 = vunpack.c.l.b16 %v4130
    %v4211 = vunpack.c.h.b16 %v4130
    %v4212 = vunpack.c.l.b16 %v4131
    %v4213 = vunpack.c.h.b16 %v4131
    %v4214 = vunpack.c.l.b16 %v4132
    %v4215 = vunpack.c.h.b16 %v4132
    %v4216 = vunpack.c.l.b16 %v4133
    %v4217 = vunpack.c.h.b16 %v4133
    %v4218 = vunpack.c.l.b16 %v4134
    %v4219 = vunpack.c.h.b16 %v4134
    %v4220 = vunpack.c.l.b16 %v4135
    %v4221 = vunpack.c.h.b16 %v4135
    %v4222 = vunpack.c.l.b16 %v4136
    %v4223 = vunpack.c.h.b16 %v4136
    %v4224 = vunpack.c.l.b16 %v4137
    %v4225 = vunpack.c.h.b16 %v4137
    %v4226 = vunpack.c.l.b16 %v4138
    %v4227 = vunpack.c.h.b16 %v4138
    %v4228 = vunpack.c.l.b16 %v4139
    %v4229 = vunpack.c.h.b16 %v4139
    %v4230 = vunpack.c.l.b16 %v4140
    %v4231 = vunpack.c.h.b16 %v4140
    %v4232 = vunpack.c.l.b16 %v4141
    %v4233 = vunpack.c.h.b16 %v4141
    %v4234 = vunpack.c.l.b16 %v4142
    %v4235 = vunpack.c.h.b16 %v4142
    %v4236 = vunpack.c.l.b16 %v4143
    %v4237 = vunpack.c.h.b16 %v4143
    %v4238 = vunpack.c.l.b16 %v4144
    %v4239 = vunpack.c.h.b16 %v4144
    %v4240 = vunpack.c.l.b16 %v4145
    %v4241 = vunpack.c.h.b16 %v4145
    %v4242 = vunpack.c.l.b16 %v4146
    %v4243 = vunpack.c.h.b16 %v4146
    %v4244 = vunpack.c.l.b16 %v4147
    %v4245 = vunpack.c.h.b16 %v4147
    %v4246 = vunpack.c.l.b16 %v4148
    %v4247 = vunpack.c.h.b16 %v4148
    %v4248 = vunpack.c.l.b16 %v4149
    %v4249 = vunpack.c.h.b16 %v4149
    %v4250 = vunpack.c.l.b16 %v4150
    %v4251 = vunpack.c.h.b16 %v4150
    %v4252 = vunpack.c.l.b16 %v4151
    %v4253 = vunpack.c.h.b16 %v4151
    %v4254 = vunpack.c.l.b16 %v4152
    %v4255 = vunpack.c.h.b16 %v4152
    %v4256 = vunpack.c.l.b16 %v4153
    %v4257 = vunpack.c.h.b16 %v4153
    %v4258 = vunpack.c.l.b16 %v4154
    %v4259 = vunpack.c.h.b16 %v4154
    %v4260 = vunpack.c.l.b16 %v4155
    %v4261 = vunpack.c.h.b16 %v4155
    %v4262 = vunpack.c.l.b16 %v4156
    %v4263 = vunpack.c.h.b16 %v4156
    %v4264 = vunpack.c.l.b16 %v4157
    %v4265 = vunpack.c.h.b16 %v4157
    %v4266 = vpack.c.b16 %v4204, %v4202
    %v4267 = vpack.c.b16 %v4205, %v4203
    %v4268 = vpack.c.b16 %v4208, %v4206
    %v4269 = vpack.c.b16 %v4209, %v4207
    %v4270 = vpack.c.b16 %v4212, %v4210
    %v4271 = vpack.c.b16 %v4213, %v4211
    %v4272 = vpack.c.b16 %v4216, %v4214
    %v4273 = vpack.c.b16 %v4217, %v4215
    %v4274 = vpack.c.b16 %v4220, %v4218
    %v4275 = vpack.c.b16 %v4221, %v4219
    %v4276 = vpack.c.b16 %v4224, %v4222
    %v4277 = vpack.c.b16 %v4225, %v4223
    %v4278 = vpack.c.b16 %v4228, %v4226
    %v4279 = vpack.c.b16 %v4229, %v4227
    %v4280 = vpack.c.b16 %v4232, %v4230
    %v4281 = vpack.c.b16 %v4233, %v4231
    %v4282 = vpack.c.b16 %v4236, %v4234
    %v4283 = vpack.c.b16 %v4237, %v4235
    %v4284 = vpack.c.b16 %v4240, %v4238
    %v4285 = vpack.c.b16 %v4241, %v4239
    %v4286 = vpack.c.b16 %v4244, %v4242
    %v4287 = vpack.c.b16 %v4245, %v4243
    %v4288 = vpack.c.b16 %v4248, %v4246
    %v4289 = vpack.c.b16 %v4249, %v4247
    %v4290 = vpack.c.b16 %v4252, %v4250
    %v4291 = vpack.c.b16 %v4253, %v4251
    %v4292 = vpack.c.b16 %v4256, %v4254
    %v4293 = vpack.c.b16 %v4257, %v4255
    %v4294 = vpack.c.b16 %v4260, %v4258
    %v4295 = vpack.c.b16 %v4261, %v4259
    %v4296 = vpack.c.b16 %v4264, %v4262
    %v4297 = vpack.c.b16 %v4265, %v4263
    %4330 = vmatprep.subr.bf16.mxu0 %v4281
    %4331 = vmatpush1.bf16.msra.mxu0 %v4280
    %4332 = vmatprep.subr.bf16.mxu0 %v4279
    %4333 = vmatpush1.bf16.msra.mxu0 %v4278
    %4334 = vmatprep.subr.bf16.mxu0 %v4277
    %4335 = vmatpush1.bf16.msra.mxu0 %v4276
    %4336 = vmatprep.subr.bf16.mxu0 %v4275
    %4337 = vmatpush1.bf16.msra.mxu0 %v4274
    %4338 = vmatprep.subr.bf16.mxu0 %v4273
    %4339 = vmatpush1.bf16.msra.mxu0 %v4272
    %4340 = vmatprep.subr.bf16.mxu0 %v4271
    %4341 = vmatpush1.bf16.msra.mxu0 %v4270
    %4342 = vmatprep.subr.bf16.mxu0 %v4269
    %4343 = vmatpush1.bf16.msra.mxu0 %v4268
    %4344 = vmatprep.subr.bf16.mxu0 %v4267
    %4345 = vmatpush1.bf16.msra.mxu0 %v4266
    %4346 = vmatprep.subr.bf16.mxu0 %v4297
    %4347 = vmatpush2.bf16.msra.mxu0 %v4296
    %4348 = vmatprep.subr.bf16.mxu0 %v4295
    %4349 = vmatpush2.bf16.msra.mxu0 %v4294
    %4350 = vmatprep.subr.bf16.mxu0 %v4293
    %4351 = vmatpush2.bf16.msra.mxu0 %v4292
    %4352 = vmatprep.subr.bf16.mxu0 %v4291
    %4353 = vmatpush2.bf16.msra.mxu0 %v4290
    %4354 = vmatprep.subr.bf16.mxu0 %v4289
    %4355 = vmatpush2.bf16.msra.mxu0 %v4288
    %4356 = vmatprep.subr.bf16.mxu0 %v4287
    %4357 = vmatpush2.bf16.msra.mxu0 %v4286
    %4358 = vmatprep.subr.bf16.mxu0 %v4285
    %4359 = vmatpush2.bf16.msra.mxu0 %v4284
    %4360 = vmatprep.subr.bf16.mxu0 %v4283
    %4361 = vmatpush2.bf16.msra.mxu0 %v4282
    %4362 = vmatprep.mubr.bf16.mxu0 %v4167
    %4363 = vmatmul.mubr.bf16.gmra.mxu0 %v4166
    %v4364 = vpop.f32.mrf.mxu0
    %v4365 = vadd.f32 0.0, %v4364
    %v4366 = vpop.f32.mrf.mxu0
    %v4367 = vadd.f32 0.0, %v4366
    %v4368 = vpop.f32.mrf.mxu0
    %v4369 = vpop.f32.mrf.mxu0
    %4370 = vdwg.mxu0
    %v4371 = vadd.f32 %v4121, %v4365
    %v4372 = vadd.f32 %v4122, %v4367
    %v4373 = vrot.slane %v4371, 4
    %v4374 = vadd.f32 %v4371, %v4373
    %v4375 = vrot.slane %v4374, 2
    %v4376 = vadd.f32 %v4374, %v4375
    %v4377 = vrot.slane %v4376, 1
    %v4378 = vadd.f32 %v4376, %v4377
    %v4379 = vrot.slane %v4372, 4
    %v4380 = vadd.f32 %v4372, %v4379
    %v4381 = vrot.slane %v4380, 2
    %v4382 = vadd.f32 %v4380, %v4381
    %v4383 = vrot.slane %v4382, 1
    %v4384 = vadd.f32 %v4382, %v4383
    %v4387 = vcombine.low %v4378, %v4384
    %v4389 = vunpack.c.l.s4 1966171168
    %v4390 = vunpack.c.0.s8 %v4389
    %v4391 = vlaneseq
    %v4392 = vshrl.u32 %v4391, 7
    %v4393 = vsub.s32 %v4390, %v4392
    %v4394 = vrot.slane %v4387, %v4393
    %v4396 = vunpack.c.l.s4 1966171168
    %v4397 = vunpack.c.0.s8 %v4396
    %v4398 = vlaneseq
    %v4399 = vshrl.u32 %v4398, 7
    %v4400 = vsub.s32 %v4397, %v4399
    %v4401 = vrot.slane %v4394, %v4400
    %4403 = vst.msk [vmem:[#allocation8] ss:$2 sm:$0x3] %vm1076, %v4401
    %v4404 = vmul.f32 %v4371, %v4371
    %v4405 = vmul.f32 %v4372, %v4372
    %v4406 = vrot.slane %v4404, 4
    %v4407 = vadd.f32 %v4404, %v4406
    %v4408 = vrot.slane %v4407, 2
    %v4409 = vadd.f32 %v4407, %v4408
    %v4410 = vrot.slane %v4409, 1
    %v4411 = vadd.f32 %v4409, %v4410
    %v4412 = vrot.slane %v4405, 4
    %v4413 = vadd.f32 %v4405, %v4412
    %v4414 = vrot.slane %v4413, 2
    %v4415 = vadd.f32 %v4413, %v4414
    %v4416 = vrot.slane %v4415, 1
    %v4417 = vadd.f32 %v4415, %v4416
    %v4420 = vcombine.low %v4411, %v4417
    %v4422 = vunpack.c.l.s4 1966171168
    %v4423 = vunpack.c.0.s8 %v4422
    %v4424 = vlaneseq
    %v4425 = vshrl.u32 %v4424, 7
    %v4426 = vsub.s32 %v4423, %v4425
    %v4427 = vrot.slane %v4420, %v4426
    %v4429 = vunpack.c.l.s4 1966171168
    %v4430 = vunpack.c.0.s8 %v4429
    %v4431 = vlaneseq
    %v4432 = vshrl.u32 %v4431, 7
    %v4433 = vsub.s32 %v4430, %v4432
    %v4434 = vrot.slane %v4427, %v4433
    %4436 = vst.msk [vmem:[%s1122] ss:$2 sm:$0x3] %vm1076, %v4434
    %v4437 = vld [vmem:[#allocation7] sm:$0xff]
    %v4438 = vld [vmem:[#allocation7 + $0x8] sm:$0xff]
    %v4439 = vld [vmem:[#allocation7 + $0x10] sm:$0xff]
    %v4440 = vld [vmem:[#allocation7 + $0x18] sm:$0xff]
    %v4441 = vld [vmem:[#allocation7 + $0x20] sm:$0xff]
    %v4442 = vld [vmem:[#allocation7 + $0x28] sm:$0xff]
    %v4443 = vld [vmem:[#allocation7 + $0x30] sm:$0xff]
    %v4444 = vld [vmem:[#allocation7 + $0x38] sm:$0xff]
    %v4445 = vld [vmem:[#allocation7 + $0x40] sm:$0xff]
    %v4446 = vld [vmem:[#allocation7 + $0x48] sm:$0xff]
    %v4447 = vld [vmem:[#allocation7 + $0x50] sm:$0xff]
    %v4448 = vld [vmem:[#allocation7 + $0x58] sm:$0xff]
    %v4449 = vld [vmem:[#allocation7 + $0x60] sm:$0xff]
    %v4450 = vld [vmem:[#allocation7 + $0x68] sm:$0xff]
    %v4451 = vld [vmem:[#allocation7 + $0x70] sm:$0xff]
    %v4452 = vld [vmem:[#allocation7 + $0x78] sm:$0xff]
    %v4453 = vld [vmem:[#allocation7 + $0x80] sm:$0xff]
    %v4454 = vld [vmem:[#allocation7 + $0x88] sm:$0xff]
    %v4455 = vld [vmem:[#allocation7 + $0x90] sm:$0xff]
    %v4456 = vld [vmem:[#allocation7 + $0x98] sm:$0xff]
    %v4457 = vld [vmem:[#allocation7 + $0xa0] sm:$0xff]
    %v4458 = vld [vmem:[#allocation7 + $0xa8] sm:$0xff]
    %v4459 = vld [vmem:[#allocation7 + $0xb0] sm:$0xff]
    %v4460 = vld [vmem:[#allocation7 + $0xb8] sm:$0xff]
    %v4461 = vld [vmem:[#allocation7 + $0xc0] sm:$0xff]
    %v4462 = vld [vmem:[#allocation7 + $0xc8] sm:$0xff]
    %v4463 = vld [vmem:[#allocation7 + $0xd0] sm:$0xff]
    %v4464 = vld [vmem:[#allocation7 + $0xd8] sm:$0xff]
    %v4465 = vld [vmem:[#allocation7 + $0xe0] sm:$0xff]
    %v4466 = vld [vmem:[#allocation7 + $0xe8] sm:$0xff]
    %v4467 = vld [vmem:[#allocation7 + $0xf0] sm:$0xff]
    %v4468 = vld [vmem:[#allocation7 + $0xf8] sm:$0xff]
    %v4469 = vunpack.c.l.bf16 %v4437
    %v4470 = vunpack.c.h.bf16 %v4437
    %v4471 = vunpack.c.l.bf16 %v4438
    %v4472 = vunpack.c.h.bf16 %v4438
    %v4473 = vunpack.c.l.bf16 %v4439
    %v4474 = vunpack.c.h.bf16 %v4439
    %v4475 = vunpack.c.l.bf16 %v4440
    %v4476 = vunpack.c.h.bf16 %v4440
    %v4477 = vunpack.c.l.bf16 %v4441
    %v4478 = vunpack.c.h.bf16 %v4441
    %v4479 = vunpack.c.l.bf16 %v4442
    %v4480 = vunpack.c.h.bf16 %v4442
    %v4481 = vunpack.c.l.bf16 %v4443
    %v4482 = vunpack.c.h.bf16 %v4443
    %v4483 = vunpack.c.l.bf16 %v4444
    %v4484 = vunpack.c.h.bf16 %v4444
    %v4485 = vunpack.c.l.bf16 %v4445
    %v4486 = vunpack.c.h.bf16 %v4445
    %v4487 = vunpack.c.l.bf16 %v4446
    %v4488 = vunpack.c.h.bf16 %v4446
    %v4489 = vunpack.c.l.bf16 %v4447
    %v4490 = vunpack.c.h.bf16 %v4447
    %v4491 = vunpack.c.l.bf16 %v4448
    %v4492 = vunpack.c.h.bf16 %v4448
    %v4493 = vunpack.c.l.bf16 %v4449
    %v4494 = vunpack.c.h.bf16 %v4449
    %v4495 = vunpack.c.l.bf16 %v4450
    %v4496 = vunpack.c.h.bf16 %v4450
    %v4497 = vunpack.c.l.bf16 %v4451
    %v4498 = vunpack.c.h.bf16 %v4451
    %v4499 = vunpack.c.l.bf16 %v4452
    %v4500 = vunpack.c.h.bf16 %v4452
    %v4501 = vunpack.c.l.bf16 %v4453
    %v4502 = vunpack.c.h.bf16 %v4453
    %v4503 = vunpack.c.l.bf16 %v4454
    %v4504 = vunpack.c.h.bf16 %v4454
    %v4505 = vunpack.c.l.bf16 %v4455
    %v4506 = vunpack.c.h.bf16 %v4455
    %v4507 = vunpack.c.l.bf16 %v4456
    %v4508 = vunpack.c.h.bf16 %v4456
    %v4509 = vunpack.c.l.bf16 %v4457
    %v4510 = vunpack.c.h.bf16 %v4457
    %v4511 = vunpack.c.l.bf16 %v4458
    %v4512 = vunpack.c.h.bf16 %v4458
    %v4513 = vunpack.c.l.bf16 %v4459
    %v4514 = vunpack.c.h.bf16 %v4459
    %v4515 = vunpack.c.l.bf16 %v4460
    %v4516 = vunpack.c.h.bf16 %v4460
    %v4517 = vunpack.c.l.bf16 %v4461
    %v4518 = vunpack.c.h.bf16 %v4461
    %v4519 = vunpack.c.l.bf16 %v4462
    %v4520 = vunpack.c.h.bf16 %v4462
    %v4521 = vunpack.c.l.bf16 %v4463
    %v4522 = vunpack.c.h.bf16 %v4463
    %v4523 = vunpack.c.l.bf16 %v4464
    %v4524 = vunpack.c.h.bf16 %v4464
    %v4525 = vunpack.c.l.bf16 %v4465
    %v4526 = vunpack.c.h.bf16 %v4465
    %v4527 = vunpack.c.l.bf16 %v4466
    %v4528 = vunpack.c.h.bf16 %v4466
    %v4529 = vunpack.c.l.bf16 %v4467
    %v4530 = vunpack.c.h.bf16 %v4467
    %v4531 = vunpack.c.l.bf16 %v4468
    %v4532 = vunpack.c.h.bf16 %v4468
    %v4533 = vld [vmem:[#allocation8] sm:$0xf]
    %v4536 = vunpack.c.l.s4 1983009808
    %v4537 = vunpack.c.0.s8 %v4536
    %v4538 = vlaneseq
    %v4539 = vshrl.u32 %v4538, 7
    %v4540 = vsub.s32 %v4537, %v4539
    %v4541 = vrot.slane %v4533, %v4540
    %v4542 = vcombine.high %v4541, %v4541
    %4545 = vmatprep.subr.mxu0 %v4500
    %4546 = vmatpush1.msra.mxu0 %v4499
    %4547 = vmatprep.subr.mxu0 %v4498
    %4548 = vmatpush1.msra.mxu0 %v4497
    %4549 = vmatprep.subr.mxu0 %v4496
    %4550 = vmatpush1.msra.mxu0 %v4495
    %4551 = vmatprep.subr.mxu0 %v4494
    %4552 = vmatpush1.msra.mxu0 %v4493
    %4553 = vmatprep.subr.mxu0 %v4492
    %4554 = vmatpush1.msra.mxu0 %v4491
    %4555 = vmatprep.subr.mxu0 %v4490
    %4556 = vmatpush1.msra.mxu0 %v4489
    %4557 = vmatprep.subr.mxu0 %v4488
    %4558 = vmatpush1.msra.mxu0 %v4487
    %4559 = vmatprep.subr.mxu0 %v4486
    %4560 = vmatpush1.msra.mxu0 %v4485
    %4561 = vmatprep.subr.mxu0 %v4484
    %4562 = vmatpush1.msra.mxu0 %v4483
    %4563 = vmatprep.subr.mxu0 %v4482
    %4564 = vmatpush1.msra.mxu0 %v4481
    %4565 = vmatprep.subr.mxu0 %v4480
    %4566 = vmatpush1.msra.mxu0 %v4479
    %4567 = vmatprep.subr.mxu0 %v4478
    %4568 = vmatpush1.msra.mxu0 %v4477
    %4569 = vmatprep.subr.mxu0 %v4476
    %4570 = vmatpush1.msra.mxu0 %v4475
    %4571 = vmatprep.subr.mxu0 %v4474
    %4572 = vmatpush1.msra.mxu0 %v4473
    %4573 = vmatprep.subr.mxu0 %v4472
    %4574 = vmatpush1.msra.mxu0 %v4471
    %4575 = vmatprep.subr.mxu0 %v4470
    %4576 = vmatpush1.msra.mxu0 %v4469
    %4577 = vmatprep.subr.mxu0 %v4532
    %4578 = vmatpush2.msra.mxu0 %v4531
    %4579 = vmatprep.subr.mxu0 %v4530
    %4580 = vmatpush2.msra.mxu0 %v4529
    %4581 = vmatprep.subr.mxu0 %v4528
    %4582 = vmatpush2.msra.mxu0 %v4527
    %4583 = vmatprep.subr.mxu0 %v4526
    %4584 = vmatpush2.msra.mxu0 %v4525
    %4585 = vmatprep.subr.mxu0 %v4524
    %4586 = vmatpush2.msra.mxu0 %v4523
    %4587 = vmatprep.subr.mxu0 %v4522
    %4588 = vmatpush2.msra.mxu0 %v4521
    %4589 = vmatprep.subr.mxu0 %v4520
    %4590 = vmatpush2.msra.mxu0 %v4519
    %4591 = vmatprep.subr.mxu0 %v4518
    %4592 = vmatpush2.msra.mxu0 %v4517
    %4593 = vmatprep.subr.mxu0 %v4516
    %4594 = vmatpush2.msra.mxu0 %v4515
    %4595 = vmatprep.subr.mxu0 %v4514
    %4596 = vmatpush2.msra.mxu0 %v4513
    %4597 = vmatprep.subr.mxu0 %v4512
    %4598 = vmatpush2.msra.mxu0 %v4511
    %4599 = vmatprep.subr.mxu0 %v4510
    %4600 = vmatpush2.msra.mxu0 %v4509
    %4601 = vmatprep.subr.mxu0 %v4508
    %4602 = vmatpush2.msra.mxu0 %v4507
    %4603 = vmatprep.subr.mxu0 %v4506
    %4604 = vmatpush2.msra.mxu0 %v4505
    %4605 = vmatprep.subr.mxu0 %v4504
    %4606 = vmatpush2.msra.mxu0 %v4503
    %4607 = vmatprep.subr.mxu0 %v4502
    %4608 = vmatpush2.msra.mxu0 %v4501
    %4609 = vmatprep.mubr.f32.mxu0 %v4542
    %4610 = vmatmul.mubr.f32.gmra.mxu0 %v4541
    %v4611 = vpop.f32.mrf.mxu0
    %v4612 = vadd.f32 0.0, %v4611
    %v4613 = vpop.f32.mrf.mxu0
    %v4614 = vadd.f32 0.0, %v4613
    %4615 = vdwg.mxu0
    %v4616 = vmul.f32 %v4612, 0.03125
    %v4617 = vmul.f32 %v4614, 0.03125
    %v4618 = vmul.f32 %v4616, %v4616
    %v4619 = vmul.f32 %v4617, %v4617
    %v4622 = vrot.slane %v4618, 7
    %v4623 = vrot.slane %v4619, 7
    %v4626 = vsub.f32 %v4616, %v4622
    %v4627 = vsub.f32 %v4617, %v4623
    %v4628 = vmax.f32 %v4626, 0.0
    %v4629 = vmax.f32 %v4627, 0.0
    %v4630 = vadd.f32 %v4628, 1e-05
    %v4631 = vadd.f32 %v4629, 1e-05
    %v4632 = vrsqrt.pop %v4630
    %v4633 = vrsqrt.pop %v4631
    %v4634 = vld [vmem:[#allocation16] sm:$0x3]
    %v4636 = vlaneseq
    %v4637 = vshrl.u32 %v4636, 7
    %v4638 = vsub.s32 0, %v4637
    %v4639 = vrot.slane %v4634, %v4638
    %v4640 = vlaneseq
    %v4641 = vshrl.u32 %v4640, 7
    %v4642 = vsub.s32 1, %v4641
    %v4643 = vrot.slane %v4634, %v4642
    %v4646 = vmul.f32 %v4632, %v4639
    %v4647 = vmul.f32 %v4633, %v4643
    %v4648 = vlaneseq
    %v4649 = vshrl.u32 %v4648, 7
    %v4650 = vsub.s32 0, %v4649
    %v4651 = vrot.slane %v4616, %v4650
    %v4652 = vlaneseq
    %v4653 = vshrl.u32 %v4652, 7
    %v4654 = vsub.s32 0, %v4653
    %v4655 = vrot.slane %v4617, %v4654
    %v4656 = vsub.f32 %v4371, %v4651
    %v4657 = vsub.f32 %v4372, %v4655
    %v4658 = vlaneseq
    %v4659 = vshrl.u32 %v4658, 7
    %v4660 = vsub.s32 1, %v4659
    %v4661 = vrot.slane %v4646, %v4660
    %v4662 = vlaneseq
    %v4663 = vshrl.u32 %v4662, 7
    %v4664 = vsub.s32 1, %v4663
    %v4665 = vrot.slane %v4647, %v4664
    %v4666 = vmul.f32 %v4656, %v4661
    %v4667 = vmul.f32 %v4657, %v4665
    %v4668 = vld [vmem:[#allocation18] sm:$0x3]
    %v4670 = vlaneseq
    %v4671 = vshrl.u32 %v4670, 7
    %v4672 = vsub.s32 0, %v4671
    %v4673 = vrot.slane %v4668, %v4672
    %v4674 = vlaneseq
    %v4675 = vshrl.u32 %v4674, 7
    %v4676 = vsub.s32 1, %v4675
    %v4677 = vrot.slane %v4668, %v4676
    %v4680 = vadd.f32 %v4666, %v4673
    %v4681 = vadd.f32 %v4667, %v4677
    %vm4682 = vcmp.ge.f32.partialorder %v4680, 0.0
    %vm4683 = vcmp.ge.f32.partialorder %v4681, 0.0
    %v4684 = vmul.f32 %v4680, 0.2
    %v4685 = vmul.f32 %v4681, 0.2
    %v4686 = vsel %vm4682, %v4680, %v4684
    %v4687 = vsel %vm4683, %v4681, %v4685
    %v4688 = vld [vmem:[%s9] sm:$0xff]
    %v4689 = vld [vmem:[%s9 + $0x8] sm:$0xff]
    %v4690 = vld [vmem:[%s9 + $0x10] sm:$0xff]
    %v4691 = vld [vmem:[%s9 + $0x18] sm:$0xff]
    %v4692 = vld [vmem:[%s9 + $0x20] sm:$0xff]
    %v4693 = vld [vmem:[%s9 + $0x28] sm:$0xff]
    %v4694 = vld [vmem:[%s9 + $0x30] sm:$0xff]
    %v4695 = vld [vmem:[%s9 + $0x38] sm:$0xff]
    %v4696 = vld [vmem:[%s9 + $0x40] sm:$0xff]
    %v4697 = vld [vmem:[%s9 + $0x48] sm:$0xff]
    %v4698 = vld [vmem:[%s9 + $0x50] sm:$0xff]
    %v4699 = vld [vmem:[%s9 + $0x58] sm:$0xff]
    %v4700 = vld [vmem:[%s9 + $0x60] sm:$0xff]
    %v4701 = vld [vmem:[%s9 + $0x68] sm:$0xff]
    %v4702 = vld [vmem:[%s9 + $0x70] sm:$0xff]
    %v4703 = vld [vmem:[%s9 + $0x78] sm:$0xff]
    %v4704 = vld [vmem:[%s9 + $0x80] sm:$0xff]
    %v4705 = vld [vmem:[%s9 + $0x88] sm:$0xff]
    %v4706 = vld [vmem:[%s9 + $0x90] sm:$0xff]
    %v4707 = vld [vmem:[%s9 + $0x98] sm:$0xff]
    %v4708 = vld [vmem:[%s9 + $0xa0] sm:$0xff]
    %v4709 = vld [vmem:[%s9 + $0xa8] sm:$0xff]
    %v4710 = vld [vmem:[%s9 + $0xb0] sm:$0xff]
    %v4711 = vld [vmem:[%s9 + $0xb8] sm:$0xff]
    %v4712 = vld [vmem:[%s9 + $0xc0] sm:$0xff]
    %v4713 = vld [vmem:[%s9 + $0xc8] sm:$0xff]
    %v4714 = vld [vmem:[%s9 + $0xd0] sm:$0xff]
    %v4715 = vld [vmem:[%s9 + $0xd8] sm:$0xff]
    %v4716 = vld [vmem:[%s9 + $0xe0] sm:$0xff]
    %v4717 = vld [vmem:[%s9 + $0xe8] sm:$0xff]
    %v4718 = vld [vmem:[%s9 + $0xf0] sm:$0xff]
    %v4719 = vld [vmem:[%s9 + $0xf8] sm:$0xff]
    %4720 = vmatprep.subr.mxu0 0.0
    %4721 = vmatpush1.msra.mxu0 %v4703
    %4722 = vmatprep.subr.mxu0 0.0
    %4723 = vmatpush1.msra.mxu0 %v4702
    %4724 = vmatprep.subr.mxu0 0.0
    %4725 = vmatpush1.msra.mxu0 %v4701
    %4726 = vmatprep.subr.mxu0 0.0
    %4727 = vmatpush1.msra.mxu0 %v4700
    %4728 = vmatprep.subr.mxu0 0.0
    %4729 = vmatpush1.msra.mxu0 %v4699
    %4730 = vmatprep.subr.mxu0 0.0
    %4731 = vmatpush1.msra.mxu0 %v4698
    %4732 = vmatprep.subr.mxu0 0.0
    %4733 = vmatpush1.msra.mxu0 %v4697
    %4734 = vmatprep.subr.mxu0 0.0
    %4735 = vmatpush1.msra.mxu0 %v4696
    %4736 = vmatprep.subr.mxu0 0.0
    %4737 = vmatpush1.msra.mxu0 %v4695
    %4738 = vmatprep.subr.mxu0 0.0
    %4739 = vmatpush1.msra.mxu0 %v4694
    %4740 = vmatprep.subr.mxu0 0.0
    %4741 = vmatpush1.msra.mxu0 %v4693
    %4742 = vmatprep.subr.mxu0 0.0
    %4743 = vmatpush1.msra.mxu0 %v4692
    %4744 = vmatprep.subr.mxu0 0.0
    %4745 = vmatpush1.msra.mxu0 %v4691
    %4746 = vmatprep.subr.mxu0 0.0
    %4747 = vmatpush1.msra.mxu0 %v4690
    %4748 = vmatprep.subr.mxu0 0.0
    %4749 = vmatpush1.msra.mxu0 %v4689
    %4750 = vmatprep.subr.mxu0 0.0
    %4751 = vmatpush1.msra.mxu0 %v4688
    %4752 = vmatprep.subr.mxu0 0.0
    %4753 = vmatpush2.msra.mxu0 %v4719
    %4754 = vmatprep.subr.mxu0 0.0
    %4755 = vmatpush2.msra.mxu0 %v4718
    %4756 = vmatprep.subr.mxu0 0.0
    %4757 = vmatpush2.msra.mxu0 %v4717
    %4758 = vmatprep.subr.mxu0 0.0
    %4759 = vmatpush2.msra.mxu0 %v4716
    %4760 = vmatprep.subr.mxu0 0.0
    %4761 = vmatpush2.msra.mxu0 %v4715
    %4762 = vmatprep.subr.mxu0 0.0
    %4763 = vmatpush2.msra.mxu0 %v4714
    %4764 = vmatprep.subr.mxu0 0.0
    %4765 = vmatpush2.msra.mxu0 %v4713
    %4766 = vmatprep.subr.mxu0 0.0
    %4767 = vmatpush2.msra.mxu0 %v4712
    %4768 = vmatprep.subr.mxu0 0.0
    %4769 = vmatpush2.msra.mxu0 %v4711
    %4770 = vmatprep.subr.mxu0 0.0
    %4771 = vmatpush2.msra.mxu0 %v4710
    %4772 = vmatprep.subr.mxu0 0.0
    %4773 = vmatpush2.msra.mxu0 %v4709
    %4774 = vmatprep.subr.mxu0 0.0
    %4775 = vmatpush2.msra.mxu0 %v4708
    %4776 = vmatprep.subr.mxu0 0.0
    %4777 = vmatpush2.msra.mxu0 %v4707
    %4778 = vmatprep.subr.mxu0 0.0
    %4779 = vmatpush2.msra.mxu0 %v4706
    %4780 = vmatprep.subr.mxu0 0.0
    %4781 = vmatpush2.msra.mxu0 %v4705
    %4782 = vmatprep.subr.mxu0 0.0
    %4783 = vmatpush2.msra.mxu0 %v4704
    %4784 = vmatprep.mubr.f32.mxu0 %v4687
    %4785 = vmatmul.mubr.f32.gmra.mxu0 %v4686
    %v4786 = vpop.f32.mrf.mxu0
    %v4787 = vadd.f32 0.0, %v4786
    %v4788 = vpop.f32.mrf.mxu0
    %4789 = vdwg.mxu0
    %v4790 = vadd.f32 %v4787, 0.0
    %v4792 = vrot.slane %v4787, 2
    %4793 = vrot.lane.b32.xlu0 %v4792, 127
    %v4794 = vpop.permute.xlu0 %4793
    %v4796 = vadd.f32 %v4790, %v4794
    %v4797 = vrot.slane %v4787, 4
    %4798 = vrot.lane.b32.xlu0 %v4797, 126
    %v4799 = vpop.permute.xlu0 %4798
    %v4801 = vadd.f32 %v4796, %v4799
    %v4802 = vrot.slane %v4787, 6
    %4803 = vrot.lane.b32.xlu0 %v4802, 125
    %v4804 = vpop.permute.xlu0 %4803
    %v4806 = vadd.f32 %v4801, %v4804
    %v4807 = vld [vmem:[#allocation10] sm:$0x1]
    %v4809 = vlaneseq
    %v4810 = vshrl.u32 %v4809, 7
    %v4811 = vsub.s32 0, %v4810
    %v4812 = vrot.slane %v4807, %v4811
    %v4814 = vadd.f32 %v4806, %v4812
    %v4815 = vxor.u32 %v4814, 2147483648
    %v4816 = vmul.f32 %v4815, 1.442695
    %v4817 = vpow.pop %v4816
    %v4818 = vadd.f32 %v4817, 1.0
    %v4819 = vrcp.pop %v4818
    %v4820 = vmul.f32 1.0, %v4819
    %vm4821 = vcmask 1024
    %4822 = vst.msk [vmem:[%s15] sm:$0x3] %vm4821, %v4820
    // Predicated region
    $region112: #{cnn_discriminator_forward.1} parent=1 // pred_check
      _
    $region113: #{cnn_discriminator_forward.1} parent=1 // pred_check_branch
      %4824 = sbr.rel (0) target = $region115
    $region114: #{cnn_discriminator_forward.1} parent=1 // pred_region
      _
    $region115: #{cnn_discriminator_forward.1} parent=1 // pred_fallthru
      _
    // Predicated region
    $region116: #{cnn_discriminator_forward.1} parent=1 // pred_check
      _
    $region117: #{cnn_discriminator_forward.1} parent=1 // pred_check_branch
      %4826 = sbr.rel (0) target = $region119
    $region118: #{cnn_discriminator_forward.1} parent=1 // pred_region
      _
    $region119: #{cnn_discriminator_forward.1} parent=1 // pred_fallthru
      _
    %4827 = vsyncpa [#allocation12], 1
    %4828 = vsyncpa [#allocation14], 1
    %4829 = vsyncpa [#allocation17], 1
  %4830 = vsyncmov [#allocation9]
  %s4831 = vpop.sfrf %4830
  %p4832 = scmp.eq.s32.totalorder %s4831, 0
  %p4833 = pneg %p4832
  %4835 = shalt.err (%p4833)
  %s4836 = scalar_lea.sflag [#allocation9], 1
  %4837 = vsyncmov %s4836
  %s4838 = vpop.sfrf %4837
  %p4839 = scmp.eq.s32.totalorder %s4838, 0
  %p4840 = pneg %p4839
  %4842 = shalt.err (%p4840)
  %s4843 = scalar_lea.sflag [#allocation9], 2
  %4844 = vsyncmov %s4843
  %s4845 = vpop.sfrf %4844
  %p4846 = scmp.eq.s32.totalorder %s4845, 0
  %p4847 = pneg %p4846
  %4849 = shalt.err (%p4847)
  %s4850 = scalar_lea.sflag [#allocation9], 3
  %4851 = vsyncmov %s4850
  %s4852 = vpop.sfrf %4851
  %p4853 = scmp.eq.s32.totalorder %s4852, 0
  %p4854 = pneg %p4853
  %4856 = shalt.err (%p4854)

</llo_original>
